<compile_context>
chip_gen: v5e
topology: v5e:2x2
jax: 0.10.0
libtpu: 0.0.40
codegen_flags: <defaults>
</compile_context>

<pallas_src>
import functools
import math

import jax
import jax.numpy as jnp
from jax import lax
from jax.experimental import pallas as pl
from jax.experimental.pallas import tpu as pltpu

# ------------------------- configuration ------------------------------------
VOCAB = 64
D_MODEL = 32
N_HEADS = 4
D_HEAD = D_MODEL // N_HEADS
D_FF = 64
MAX_POS = 32
N_DEP_TYPES = 8
N_ENC_LAYERS = 1
N_DEC_LAYERS = 1
LN_EPS = 1e-12
NEG_INF = -1e9


# ------------------------- blob packing --------------------------------------
class _Packer:
    """Row-stacks many small 2-D arrays into one [R, width] blob (one DMA).

    Row offsets are aligned to 8 sublanes and columns zero-padded to the blob
    width; offsets are plain Python ints so the kernel addresses sub-arrays
    with static ref slices.
    """

    def __init__(self, width):
        self.width = width
        self.parts = []
        self.offs = {}
        self.row = 0

    def add(self, name, arr):
        arr = jnp.asarray(arr, jnp.float32)
        r, c = arr.shape
        assert c <= self.width, (name, arr.shape, self.width)
        if c < self.width:
            arr = jnp.concatenate(
                [arr, jnp.zeros((r, self.width - c), jnp.float32)], axis=1)
        self.offs[name] = (self.row, r, c)
        pad = (-r) % 8
        if pad:
            arr = jnp.concatenate(
                [arr, jnp.zeros((pad, self.width), jnp.float32)], axis=0)
        self.parts.append(arr)
        self.row += r + pad

    def pack(self):
        return jnp.concatenate(self.parts, axis=0), self.offs


def build_weight_blobs(params, B, Ts, Tt):
    """All model weights -> three width-grouped blobs (done once, outside jit)."""
    emb = params["emb"]
    p32 = _Packer(D_MODEL)
    p64 = _Packer(D_FF)
    p96 = _Packer(3 * D_MODEL)

    def add_ln(name, g, b):
        p32.add(name, jnp.concatenate([g, b], axis=0))            # [2, D]

    def add_attn(name, ap):
        wqkv = jnp.concatenate([ap["wq"], ap["wk"], ap["wv"]], axis=1)  # [D, 3D]
        bqkv = jnp.concatenate([ap["bq"], ap["bk"], ap["bv"]], axis=1)  # [1, 3D]
        p96.add(name + ".wqkv", wqkv)
        p96.add(name + ".bqkv", bqkv)
        p32.add(name + ".wo", ap["wo"])
        p32.add(name + ".bo", ap["bo"])

    def add_ffn(name, fp):
        p64.add(name + ".w1", fp["w1"])
        p64.add(name + ".b1", fp["b1"])
        p32.add(name + ".w2", fp["w2"])
        p32.add(name + ".b2", fp["b2"])

    p32.add("word_emb", emb["word"])                              # [VOCAB, D]
    dt = params["memory"]["dep_type_emb"]                         # [n_types, D]
    dt = jnp.concatenate(
        [dt, jnp.zeros((VOCAB - dt.shape[0], D_MODEL), jnp.float32)], axis=0)
    p32.add("dep_type_emb", dt)                                   # padded to [VOCAB, D]
    # positional + token-type-0 embeddings, pre-tiled over the folded batch
    p32.add("pos_src", jnp.tile(emb["pos"][:Ts], (B, 1)) + emb["type"][0:1])
    p32.add("pos_tgt", jnp.tile(emb["pos"][:Tt], (B, 1)) + emb["type"][0:1])
    add_ln("emb.ln", emb["ln_g"], emb["ln_b"])

    for l, lp in enumerate(params["encoder"]):
        add_attn(f"enc{l}.attn", lp["attn"])
        add_ln(f"enc{l}.ln1", lp["ln1_g"], lp["ln1_b"])
        add_ffn(f"enc{l}.ffn", lp["ffn"])
        add_ln(f"enc{l}.ln2", lp["ln2_g"], lp["ln2_b"])

    mp = params["memory"]
    add_ln("mem.ln", mp["ln_g"], mp["ln_b"])
    add_attn("mem.attn", mp["attn"])

    dp = params["decoder"]
    for l, lp in enumerate(dp["layers"]):
        add_attn(f"dec{l}.sa", lp["self_attn"])
        add_attn(f"dec{l}.ca", lp["cross_attn"])
        add_ffn(f"dec{l}.ffn", lp["ffn"])
        add_ln(f"dec{l}.ln1", lp["ln1_g"], lp["ln1_b"])
        add_ln(f"dec{l}.ln2", lp["ln2_g"], lp["ln2_b"])
        add_ln(f"dec{l}.ln3", lp["ln3_g"], lp["ln3_b"])
    add_ln("dec.lnf", dp["ln_g"], dp["ln_b"])

    return p32.pack(), p64.pack(), p96.pack()


def build_data_blob(src, tgt, dep_text, dep_type,
                    src_mask, tgt_mask, memory_mask, output_mask):
    """Per-batch inputs -> one [rows, 64] blob (one DMA).

    Masks become additive biases, block-diagonal over the folded batch so a
    single [B*Tq, B*Tk] attention never mixes batch elements.
    """
    B, Ts = src.shape
    Tt = tgt.shape[1]

    def folded_bias(mask3):                    # [B, Tq, Tk] {0,1} -> [B*Tq, B*Tk]
        Bb, Tq, Tk = mask3.shape
        blk = jnp.einsum("bc,bqk->bqck", jnp.eye(Bb, dtype=jnp.float32),
                         mask3.astype(jnp.float32))
        return (1.0 - blk.reshape(Bb * Tq, Bb * Tk)) * NEG_INF

    def key_bias(key_mask, Tq):                # [B, Tk] -> [B*Tq, B*Tk]
        Bb, Tk = key_mask.shape
        m = jnp.broadcast_to(key_mask[:, None, :].astype(jnp.float32), (Bb, Tq, Tk))
        return folded_bias(m)

    pk = _Packer(VOCAB)
    # TODO(synk): token-id scalar prefetch (SMEM ids + dynamic row gathers) was
    # considered; packed one-hot matmuls kept (1 DMA, MXU has slack here).
    pk.add("src_oh", jax.nn.one_hot(src.reshape(-1), VOCAB, dtype=jnp.float32))
    pk.add("tgt_oh", jax.nn.one_hot(tgt.reshape(-1), VOCAB, dtype=jnp.float32))
    pk.add("dep_oh", jax.nn.one_hot(dep_text.reshape(-1), VOCAB, dtype=jnp.float32))
    pk.add("dtype_oh", jax.nn.one_hot(dep_type.reshape(-1), VOCAB, dtype=jnp.float32))
    pk.add("src_bias", key_bias(src_mask, Ts))          # encoder self-attn
    pk.add("tgt_bias", folded_bias(tgt_mask))            # decoder self-attn
    pk.add("cross_bias", key_bias(src_mask, Tt))         # decoder cross-attn
    pk.add("mem_bias", key_bias(memory_mask, Ts))        # memory cross-attn
    pk.add("gate", jnp.broadcast_to(
        output_mask.astype(jnp.float32).reshape(B * Ts, 1), (B * Ts, D_MODEL)))
    return pk.pack()


# ------------------------- the single fused Pallas kernel -------------------
def fused_forward_kernel(data_ref, w32_ref, w64_ref, w96_ref,
                         dec_out_ref, mem_out_ref, attn_osc,
                         *, odat, o32, o64, o96):
    """Whole forward pass; batch folded on sublanes, all activations in vregs."""

    def read(ref, offs, name):
        r0, nr, nc = offs[name]
        return ref[r0:r0 + nr, 0:nc]          # static slice -> cheap VMEM load

    rd32 = functools.partial(read, w32_ref, o32)
    rd64 = functools.partial(read, w64_ref, o64)
    rd96 = functools.partial(read, w96_ref, o96)
    rdd = functools.partial(read, data_ref, odat)

    word_emb = rd32("word_emb")               # hoisted: reused by 3 embeddings
    scale = 1.0 / math.sqrt(D_HEAD)

    def layer_norm(x, name):
        ln = rd32(name)                        # [2, D]: row0 gamma, row1 beta
        g, b = ln[0:1, :], ln[1:2, :]
        mu = jnp.mean(x, axis=-1, keepdims=True)
        var = jnp.mean((x - mu) ** 2, axis=-1, keepdims=True)
        return (x - mu) * jax.lax.rsqrt(var + LN_EPS) * g + b

    def ffn(x, name):
        h = jnp.dot(x, rd64(name + ".w1"),
                    preferred_element_type=jnp.float32) + rd64(name + ".b1")
        # TODO(synk): tanh-approx GELU (jax.nn.gelu default); PyTorch nn.GELU
        # default is the exact erf form.
        h = jax.nn.gelu(h)
        return jnp.dot(h, rd32(name + ".w2"),
                       preferred_element_type=jnp.float32) + rd32(name + ".b2")

    def attention(x_q, x_kv, name, bias, is_self):
        # Fused QKV: one [R,32]@[32,96] matmul (two for cross-attn).
        wqkv = rd96(name + ".wqkv")            # [D, 3D]
        bqkv = rd96(name + ".bqkv")            # [1, 3D]
        qkv_q = jnp.dot(x_q, wqkv, preferred_element_type=jnp.float32) + bqkv
        qkv_k = qkv_q if is_self else (
            jnp.dot(x_kv, wqkv, preferred_element_type=jnp.float32) + bqkv)
        q = qkv_q[:, 0:D_MODEL]
        k = qkv_k[:, D_MODEL:2 * D_MODEL]
        v = qkv_k[:, 2 * D_MODEL:3 * D_MODEL]
        nq = x_q.shape[0]
        for h in range(N_HEADS):
            lo, hi = h * D_HEAD, (h + 1) * D_HEAD
            # NT dot_general: contract last dims, no explicit k.T transpose.
            s = lax.dot_general(q[:, lo:hi], k[:, lo:hi],
                                (((1,), (1,)), ((), ())),
                                preferred_element_type=jnp.float32) * scale + bias
            s = s - jnp.max(s, axis=-1, keepdims=True)
            p = jnp.exp(s)
            p = p / jnp.sum(p, axis=-1, keepdims=True)   # exact reciprocal
            # fused output projection: park head result at its lane offset
            attn_osc[0:nq, lo:hi] = jnp.dot(p, v[:, lo:hi],
                                            preferred_element_type=jnp.float32)
        o = attn_osc[0:nq, :]                             # [Rq, D]
        return jnp.dot(o, rd32(name + ".wo"),
                       preferred_element_type=jnp.float32) + rd32(name + ".bo")

    def embed(oh, pos_name):
        x = jnp.dot(oh, word_emb, preferred_element_type=jnp.float32)
        x = x + rd32(pos_name)                 # batch-tiled pos + token-type-0
        return layer_norm(x, "emb.ln")

    # additive, block-diagonal-over-batch biases (built in the wrapper)
    src_bias = rdd("src_bias")
    tgt_bias = rdd("tgt_bias")
    cross_bias = rdd("cross_bias")
    mem_bias = rdd("mem_bias")
    gate = rdd("gate")

    # ---- BERT encoder (post-LN) --------------------------------------------
    x = embed(rdd("src_oh"), "pos_src")
    for l in range(N_ENC_LAYERS):
        x = layer_norm(x + attention(x, x, f"enc{l}.attn", src_bias, True),
                       f"enc{l}.ln1")
        x = layer_norm(x + ffn(x, f"enc{l}.ffn"), f"enc{l}.ln2")
    hidden = x                                             # [B*Ts, D]

    # ---- Memory: cross-attention of hidden over dependency embeddings ------
    dep = jnp.dot(rdd("dep_oh"), word_emb, preferred_element_type=jnp.float32) \
        + jnp.dot(rdd("dtype_oh"), rd32("dep_type_emb"),
                  preferred_element_type=jnp.float32)
    dep = layer_norm(dep, "mem.ln")
    mem = attention(hidden, dep, "mem.attn", mem_bias, False) * gate

    # ---- Transformer decoder (pre-LN + final LN) ----------------------------
    y = embed(rdd("tgt_oh"), "pos_tgt")
    for l in range(N_DEC_LAYERS):
        h = layer_norm(y, f"dec{l}.ln1")
        y = y + attention(h, h, f"dec{l}.sa", tgt_bias, True)
        h = layer_norm(y, f"dec{l}.ln2")
        y = y + attention(h, hidden, f"dec{l}.ca", cross_bias, False)
        h = layer_norm(y, f"dec{l}.ln3")
        y = y + ffn(h, f"dec{l}.ffn")
    y = layer_norm(y, "dec.lnf")

    dec_out_ref[...] = y.astype(dec_out_ref.dtype)
    mem_out_ref[...] = mem.astype(mem_out_ref.dtype)


# ------------------------- wrapper -------------------------------------------
def make_forward(params, B, Ts, Tt, Td):
    (w32, o32), (w64, o64), (w96, o96) = build_weight_blobs(params, B, Ts, Tt)

    @jax.jit
    def forward(src, tgt, src_mask, tgt_mask, dep_text, dep_type,
                memory_mask, output_mask):
        data, odat = build_data_blob(src, tgt, dep_text, dep_type,
                                     src_mask, tgt_mask, memory_mask, output_mask)
        kernel = functools.partial(fused_forward_kernel,
                                   odat=odat, o32=o32, o64=o64, o96=o96)

        def full(arr):
            return pl.BlockSpec(arr.shape, lambda i: (0, 0))

        out_shape = (jax.ShapeDtypeStruct((B * Tt, D_MODEL), jnp.float32),
                     jax.ShapeDtypeStruct((B * Ts, D_MODEL), jnp.float32))
        # TODO(synk): lane-dense [B, T*D] output packing skipped: the in-kernel
        # relayout would cost more than the ~2 KiB of masked stores it removes.
        dec_flat, mem_flat = pl.pallas_call(
            kernel,
            out_shape=out_shape,
            grid=(1,),                         # single invocation, batch folded
            in_specs=[full(data), full(w32), full(w64), full(w96)],
            out_specs=(pl.BlockSpec((B * Tt, D_MODEL), lambda i: (0, 0)),
                       pl.BlockSpec((B * Ts, D_MODEL), lambda i: (0, 0))),
            scratch_shapes=[pltpu.VMEM((B * max(Ts, Tt), D_MODEL), jnp.float32)],
            compiler_params=pltpu.CompilerParams(
                dimension_semantics=("arbitrary",)),
        )(data, w32, w64, w96)
        return (dec_flat.reshape(B, Tt, D_MODEL),
                mem_flat.reshape(B, Ts, D_MODEL))
    # NOTE: self.generator is held by the module but not used in forward().
    return forward


# ------------------------- pure-JAX reference (for correctness) -------------
def reference_forward(params, src, tgt, src_mask, tgt_mask, dep_text, dep_type,
                      memory_mask, output_mask):
    emb = params["emb"]

    def layer_norm(x, g, b):
        mu = x.mean(-1, keepdims=True)
        var = ((x - mu) ** 2).mean(-1, keepdims=True)
        return (x - mu) * jax.lax.rsqrt(var + LN_EPS) * g + b

    def bert_embed(tokens):
        T = tokens.shape[1]
        x = jnp.take(emb["word"], tokens, axis=0) + emb["pos"][:T][None] \
            + emb["type"][0][None, None]
        return layer_norm(x, emb["ln_g"], emb["ln_b"])

    def mha(xq, xkv, ap, bias):
        B, Tq, D = xq.shape
        Tk = xkv.shape[1]

        def split(z, T):
            return z.reshape(B, T, N_HEADS, D_HEAD).transpose(0, 2, 1, 3)

        q = split(xq @ ap["wq"] + ap["bq"], Tq)
        k = split(xkv @ ap["wk"] + ap["bk"], Tk)
        v = split(xkv @ ap["wv"] + ap["bv"], Tk)
        s = jnp.einsum("bhqd,bhkd->bhqk", q, k) / math.sqrt(D_HEAD) + bias
        p = jax.nn.softmax(s, axis=-1)
        o = jnp.einsum("bhqk,bhkd->bhqd", p, v).transpose(0, 2, 1, 3).reshape(B, Tq, D)
        return o @ ap["wo"] + ap["bo"]

    def ffn(x, fp):
        return jax.nn.gelu(x @ fp["w1"] + fp["b1"]) @ fp["w2"] + fp["b2"]

    def key_bias(mask):  # [B, Tk] -> [B, 1, 1, Tk]
        return ((1.0 - mask) * NEG_INF)[:, None, None, :]

    x = bert_embed(src)
    sbias = key_bias(src_mask)
    for lp in params["encoder"]:
        x = layer_norm(x + mha(x, x, lp["attn"], sbias), lp["ln1_g"], lp["ln1_b"])
        x = layer_norm(x + ffn(x, lp["ffn"]), lp["ln2_g"], lp["ln2_b"])
    hidden = x

    mp = params["memory"]
    dep = jnp.take(emb["word"], dep_text, axis=0) + jnp.take(mp["dep_type_emb"],
                                                             dep_type, axis=0)
    dep = layer_norm(dep, mp["ln_g"], mp["ln_b"])
    mem = mha(hidden, dep, mp["attn"], key_bias(memory_mask)) * output_mask[:, :, None]

    y = bert_embed(tgt)
    tbias = ((1.0 - tgt_mask) * NEG_INF)[:, None, :, :]
    dp = params["decoder"]
    for lp in dp["layers"]:
        h = layer_norm(y, lp["ln1_g"], lp["ln1_b"])
        y = y + mha(h, h, lp["self_attn"], tbias)
        h = layer_norm(y, lp["ln2_g"], lp["ln2_b"])
        y = y + mha(h, hidden, lp["cross_attn"], sbias)
        h = layer_norm(y, lp["ln3_g"], lp["ln3_b"])
        y = y + ffn(h, lp["ffn"])
    decoded = layer_norm(y, dp["ln_g"], dp["ln_b"])
    return decoded, mem


# ------------------------- deterministic parameter init ---------------------
def _dense(key, fan_in, fan_out):
    return 0.02 * jax.random.normal(key, (fan_in, fan_out), jnp.float32)


def _attn_params(key):
    ks = jax.random.split(key, 4)
    z = jnp.zeros((1, D_MODEL), jnp.float32)
    return {
        "wq": _dense(ks[0], D_MODEL, D_MODEL), "bq": z,
        "wk": _dense(ks[1], D_MODEL, D_MODEL), "bk": z,
        "wv": _dense(ks[2], D_MODEL, D_MODEL), "bv": z,
        "wo": _dense(ks[3], D_MODEL, D_MODEL), "bo": z,
    }


def _ffn_params(key):
    k1, k2 = jax.random.split(key)
    return {
        "w1": _dense(k1, D_MODEL, D_FF), "b1": jnp.zeros((1, D_FF), jnp.float32),
        "w2": _dense(k2, D_FF, D_MODEL), "b2": jnp.zeros((1, D_MODEL), jnp.float32),
    }


def _ln():
    return jnp.ones((1, D_MODEL), jnp.float32), jnp.zeros((1, D_MODEL), jnp.float32)


def init_params(key):
    keys = jax.random.split(key, 16)
    g, b = _ln()
    emb = {
        "word": 0.02 * jax.random.normal(keys[0], (VOCAB, D_MODEL), jnp.float32),
        "pos": 0.02 * jax.random.normal(keys[1], (MAX_POS, D_MODEL), jnp.float32),
        "type": 0.02 * jax.random.normal(keys[2], (2, D_MODEL), jnp.float32),
        "ln_g": g, "ln_b": b,
    }
    encoder = []
    for i in range(N_ENC_LAYERS):
        ka, kf = jax.random.split(keys[3 + i])
        g1, b1 = _ln(); g2, b2 = _ln()
        encoder.append({"attn": _attn_params(ka), "ln1_g": g1, "ln1_b": b1,
                        "ffn": _ffn_params(kf), "ln2_g": g2, "ln2_b": b2})
    dec_layers = []
    for i in range(N_DEC_LAYERS):
        ks_, kc, kf = jax.random.split(keys[7 + i], 3)
        g1, b1 = _ln(); g2, b2 = _ln(); g3, b3 = _ln()
        dec_layers.append({"self_attn": _attn_params(ks_),
                           "cross_attn": _attn_params(kc),
                           "ffn": _ffn_params(kf),
                           "ln1_g": g1, "ln1_b": b1,
                           "ln2_g": g2, "ln2_b": b2,
                           "ln3_g": g3, "ln3_b": b3})
    gd, bd = _ln()
    decoder = {"layers": dec_layers, "ln_g": gd, "ln_b": bd}
    gm, bm = _ln()
    memory = {
        "dep_type_emb": 0.02 * jax.random.normal(keys[11], (N_DEP_TYPES, D_MODEL),
                                                 jnp.float32),
        "ln_g": gm, "ln_b": bm,
        "attn": _attn_params(keys[12]),
    }
    return {"emb": emb, "encoder": encoder, "decoder": decoder, "memory": memory}


# ------------------------- main ----------------------------------------------
if __name__ == "__main__":
    key = jax.random.PRNGKey(0)
    pkey, dkey = jax.random.split(key)
    params = init_params(pkey)

    B, TS, TT, TD = 2, 8, 8, 8
    ks = jax.random.split(dkey, 4)
    src = jax.random.randint(ks[0], (B, TS), 0, VOCAB)
    tgt = jax.random.randint(ks[1], (B, TT), 0, VOCAB)
    dep_text = jax.random.randint(ks[2], (B, TD), 0, VOCAB)
    dep_type = jax.random.randint(ks[3], (B, TD), 0, N_DEP_TYPES)

    src_mask = jnp.ones((B, TS), jnp.float32).at[1, TS - 2:].set(0.0)
    causal = jnp.tril(jnp.ones((TT, TT), jnp.float32))
    tgt_pad = jnp.ones((B, TT), jnp.float32).at[0, TT - 1:].set(0.0)
    tgt_mask = causal[None, :, :] * tgt_pad[:, None, :]          # [B, Tt, Tt]
    memory_mask = jnp.ones((B, TD), jnp.float32).at[1, TD - 3:].set(0.0)
    output_mask = jnp.ones((B, TS), jnp.float32).at[1, TS - 2:].set(0.0)

    fwd = make_forward(params, B, TS, TT, TD)
    decoded, memory_out = fwd(src, tgt, src_mask, tgt_mask,
                              dep_text, dep_type, memory_mask, output_mask)
    jax.block_until_ready((decoded, memory_out))

    assert decoded.shape == (B, TT, D_MODEL)
    assert memory_out.shape == (B, TS, D_MODEL)
    assert jnp.all(jnp.isfinite(decoded)) and jnp.all(jnp.isfinite(memory_out))

    # correctness check against a pure-JAX reference of the same math
    with jax.default_matmul_precision("highest"):
        ref_dec, ref_mem = reference_forward(params, src, tgt, src_mask, tgt_mask,
                                             dep_text, dep_type, memory_mask,
                                             output_mask)
    assert jnp.allclose(decoded, ref_dec, atol=2e-2, rtol=2e-2), \
        float(jnp.max(jnp.abs(decoded - ref_dec)))
    assert jnp.allclose(memory_out, ref_mem, atol=2e-2, rtol=2e-2), \
        float(jnp.max(jnp.abs(memory_out - ref_mem)))

    print("KERNEL_OK")
</pallas_src>

<mosaic_0001>
module attributes {stable_mosaic.version = 11 : i64} {
  func.func @fused_forward_kernel(%arg0: i32, %arg1: memref<144x64xf32, #tpu.memory_space<vmem>>, %arg2: memref<528x32xf32, #tpu.memory_space<vmem>>, %arg3: memref<80x64xf32, #tpu.memory_space<vmem>>, %arg4: memref<160x96xf32, #tpu.memory_space<vmem>>, %arg5: memref<16x32xf32, #tpu.memory_space<vmem>>, %arg6: memref<16x32xf32, #tpu.memory_space<vmem>>, %arg7: memref<16x32xf32, #tpu.memory_space<vmem>>) attributes {dimension_semantics = [#tpu.dimension_semantics<arbitrary>], iteration_bounds = array<i64: 1>, scalar_prefetch = 0 : i64, scratch_operands = 1 : i64, tpu.core_type = #tpu.core_type<tc>, window_params = [{pipeline_mode = #tpu.pipeline_mode<synchronous>, transform_indices = @transform_0, window_bounds = array<i64: 144, 64>}, {pipeline_mode = #tpu.pipeline_mode<synchronous>, transform_indices = @transform_1, window_bounds = array<i64: 528, 32>}, {pipeline_mode = #tpu.pipeline_mode<synchronous>, transform_indices = @transform_2, window_bounds = array<i64: 80, 64>}, {pipeline_mode = #tpu.pipeline_mode<synchronous>, transform_indices = @transform_3, window_bounds = array<i64: 160, 96>}, {pipeline_mode = #tpu.pipeline_mode<synchronous>, transform_indices = @transform_4, window_bounds = array<i64: 16, 32>}, {pipeline_mode = #tpu.pipeline_mode<synchronous>, transform_indices = @transform_5, window_bounds = array<i64: 16, 32>}]} {
    %c0 = arith.constant 0 : index
    %c0_0 = arith.constant 0 : index
    %0 = vector.load %arg2[%c0, %c0_0] : memref<528x32xf32, #tpu.memory_space<vmem>>, vector<64x32xf32>
    %c64 = arith.constant 64 : index
    %c0_1 = arith.constant 0 : index
    %1 = vector.load %arg1[%c64, %c0_1] : memref<144x64xf32, #tpu.memory_space<vmem>>, vector<16x16xf32>
    %c80 = arith.constant 80 : index
    %c0_2 = arith.constant 0 : index
    %2 = vector.load %arg1[%c80, %c0_2] : memref<144x64xf32, #tpu.memory_space<vmem>>, vector<16x16xf32>
    %c96 = arith.constant 96 : index
    %c0_3 = arith.constant 0 : index
    %3 = vector.load %arg1[%c96, %c0_3] : memref<144x64xf32, #tpu.memory_space<vmem>>, vector<16x16xf32>
    %c112 = arith.constant 112 : index
    %c0_4 = arith.constant 0 : index
    %4 = vector.load %arg1[%c112, %c0_4] : memref<144x64xf32, #tpu.memory_space<vmem>>, vector<16x16xf32>
    %c128 = arith.constant 128 : index
    %c0_5 = arith.constant 0 : index
    %5 = vector.load %arg1[%c128, %c0_5] : memref<144x64xf32, #tpu.memory_space<vmem>>, vector<16x32xf32>
    %c0_6 = arith.constant 0 : index
    %c0_7 = arith.constant 0 : index
    %6 = vector.load %arg1[%c0_6, %c0_7] : memref<144x64xf32, #tpu.memory_space<vmem>>, vector<16x64xf32>
    %cst = arith.constant dense<0.000000e+00> : vector<16x32xf32>
    %7 = tpu.matmul %6, %0, %cst {dimension_numbers = #tpu.dot_dimension_numbers<[1], [0], [0], [1], [0, 0, 1, 1], [], []>} : vector<16x64xf32>, vector<64x32xf32>, vector<16x32xf32> -> vector<16x32xf32>
    %c128_8 = arith.constant 128 : index
    %c0_9 = arith.constant 0 : index
    %8 = vector.load %arg2[%c128_8, %c0_9] : memref<528x32xf32, #tpu.memory_space<vmem>>, vector<16x32xf32>
    %9 = arith.addf %7, %8 : vector<16x32xf32>
    %c160 = arith.constant 160 : index
    %c0_10 = arith.constant 0 : index
    %10 = vector.load %arg2[%c160, %c0_10] : memref<528x32xf32, #tpu.memory_space<vmem>>, vector<2x32xf32>
    %11 = vector.extract_strided_slice %10 {offsets = [0, 0], sizes = [1, 32], strides = [1, 1]} : vector<2x32xf32> to vector<1x32xf32>
    %12 = vector.extract_strided_slice %10 {offsets = [1, 0], sizes = [1, 32], strides = [1, 1]} : vector<2x32xf32> to vector<1x32xf32>
    %cst_11 = arith.constant dense<0.000000e+00> : vector<16xf32>
    %13 = vector.multi_reduction <add>, %9, %cst_11 [1] : vector<16x32xf32> to vector<16xf32>
    %14 = vector.shape_cast %13 : vector<16xf32> to vector<16x1xf32>
    %cst_12 = arith.constant 3.200000e+01 : f32
    %15 = vector.broadcast %cst_12 : f32 to vector<16x1xf32>
    %16 = arith.divf %14, %15 : vector<16x1xf32>
    %17 = vector.broadcast %16 : vector<16x1xf32> to vector<16x32xf32>
    %18 = arith.subf %9, %17 : vector<16x32xf32>
    %19 = arith.mulf %18, %18 : vector<16x32xf32>
    %cst_13 = arith.constant dense<0.000000e+00> : vector<16xf32>
    %20 = vector.multi_reduction <add>, %19, %cst_13 [1] : vector<16x32xf32> to vector<16xf32>
    %21 = vector.shape_cast %20 : vector<16xf32> to vector<16x1xf32>
    %cst_14 = arith.constant 3.200000e+01 : f32
    %22 = vector.broadcast %cst_14 : f32 to vector<16x1xf32>
    %23 = arith.divf %21, %22 : vector<16x1xf32>
    %24 = vector.broadcast %16 : vector<16x1xf32> to vector<16x32xf32>
    %25 = arith.subf %9, %24 : vector<16x32xf32>
    %cst_15 = arith.constant 9.99999996E-13 : f32
    %26 = vector.broadcast %cst_15 : f32 to vector<16x1xf32>
    %27 = arith.addf %23, %26 : vector<16x1xf32>
    %28 = math.rsqrt %27 : vector<16x1xf32>
    %29 = vector.broadcast %28 : vector<16x1xf32> to vector<16x32xf32>
    %30 = arith.mulf %25, %29 : vector<16x32xf32>
    %31 = vector.broadcast %11 : vector<1x32xf32> to vector<16x32xf32>
    %32 = arith.mulf %30, %31 : vector<16x32xf32>
    %33 = vector.broadcast %12 : vector<1x32xf32> to vector<16x32xf32>
    %34 = arith.addf %32, %33 : vector<16x32xf32>
    %c0_16 = arith.constant 0 : index
    %c0_17 = arith.constant 0 : index
    %35 = vector.load %arg4[%c0_16, %c0_17] : memref<160x96xf32, #tpu.memory_space<vmem>>, vector<32x96xf32>
    %c32 = arith.constant 32 : index
    %c0_18 = arith.constant 0 : index
    %36 = vector.load %arg4[%c32, %c0_18] : memref<160x96xf32, #tpu.memory_space<vmem>>, vector<1x96xf32>
    %cst_19 = arith.constant dense<0.000000e+00> : vector<16x96xf32>
    %37 = tpu.matmul %34, %35, %cst_19 {dimension_numbers = #tpu.dot_dimension_numbers<[1], [0], [0], [1], [0, 0, 1, 1], [], []>} : vector<16x32xf32>, vector<32x96xf32>, vector<16x96xf32> -> vector<16x96xf32>
    %38 = vector.broadcast %36 : vector<1x96xf32> to vector<16x96xf32>
    %39 = arith.addf %37, %38 : vector<16x96xf32>
    %40 = vector.extract_strided_slice %39 {offsets = [0, 0], sizes = [16, 32], strides = [1, 1]} : vector<16x96xf32> to vector<16x32xf32>
    %41 = vector.extract_strided_slice %39 {offsets = [0, 32], sizes = [16, 32], strides = [1, 1]} : vector<16x96xf32> to vector<16x32xf32>
    %42 = vector.extract_strided_slice %39 {offsets = [0, 64], sizes = [16, 32], strides = [1, 1]} : vector<16x96xf32> to vector<16x32xf32>
    %43 = vector.extract_strided_slice %40 {offsets = [0, 0], sizes = [16, 8], strides = [1, 1]} : vector<16x32xf32> to vector<16x8xf32>
    %44 = vector.extract_strided_slice %41 {offsets = [0, 0], sizes = [16, 8], strides = [1, 1]} : vector<16x32xf32> to vector<16x8xf32>
    %cst_20 = arith.constant dense<0.000000e+00> : vector<16x16xf32>
    %45 = tpu.matmul %43, %44, %cst_20 {dimension_numbers = #tpu.dot_dimension_numbers<[1], [1], [0], [0], [0, 0, 1, 0], [], []>} : vector<16x8xf32>, vector<16x8xf32>, vector<16x16xf32> -> vector<16x16xf32>
    %cst_21 = arith.constant 0.353553385 : f32
    %46 = vector.broadcast %cst_21 : f32 to vector<16x16xf32>
    %47 = arith.mulf %45, %46 : vector<16x16xf32>
    %48 = arith.addf %47, %1 : vector<16x16xf32>
    %cst_22 = arith.constant dense<0xFF800000> : vector<16xf32>
    %49 = vector.multi_reduction <maximumf>, %48, %cst_22 [1] : vector<16x16xf32> to vector<16xf32>
    %50 = vector.shape_cast %49 : vector<16xf32> to vector<16x1xf32>
    %51 = vector.broadcast %50 : vector<16x1xf32> to vector<16x16xf32>
    %52 = arith.subf %48, %51 : vector<16x16xf32>
    %53 = math.exp %52 : vector<16x16xf32>
    %cst_23 = arith.constant dense<0.000000e+00> : vector<16xf32>
    %54 = vector.multi_reduction <add>, %53, %cst_23 [1] : vector<16x16xf32> to vector<16xf32>
    %55 = vector.shape_cast %54 : vector<16xf32> to vector<16x1xf32>
    %56 = vector.broadcast %55 : vector<16x1xf32> to vector<16x16xf32>
    %57 = arith.divf %53, %56 : vector<16x16xf32>
    %58 = vector.extract_strided_slice %42 {offsets = [0, 0], sizes = [16, 8], strides = [1, 1]} : vector<16x32xf32> to vector<16x8xf32>
    %cst_24 = arith.constant dense<0.000000e+00> : vector<16x8xf32>
    %59 = tpu.matmul %57, %58, %cst_24 {dimension_numbers = #tpu.dot_dimension_numbers<[1], [0], [0], [1], [0, 0, 1, 1], [], []>} : vector<16x16xf32>, vector<16x8xf32>, vector<16x8xf32> -> vector<16x8xf32>
    %c0_25 = arith.constant 0 : index
    %c0_26 = arith.constant 0 : index
    %60 = vector.load %arg7[%c0_25, %c0_26] : memref<16x32xf32, #tpu.memory_space<vmem>>, vector<16x8xf32>
    tpu.vector_store %arg7[%c0_25, %c0_26], %59 {strides = array<i32>} : memref<16x32xf32, #tpu.memory_space<vmem>>, vector<16x8xf32>,
    %61 = vector.extract_strided_slice %40 {offsets = [0, 8], sizes = [16, 8], strides = [1, 1]} : vector<16x32xf32> to vector<16x8xf32>
    %62 = vector.extract_strided_slice %41 {offsets = [0, 8], sizes = [16, 8], strides = [1, 1]} : vector<16x32xf32> to vector<16x8xf32>
    %cst_27 = arith.constant dense<0.000000e+00> : vector<16x16xf32>
    %63 = tpu.matmul %61, %62, %cst_27 {dimension_numbers = #tpu.dot_dimension_numbers<[1], [1], [0], [0], [0, 0, 1, 0], [], []>} : vector<16x8xf32>, vector<16x8xf32>, vector<16x16xf32> -> vector<16x16xf32>
    %cst_28 = arith.constant 0.353553385 : f32
    %64 = vector.broadcast %cst_28 : f32 to vector<16x16xf32>
    %65 = arith.mulf %63, %64 : vector<16x16xf32>
    %66 = arith.addf %65, %1 : vector<16x16xf32>
    %cst_29 = arith.constant dense<0xFF800000> : vector<16xf32>
    %67 = vector.multi_reduction <maximumf>, %66, %cst_29 [1] : vector<16x16xf32> to vector<16xf32>
    %68 = vector.shape_cast %67 : vector<16xf32> to vector<16x1xf32>
    %69 = vector.broadcast %68 : vector<16x1xf32> to vector<16x16xf32>
    %70 = arith.subf %66, %69 : vector<16x16xf32>
    %71 = math.exp %70 : vector<16x16xf32>
    %cst_30 = arith.constant dense<0.000000e+00> : vector<16xf32>
    %72 = vector.multi_reduction <add>, %71, %cst_30 [1] : vector<16x16xf32> to vector<16xf32>
    %73 = vector.shape_cast %72 : vector<16xf32> to vector<16x1xf32>
    %74 = vector.broadcast %73 : vector<16x1xf32> to vector<16x16xf32>
    %75 = arith.divf %71, %74 : vector<16x16xf32>
    %76 = vector.extract_strided_slice %42 {offsets = [0, 8], sizes = [16, 8], strides = [1, 1]} : vector<16x32xf32> to vector<16x8xf32>
    %cst_31 = arith.constant dense<0.000000e+00> : vector<16x8xf32>
    %77 = tpu.matmul %75, %76, %cst_31 {dimension_numbers = #tpu.dot_dimension_numbers<[1], [0], [0], [1], [0, 0, 1, 1], [], []>} : vector<16x16xf32>, vector<16x8xf32>, vector<16x8xf32> -> vector<16x8xf32>
    %c0_32 = arith.constant 0 : index
    %c8 = arith.constant 8 : index
    %78 = vector.load %arg7[%c0_32, %c8] : memref<16x32xf32, #tpu.memory_space<vmem>>, vector<16x8xf32>
    tpu.vector_store %arg7[%c0_32, %c8], %77 {strides = array<i32>} : memref<16x32xf32, #tpu.memory_space<vmem>>, vector<16x8xf32>,
    %79 = vector.extract_strided_slice %40 {offsets = [0, 16], sizes = [16, 8], strides = [1, 1]} : vector<16x32xf32> to vector<16x8xf32>
    %80 = vector.extract_strided_slice %41 {offsets = [0, 16], sizes = [16, 8], strides = [1, 1]} : vector<16x32xf32> to vector<16x8xf32>
    %cst_33 = arith.constant dense<0.000000e+00> : vector<16x16xf32>
    %81 = tpu.matmul %79, %80, %cst_33 {dimension_numbers = #tpu.dot_dimension_numbers<[1], [1], [0], [0], [0, 0, 1, 0], [], []>} : vector<16x8xf32>, vector<16x8xf32>, vector<16x16xf32> -> vector<16x16xf32>
    %cst_34 = arith.constant 0.353553385 : f32
    %82 = vector.broadcast %cst_34 : f32 to vector<16x16xf32>
    %83 = arith.mulf %81, %82 : vector<16x16xf32>
    %84 = arith.addf %83, %1 : vector<16x16xf32>
    %cst_35 = arith.constant dense<0xFF800000> : vector<16xf32>
    %85 = vector.multi_reduction <maximumf>, %84, %cst_35 [1] : vector<16x16xf32> to vector<16xf32>
    %86 = vector.shape_cast %85 : vector<16xf32> to vector<16x1xf32>
    %87 = vector.broadcast %86 : vector<16x1xf32> to vector<16x16xf32>
    %88 = arith.subf %84, %87 : vector<16x16xf32>
    %89 = math.exp %88 : vector<16x16xf32>
    %cst_36 = arith.constant dense<0.000000e+00> : vector<16xf32>
    %90 = vector.multi_reduction <add>, %89, %cst_36 [1] : vector<16x16xf32> to vector<16xf32>
    %91 = vector.shape_cast %90 : vector<16xf32> to vector<16x1xf32>
    %92 = vector.broadcast %91 : vector<16x1xf32> to vector<16x16xf32>
    %93 = arith.divf %89, %92 : vector<16x16xf32>
    %94 = vector.extract_strided_slice %42 {offsets = [0, 16], sizes = [16, 8], strides = [1, 1]} : vector<16x32xf32> to vector<16x8xf32>
    %cst_37 = arith.constant dense<0.000000e+00> : vector<16x8xf32>
    %95 = tpu.matmul %93, %94, %cst_37 {dimension_numbers = #tpu.dot_dimension_numbers<[1], [0], [0], [1], [0, 0, 1, 1], [], []>} : vector<16x16xf32>, vector<16x8xf32>, vector<16x8xf32> -> vector<16x8xf32>
    %c0_38 = arith.constant 0 : index
    %c16 = arith.constant 16 : index
    %96 = vector.load %arg7[%c0_38, %c16] : memref<16x32xf32, #tpu.memory_space<vmem>>, vector<16x8xf32>
    tpu.vector_store %arg7[%c0_38, %c16], %95 {strides = array<i32>} : memref<16x32xf32, #tpu.memory_space<vmem>>, vector<16x8xf32>,
    %97 = vector.extract_strided_slice %40 {offsets = [0, 24], sizes = [16, 8], strides = [1, 1]} : vector<16x32xf32> to vector<16x8xf32>
    %98 = vector.extract_strided_slice %41 {offsets = [0, 24], sizes = [16, 8], strides = [1, 1]} : vector<16x32xf32> to vector<16x8xf32>
    %cst_39 = arith.constant dense<0.000000e+00> : vector<16x16xf32>
    %99 = tpu.matmul %97, %98, %cst_39 {dimension_numbers = #tpu.dot_dimension_numbers<[1], [1], [0], [0], [0, 0, 1, 0], [], []>} : vector<16x8xf32>, vector<16x8xf32>, vector<16x16xf32> -> vector<16x16xf32>
    %cst_40 = arith.constant 0.353553385 : f32
    %100 = vector.broadcast %cst_40 : f32 to vector<16x16xf32>
    %101 = arith.mulf %99, %100 : vector<16x16xf32>
    %102 = arith.addf %101, %1 : vector<16x16xf32>
    %cst_41 = arith.constant dense<0xFF800000> : vector<16xf32>
    %103 = vector.multi_reduction <maximumf>, %102, %cst_41 [1] : vector<16x16xf32> to vector<16xf32>
    %104 = vector.shape_cast %103 : vector<16xf32> to vector<16x1xf32>
    %105 = vector.broadcast %104 : vector<16x1xf32> to vector<16x16xf32>
    %106 = arith.subf %102, %105 : vector<16x16xf32>
    %107 = math.exp %106 : vector<16x16xf32>
    %cst_42 = arith.constant dense<0.000000e+00> : vector<16xf32>
    %108 = vector.multi_reduction <add>, %107, %cst_42 [1] : vector<16x16xf32> to vector<16xf32>
    %109 = vector.shape_cast %108 : vector<16xf32> to vector<16x1xf32>
    %110 = vector.broadcast %109 : vector<16x1xf32> to vector<16x16xf32>
    %111 = arith.divf %107, %110 : vector<16x16xf32>
    %112 = vector.extract_strided_slice %42 {offsets = [0, 24], sizes = [16, 8], strides = [1, 1]} : vector<16x32xf32> to vector<16x8xf32>
    %cst_43 = arith.constant dense<0.000000e+00> : vector<16x8xf32>
    %113 = tpu.matmul %111, %112, %cst_43 {dimension_numbers = #tpu.dot_dimension_numbers<[1], [0], [0], [1], [0, 0, 1, 1], [], []>} : vector<16x16xf32>, vector<16x8xf32>, vector<16x8xf32> -> vector<16x8xf32>
    %c0_44 = arith.constant 0 : index
    %c24 = arith.constant 24 : index
    %114 = vector.load %arg7[%c0_44, %c24] : memref<16x32xf32, #tpu.memory_space<vmem>>, vector<16x8xf32>
    tpu.vector_store %arg7[%c0_44, %c24], %113 {strides = array<i32>} : memref<16x32xf32, #tpu.memory_space<vmem>>, vector<16x8xf32>,
    %c0_45 = arith.constant 0 : index
    %c0_46 = arith.constant 0 : index
    %115 = vector.load %arg7[%c0_45, %c0_46] : memref<16x32xf32, #tpu.memory_space<vmem>>, vector<16x32xf32>
    %c168 = arith.constant 168 : index
    %c0_47 = arith.constant 0 : index
    %116 = vector.load %arg2[%c168, %c0_47] : memref<528x32xf32, #tpu.memory_space<vmem>>, vector<32x32xf32>
    %cst_48 = arith.constant dense<0.000000e+00> : vector<16x32xf32>
    %117 = tpu.matmul %115, %116, %cst_48 {dimension_numbers = #tpu.dot_dimension_numbers<[1], [0], [0], [1], [0, 0, 1, 1], [], []>} : vector<16x32xf32>, vector<32x32xf32>, vector<16x32xf32> -> vector<16x32xf32>
    %c200 = arith.constant 200 : index
    %c0_49 = arith.constant 0 : index
    %118 = vector.load %arg2[%c200, %c0_49] : memref<528x32xf32, #tpu.memory_space<vmem>>, vector<1x32xf32>
    %119 = vector.broadcast %118 : vector<1x32xf32> to vector<16x32xf32>
    %120 = arith.addf %117, %119 : vector<16x32xf32>
    %121 = arith.addf %34, %120 : vector<16x32xf32>
    %c208 = arith.constant 208 : index
    %c0_50 = arith.constant 0 : index
    %122 = vector.load %arg2[%c208, %c0_50] : memref<528x32xf32, #tpu.memory_space<vmem>>, vector<2x32xf32>
    %123 = vector.extract_strided_slice %122 {offsets = [0, 0], sizes = [1, 32], strides = [1, 1]} : vector<2x32xf32> to vector<1x32xf32>
    %124 = vector.extract_strided_slice %122 {offsets = [1, 0], sizes = [1, 32], strides = [1, 1]} : vector<2x32xf32> to vector<1x32xf32>
    %cst_51 = arith.constant dense<0.000000e+00> : vector<16xf32>
    %125 = vector.multi_reduction <add>, %121, %cst_51 [1] : vector<16x32xf32> to vector<16xf32>
    %126 = vector.shape_cast %125 : vector<16xf32> to vector<16x1xf32>
    %cst_52 = arith.constant 3.200000e+01 : f32
    %127 = vector.broadcast %cst_52 : f32 to vector<16x1xf32>
    %128 = arith.divf %126, %127 : vector<16x1xf32>
    %129 = vector.broadcast %128 : vector<16x1xf32> to vector<16x32xf32>
    %130 = arith.subf %121, %129 : vector<16x32xf32>
    %131 = arith.mulf %130, %130 : vector<16x32xf32>
    %cst_53 = arith.constant dense<0.000000e+00> : vector<16xf32>
    %132 = vector.multi_reduction <add>, %131, %cst_53 [1] : vector<16x32xf32> to vector<16xf32>
    %133 = vector.shape_cast %132 : vector<16xf32> to vector<16x1xf32>
    %cst_54 = arith.constant 3.200000e+01 : f32
    %134 = vector.broadcast %cst_54 : f32 to vector<16x1xf32>
    %135 = arith.divf %133, %134 : vector<16x1xf32>
    %136 = vector.broadcast %128 : vector<16x1xf32> to vector<16x32xf32>
    %137 = arith.subf %121, %136 : vector<16x32xf32>
    %cst_55 = arith.constant 9.99999996E-13 : f32
    %138 = vector.broadcast %cst_55 : f32 to vector<16x1xf32>
    %139 = arith.addf %135, %138 : vector<16x1xf32>
    %140 = math.rsqrt %139 : vector<16x1xf32>
    %141 = vector.broadcast %140 : vector<16x1xf32> to vector<16x32xf32>
    %142 = arith.mulf %137, %141 : vector<16x32xf32>
    %143 = vector.broadcast %123 : vector<1x32xf32> to vector<16x32xf32>
    %144 = arith.mulf %142, %143 : vector<16x32xf32>
    %145 = vector.broadcast %124 : vector<1x32xf32> to vector<16x32xf32>
    %146 = arith.addf %144, %145 : vector<16x32xf32>
    %c0_56 = arith.constant 0 : index
    %c0_57 = arith.constant 0 : index
    %147 = vector.load %arg3[%c0_56, %c0_57] : memref<80x64xf32, #tpu.memory_space<vmem>>, vector<32x64xf32>
    %cst_58 = arith.constant dense<0.000000e+00> : vector<16x64xf32>
    %148 = tpu.matmul %146, %147, %cst_58 {dimension_numbers = #tpu.dot_dimension_numbers<[1], [0], [0], [1], [0, 0, 1, 1], [], []>} : vector<16x32xf32>, vector<32x64xf32>, vector<16x64xf32> -> vector<16x64xf32>
    %c32_59 = arith.constant 32 : index
    %c0_60 = arith.constant 0 : index
    %149 = vector.load %arg3[%c32_59, %c0_60] : memref<80x64xf32, #tpu.memory_space<vmem>>, vector<1x64xf32>
    %150 = vector.broadcast %149 : vector<1x64xf32> to vector<16x64xf32>
    %151 = arith.addf %148, %150 : vector<16x64xf32>
    %152 = arith.mulf %151, %151 : vector<16x64xf32>
    %153 = arith.mulf %151, %152 : vector<16x64xf32>
    %cst_61 = arith.constant 4.471500e-02 : f32
    %154 = vector.broadcast %cst_61 : f32 to vector<16x64xf32>
    %155 = arith.mulf %154, %153 : vector<16x64xf32>
    %156 = arith.addf %151, %155 : vector<16x64xf32>
    %cst_62 = arith.constant 0.797884583 : f32
    %157 = vector.broadcast %cst_62 : f32 to vector<16x64xf32>
    %158 = arith.mulf %157, %156 : vector<16x64xf32>
    %159 = math.tanh %158 : vector<16x64xf32>
    %cst_63 = arith.constant 1.000000e+00 : f32
    %160 = vector.broadcast %cst_63 : f32 to vector<16x64xf32>
    %161 = arith.addf %160, %159 : vector<16x64xf32>
    %cst_64 = arith.constant 5.000000e-01 : f32
    %162 = vector.broadcast %cst_64 : f32 to vector<16x64xf32>
    %163 = arith.mulf %162, %161 : vector<16x64xf32>
    %164 = arith.mulf %151, %163 : vector<16x64xf32>
    %c216 = arith.constant 216 : index
    %c0_65 = arith.constant 0 : index
    %165 = vector.load %arg2[%c216, %c0_65] : memref<528x32xf32, #tpu.memory_space<vmem>>, vector<64x32xf32>
    %cst_66 = arith.constant dense<0.000000e+00> : vector<16x32xf32>
    %166 = tpu.matmul %164, %165, %cst_66 {dimension_numbers = #tpu.dot_dimension_numbers<[1], [0], [0], [1], [0, 0, 1, 1], [], []>} : vector<16x64xf32>, vector<64x32xf32>, vector<16x32xf32> -> vector<16x32xf32>
    %c280 = arith.constant 280 : index
    %c0_67 = arith.constant 0 : index
    %167 = vector.load %arg2[%c280, %c0_67] : memref<528x32xf32, #tpu.memory_space<vmem>>, vector<1x32xf32>
    %168 = vector.broadcast %167 : vector<1x32xf32> to vector<16x32xf32>
    %169 = arith.addf %166, %168 : vector<16x32xf32>
    %170 = arith.addf %146, %169 : vector<16x32xf32>
    %c288 = arith.constant 288 : index
    %c0_68 = arith.constant 0 : index
    %171 = vector.load %arg2[%c288, %c0_68] : memref<528x32xf32, #tpu.memory_space<vmem>>, vector<2x32xf32>
    %172 = vector.extract_strided_slice %171 {offsets = [0, 0], sizes = [1, 32], strides = [1, 1]} : vector<2x32xf32> to vector<1x32xf32>
    %173 = vector.extract_strided_slice %171 {offsets = [1, 0], sizes = [1, 32], strides = [1, 1]} : vector<2x32xf32> to vector<1x32xf32>
    %cst_69 = arith.constant dense<0.000000e+00> : vector<16xf32>
    %174 = vector.multi_reduction <add>, %170, %cst_69 [1] : vector<16x32xf32> to vector<16xf32>
    %175 = vector.shape_cast %174 : vector<16xf32> to vector<16x1xf32>
    %cst_70 = arith.constant 3.200000e+01 : f32
    %176 = vector.broadcast %cst_70 : f32 to vector<16x1xf32>
    %177 = arith.divf %175, %176 : vector<16x1xf32>
    %178 = vector.broadcast %177 : vector<16x1xf32> to vector<16x32xf32>
    %179 = arith.subf %170, %178 : vector<16x32xf32>
    %180 = arith.mulf %179, %179 : vector<16x32xf32>
    %cst_71 = arith.constant dense<0.000000e+00> : vector<16xf32>
    %181 = vector.multi_reduction <add>, %180, %cst_71 [1] : vector<16x32xf32> to vector<16xf32>
    %182 = vector.shape_cast %181 : vector<16xf32> to vector<16x1xf32>
    %cst_72 = arith.constant 3.200000e+01 : f32
    %183 = vector.broadcast %cst_72 : f32 to vector<16x1xf32>
    %184 = arith.divf %182, %183 : vector<16x1xf32>
    %185 = vector.broadcast %177 : vector<16x1xf32> to vector<16x32xf32>
    %186 = arith.subf %170, %185 : vector<16x32xf32>
    %cst_73 = arith.constant 9.99999996E-13 : f32
    %187 = vector.broadcast %cst_73 : f32 to vector<16x1xf32>
    %188 = arith.addf %184, %187 : vector<16x1xf32>
    %189 = math.rsqrt %188 : vector<16x1xf32>
    %190 = vector.broadcast %189 : vector<16x1xf32> to vector<16x32xf32>
    %191 = arith.mulf %186, %190 : vector<16x32xf32>
    %192 = vector.broadcast %172 : vector<1x32xf32> to vector<16x32xf32>
    %193 = arith.mulf %191, %192 : vector<16x32xf32>
    %194 = vector.broadcast %173 : vector<1x32xf32> to vector<16x32xf32>
    %195 = arith.addf %193, %194 : vector<16x32xf32>
    %c32_74 = arith.constant 32 : index
    %c0_75 = arith.constant 0 : index
    %196 = vector.load %arg1[%c32_74, %c0_75] : memref<144x64xf32, #tpu.memory_space<vmem>>, vector<16x64xf32>
    %cst_76 = arith.constant dense<0.000000e+00> : vector<16x32xf32>
    %197 = tpu.matmul %196, %0, %cst_76 {dimension_numbers = #tpu.dot_dimension_numbers<[1], [0], [0], [1], [0, 0, 1, 1], [], []>} : vector<16x64xf32>, vector<64x32xf32>, vector<16x32xf32> -> vector<16x32xf32>
    %c48 = arith.constant 48 : index
    %c0_77 = arith.constant 0 : index
    %198 = vector.load %arg1[%c48, %c0_77] : memref<144x64xf32, #tpu.memory_space<vmem>>, vector<16x64xf32>
    %c64_78 = arith.constant 64 : index
    %c0_79 = arith.constant 0 : index
    %199 = vector.load %arg2[%c64_78, %c0_79] : memref<528x32xf32, #tpu.memory_space<vmem>>, vector<64x32xf32>
    %cst_80 = arith.constant dense<0.000000e+00> : vector<16x32xf32>
    %200 = tpu.matmul %198, %199, %cst_80 {dimension_numbers = #tpu.dot_dimension_numbers<[1], [0], [0], [1], [0, 0, 1, 1], [], []>} : vector<16x64xf32>, vector<64x32xf32>, vector<16x32xf32> -> vector<16x32xf32>
    %201 = arith.addf %197, %200 : vector<16x32xf32>
    %c296 = arith.constant 296 : index
    %c0_81 = arith.constant 0 : index
    %202 = vector.load %arg2[%c296, %c0_81] : memref<528x32xf32, #tpu.memory_space<vmem>>, vector<2x32xf32>
    %203 = vector.extract_strided_slice %202 {offsets = [0, 0], sizes = [1, 32], strides = [1, 1]} : vector<2x32xf32> to vector<1x32xf32>
    %204 = vector.extract_strided_slice %202 {offsets = [1, 0], sizes = [1, 32], strides = [1, 1]} : vector<2x32xf32> to vector<1x32xf32>
    %cst_82 = arith.constant dense<0.000000e+00> : vector<16xf32>
    %205 = vector.multi_reduction <add>, %201, %cst_82 [1] : vector<16x32xf32> to vector<16xf32>
    %206 = vector.shape_cast %205 : vector<16xf32> to vector<16x1xf32>
    %cst_83 = arith.constant 3.200000e+01 : f32
    %207 = vector.broadcast %cst_83 : f32 to vector<16x1xf32>
    %208 = arith.divf %206, %207 : vector<16x1xf32>
    %209 = vector.broadcast %208 : vector<16x1xf32> to vector<16x32xf32>
    %210 = arith.subf %201, %209 : vector<16x32xf32>
    %211 = arith.mulf %210, %210 : vector<16x32xf32>
    %cst_84 = arith.constant dense<0.000000e+00> : vector<16xf32>
    %212 = vector.multi_reduction <add>, %211, %cst_84 [1] : vector<16x32xf32> to vector<16xf32>
    %213 = vector.shape_cast %212 : vector<16xf32> to vector<16x1xf32>
    %cst_85 = arith.constant 3.200000e+01 : f32
    %214 = vector.broadcast %cst_85 : f32 to vector<16x1xf32>
    %215 = arith.divf %213, %214 : vector<16x1xf32>
    %216 = vector.broadcast %208 : vector<16x1xf32> to vector<16x32xf32>
    %217 = arith.subf %201, %216 : vector<16x32xf32>
    %cst_86 = arith.constant 9.99999996E-13 : f32
    %218 = vector.broadcast %cst_86 : f32 to vector<16x1xf32>
    %219 = arith.addf %215, %218 : vector<16x1xf32>
    %220 = math.rsqrt %219 : vector<16x1xf32>
    %221 = vector.broadcast %220 : vector<16x1xf32> to vector<16x32xf32>
    %222 = arith.mulf %217, %221 : vector<16x32xf32>
    %223 = vector.broadcast %203 : vector<1x32xf32> to vector<16x32xf32>
    %224 = arith.mulf %222, %223 : vector<16x32xf32>
    %225 = vector.broadcast %204 : vector<1x32xf32> to vector<16x32xf32>
    %226 = arith.addf %224, %225 : vector<16x32xf32>
    %c40 = arith.constant 40 : index
    %c0_87 = arith.constant 0 : index
    %227 = vector.load %arg4[%c40, %c0_87] : memref<160x96xf32, #tpu.memory_space<vmem>>, vector<32x96xf32>
    %c72 = arith.constant 72 : index
    %c0_88 = arith.constant 0 : index
    %228 = vector.load %arg4[%c72, %c0_88] : memref<160x96xf32, #tpu.memory_space<vmem>>, vector<1x96xf32>
    %cst_89 = arith.constant dense<0.000000e+00> : vector<16x96xf32>
    %229 = tpu.matmul %195, %227, %cst_89 {dimension_numbers = #tpu.dot_dimension_numbers<[1], [0], [0], [1], [0, 0, 1, 1], [], []>} : vector<16x32xf32>, vector<32x96xf32>, vector<16x96xf32> -> vector<16x96xf32>
    %230 = vector.broadcast %228 : vector<1x96xf32> to vector<16x96xf32>
    %231 = arith.addf %229, %230 : vector<16x96xf32>
    %cst_90 = arith.constant dense<0.000000e+00> : vector<16x96xf32>
    %232 = tpu.matmul %226, %227, %cst_90 {dimension_numbers = #tpu.dot_dimension_numbers<[1], [0], [0], [1], [0, 0, 1, 1], [], []>} : vector<16x32xf32>, vector<32x96xf32>, vector<16x96xf32> -> vector<16x96xf32>
    %233 = vector.broadcast %228 : vector<1x96xf32> to vector<16x96xf32>
    %234 = arith.addf %232, %233 : vector<16x96xf32>
    %235 = vector.extract_strided_slice %231 {offsets = [0, 0], sizes = [16, 32], strides = [1, 1]} : vector<16x96xf32> to vector<16x32xf32>
    %236 = vector.extract_strided_slice %234 {offsets = [0, 32], sizes = [16, 32], strides = [1, 1]} : vector<16x96xf32> to vector<16x32xf32>
    %237 = vector.extract_strided_slice %234 {offsets = [0, 64], sizes = [16, 32], strides = [1, 1]} : vector<16x96xf32> to vector<16x32xf32>
    %238 = vector.extract_strided_slice %235 {offsets = [0, 0], sizes = [16, 8], strides = [1, 1]} : vector<16x32xf32> to vector<16x8xf32>
    %239 = vector.extract_strided_slice %236 {offsets = [0, 0], sizes = [16, 8], strides = [1, 1]} : vector<16x32xf32> to vector<16x8xf32>
    %cst_91 = arith.constant dense<0.000000e+00> : vector<16x16xf32>
    %240 = tpu.matmul %238, %239, %cst_91 {dimension_numbers = #tpu.dot_dimension_numbers<[1], [1], [0], [0], [0, 0, 1, 0], [], []>} : vector<16x8xf32>, vector<16x8xf32>, vector<16x16xf32> -> vector<16x16xf32>
    %cst_92 = arith.constant 0.353553385 : f32
    %241 = vector.broadcast %cst_92 : f32 to vector<16x16xf32>
    %242 = arith.mulf %240, %241 : vector<16x16xf32>
    %243 = arith.addf %242, %4 : vector<16x16xf32>
    %cst_93 = arith.constant dense<0xFF800000> : vector<16xf32>
    %244 = vector.multi_reduction <maximumf>, %243, %cst_93 [1] : vector<16x16xf32> to vector<16xf32>
    %245 = vector.shape_cast %244 : vector<16xf32> to vector<16x1xf32>
    %246 = vector.broadcast %245 : vector<16x1xf32> to vector<16x16xf32>
    %247 = arith.subf %243, %246 : vector<16x16xf32>
    %248 = math.exp %247 : vector<16x16xf32>
    %cst_94 = arith.constant dense<0.000000e+00> : vector<16xf32>
    %249 = vector.multi_reduction <add>, %248, %cst_94 [1] : vector<16x16xf32> to vector<16xf32>
    %250 = vector.shape_cast %249 : vector<16xf32> to vector<16x1xf32>
    %251 = vector.broadcast %250 : vector<16x1xf32> to vector<16x16xf32>
    %252 = arith.divf %248, %251 : vector<16x16xf32>
    %253 = vector.extract_strided_slice %237 {offsets = [0, 0], sizes = [16, 8], strides = [1, 1]} : vector<16x32xf32> to vector<16x8xf32>
    %cst_95 = arith.constant dense<0.000000e+00> : vector<16x8xf32>
    %254 = tpu.matmul %252, %253, %cst_95 {dimension_numbers = #tpu.dot_dimension_numbers<[1], [0], [0], [1], [0, 0, 1, 1], [], []>} : vector<16x16xf32>, vector<16x8xf32>, vector<16x8xf32> -> vector<16x8xf32>
    %c0_96 = arith.constant 0 : index
    %c0_97 = arith.constant 0 : index
    %255 = vector.load %arg7[%c0_96, %c0_97] : memref<16x32xf32, #tpu.memory_space<vmem>>, vector<16x8xf32>
    tpu.vector_store %arg7[%c0_96, %c0_97], %254 {strides = array<i32>} : memref<16x32xf32, #tpu.memory_space<vmem>>, vector<16x8xf32>,
    %256 = vector.extract_strided_slice %235 {offsets = [0, 8], sizes = [16, 8], strides = [1, 1]} : vector<16x32xf32> to vector<16x8xf32>
    %257 = vector.extract_strided_slice %236 {offsets = [0, 8], sizes = [16, 8], strides = [1, 1]} : vector<16x32xf32> to vector<16x8xf32>
    %cst_98 = arith.constant dense<0.000000e+00> : vector<16x16xf32>
    %258 = tpu.matmul %256, %257, %cst_98 {dimension_numbers = #tpu.dot_dimension_numbers<[1], [1], [0], [0], [0, 0, 1, 0], [], []>} : vector<16x8xf32>, vector<16x8xf32>, vector<16x16xf32> -> vector<16x16xf32>
    %cst_99 = arith.constant 0.353553385 : f32
    %259 = vector.broadcast %cst_99 : f32 to vector<16x16xf32>
    %260 = arith.mulf %258, %259 : vector<16x16xf32>
    %261 = arith.addf %260, %4 : vector<16x16xf32>
    %cst_100 = arith.constant dense<0xFF800000> : vector<16xf32>
    %262 = vector.multi_reduction <maximumf>, %261, %cst_100 [1] : vector<16x16xf32> to vector<16xf32>
    %263 = vector.shape_cast %262 : vector<16xf32> to vector<16x1xf32>
    %264 = vector.broadcast %263 : vector<16x1xf32> to vector<16x16xf32>
    %265 = arith.subf %261, %264 : vector<16x16xf32>
    %266 = math.exp %265 : vector<16x16xf32>
    %cst_101 = arith.constant dense<0.000000e+00> : vector<16xf32>
    %267 = vector.multi_reduction <add>, %266, %cst_101 [1] : vector<16x16xf32> to vector<16xf32>
    %268 = vector.shape_cast %267 : vector<16xf32> to vector<16x1xf32>
    %269 = vector.broadcast %268 : vector<16x1xf32> to vector<16x16xf32>
    %270 = arith.divf %266, %269 : vector<16x16xf32>
    %271 = vector.extract_strided_slice %237 {offsets = [0, 8], sizes = [16, 8], strides = [1, 1]} : vector<16x32xf32> to vector<16x8xf32>
    %cst_102 = arith.constant dense<0.000000e+00> : vector<16x8xf32>
    %272 = tpu.matmul %270, %271, %cst_102 {dimension_numbers = #tpu.dot_dimension_numbers<[1], [0], [0], [1], [0, 0, 1, 1], [], []>} : vector<16x16xf32>, vector<16x8xf32>, vector<16x8xf32> -> vector<16x8xf32>
    %c0_103 = arith.constant 0 : index
    %c8_104 = arith.constant 8 : index
    %273 = vector.load %arg7[%c0_103, %c8_104] : memref<16x32xf32, #tpu.memory_space<vmem>>, vector<16x8xf32>
    tpu.vector_store %arg7[%c0_103, %c8_104], %272 {strides = array<i32>} : memref<16x32xf32, #tpu.memory_space<vmem>>, vector<16x8xf32>,
    %274 = vector.extract_strided_slice %235 {offsets = [0, 16], sizes = [16, 8], strides = [1, 1]} : vector<16x32xf32> to vector<16x8xf32>
    %275 = vector.extract_strided_slice %236 {offsets = [0, 16], sizes = [16, 8], strides = [1, 1]} : vector<16x32xf32> to vector<16x8xf32>
    %cst_105 = arith.constant dense<0.000000e+00> : vector<16x16xf32>
    %276 = tpu.matmul %274, %275, %cst_105 {dimension_numbers = #tpu.dot_dimension_numbers<[1], [1], [0], [0], [0, 0, 1, 0], [], []>} : vector<16x8xf32>, vector<16x8xf32>, vector<16x16xf32> -> vector<16x16xf32>
    %cst_106 = arith.constant 0.353553385 : f32
    %277 = vector.broadcast %cst_106 : f32 to vector<16x16xf32>
    %278 = arith.mulf %276, %277 : vector<16x16xf32>
    %279 = arith.addf %278, %4 : vector<16x16xf32>
    %cst_107 = arith.constant dense<0xFF800000> : vector<16xf32>
    %280 = vector.multi_reduction <maximumf>, %279, %cst_107 [1] : vector<16x16xf32> to vector<16xf32>
    %281 = vector.shape_cast %280 : vector<16xf32> to vector<16x1xf32>
    %282 = vector.broadcast %281 : vector<16x1xf32> to vector<16x16xf32>
    %283 = arith.subf %279, %282 : vector<16x16xf32>
    %284 = math.exp %283 : vector<16x16xf32>
    %cst_108 = arith.constant dense<0.000000e+00> : vector<16xf32>
    %285 = vector.multi_reduction <add>, %284, %cst_108 [1] : vector<16x16xf32> to vector<16xf32>
    %286 = vector.shape_cast %285 : vector<16xf32> to vector<16x1xf32>
    %287 = vector.broadcast %286 : vector<16x1xf32> to vector<16x16xf32>
    %288 = arith.divf %284, %287 : vector<16x16xf32>
    %289 = vector.extract_strided_slice %237 {offsets = [0, 16], sizes = [16, 8], strides = [1, 1]} : vector<16x32xf32> to vector<16x8xf32>
    %cst_109 = arith.constant dense<0.000000e+00> : vector<16x8xf32>
    %290 = tpu.matmul %288, %289, %cst_109 {dimension_numbers = #tpu.dot_dimension_numbers<[1], [0], [0], [1], [0, 0, 1, 1], [], []>} : vector<16x16xf32>, vector<16x8xf32>, vector<16x8xf32> -> vector<16x8xf32>
    %c0_110 = arith.constant 0 : index
    %c16_111 = arith.constant 16 : index
    %291 = vector.load %arg7[%c0_110, %c16_111] : memref<16x32xf32, #tpu.memory_space<vmem>>, vector<16x8xf32>
    tpu.vector_store %arg7[%c0_110, %c16_111], %290 {strides = array<i32>} : memref<16x32xf32, #tpu.memory_space<vmem>>, vector<16x8xf32>,
    %292 = vector.extract_strided_slice %235 {offsets = [0, 24], sizes = [16, 8], strides = [1, 1]} : vector<16x32xf32> to vector<16x8xf32>
    %293 = vector.extract_strided_slice %236 {offsets = [0, 24], sizes = [16, 8], strides = [1, 1]} : vector<16x32xf32> to vector<16x8xf32>
    %cst_112 = arith.constant dense<0.000000e+00> : vector<16x16xf32>
    %294 = tpu.matmul %292, %293, %cst_112 {dimension_numbers = #tpu.dot_dimension_numbers<[1], [1], [0], [0], [0, 0, 1, 0], [], []>} : vector<16x8xf32>, vector<16x8xf32>, vector<16x16xf32> -> vector<16x16xf32>
    %cst_113 = arith.constant 0.353553385 : f32
    %295 = vector.broadcast %cst_113 : f32 to vector<16x16xf32>
    %296 = arith.mulf %294, %295 : vector<16x16xf32>
    %297 = arith.addf %296, %4 : vector<16x16xf32>
    %cst_114 = arith.constant dense<0xFF800000> : vector<16xf32>
    %298 = vector.multi_reduction <maximumf>, %297, %cst_114 [1] : vector<16x16xf32> to vector<16xf32>
    %299 = vector.shape_cast %298 : vector<16xf32> to vector<16x1xf32>
    %300 = vector.broadcast %299 : vector<16x1xf32> to vector<16x16xf32>
    %301 = arith.subf %297, %300 : vector<16x16xf32>
    %302 = math.exp %301 : vector<16x16xf32>
    %cst_115 = arith.constant dense<0.000000e+00> : vector<16xf32>
    %303 = vector.multi_reduction <add>, %302, %cst_115 [1] : vector<16x16xf32> to vector<16xf32>
    %304 = vector.shape_cast %303 : vector<16xf32> to vector<16x1xf32>
    %305 = vector.broadcast %304 : vector<16x1xf32> to vector<16x16xf32>
    %306 = arith.divf %302, %305 : vector<16x16xf32>
    %307 = vector.extract_strided_slice %237 {offsets = [0, 24], sizes = [16, 8], strides = [1, 1]} : vector<16x32xf32> to vector<16x8xf32>
    %cst_116 = arith.constant dense<0.000000e+00> : vector<16x8xf32>
    %308 = tpu.matmul %306, %307, %cst_116 {dimension_numbers = #tpu.dot_dimension_numbers<[1], [0], [0], [1], [0, 0, 1, 1], [], []>} : vector<16x16xf32>, vector<16x8xf32>, vector<16x8xf32> -> vector<16x8xf32>
    %c0_117 = arith.constant 0 : index
    %c24_118 = arith.constant 24 : index
    %309 = vector.load %arg7[%c0_117, %c24_118] : memref<16x32xf32, #tpu.memory_space<vmem>>, vector<16x8xf32>
    tpu.vector_store %arg7[%c0_117, %c24_118], %308 {strides = array<i32>} : memref<16x32xf32, #tpu.memory_space<vmem>>, vector<16x8xf32>,
    %c0_119 = arith.constant 0 : index
    %c0_120 = arith.constant 0 : index
    %310 = vector.load %arg7[%c0_119, %c0_120] : memref<16x32xf32, #tpu.memory_space<vmem>>, vector<16x32xf32>
    %c304 = arith.constant 304 : index
    %c0_121 = arith.constant 0 : index
    %311 = vector.load %arg2[%c304, %c0_121] : memref<528x32xf32, #tpu.memory_space<vmem>>, vector<32x32xf32>
    %cst_122 = arith.constant dense<0.000000e+00> : vector<16x32xf32>
    %312 = tpu.matmul %310, %311, %cst_122 {dimension_numbers = #tpu.dot_dimension_numbers<[1], [0], [0], [1], [0, 0, 1, 1], [], []>} : vector<16x32xf32>, vector<32x32xf32>, vector<16x32xf32> -> vector<16x32xf32>
    %c336 = arith.constant 336 : index
    %c0_123 = arith.constant 0 : index
    %313 = vector.load %arg2[%c336, %c0_123] : memref<528x32xf32, #tpu.memory_space<vmem>>, vector<1x32xf32>
    %314 = vector.broadcast %313 : vector<1x32xf32> to vector<16x32xf32>
    %315 = arith.addf %312, %314 : vector<16x32xf32>
    %316 = arith.mulf %315, %5 : vector<16x32xf32>
    %c16_124 = arith.constant 16 : index
    %c0_125 = arith.constant 0 : index
    %317 = vector.load %arg1[%c16_124, %c0_125] : memref<144x64xf32, #tpu.memory_space<vmem>>, vector<16x64xf32>
    %cst_126 = arith.constant dense<0.000000e+00> : vector<16x32xf32>
    %318 = tpu.matmul %317, %0, %cst_126 {dimension_numbers = #tpu.dot_dimension_numbers<[1], [0], [0], [1], [0, 0, 1, 1], [], []>} : vector<16x64xf32>, vector<64x32xf32>, vector<16x32xf32> -> vector<16x32xf32>
    %c144 = arith.constant 144 : index
    %c0_127 = arith.constant 0 : index
    %319 = vector.load %arg2[%c144, %c0_127] : memref<528x32xf32, #tpu.memory_space<vmem>>, vector<16x32xf32>
    %320 = arith.addf %318, %319 : vector<16x32xf32>
    %c160_128 = arith.constant 160 : index
    %c0_129 = arith.constant 0 : index
    %321 = vector.load %arg2[%c160_128, %c0_129] : memref<528x32xf32, #tpu.memory_space<vmem>>, vector<2x32xf32>
    %322 = vector.extract_strided_slice %321 {offsets = [0, 0], sizes = [1, 32], strides = [1, 1]} : vector<2x32xf32> to vector<1x32xf32>
    %323 = vector.extract_strided_slice %321 {offsets = [1, 0], sizes = [1, 32], strides = [1, 1]} : vector<2x32xf32> to vector<1x32xf32>
    %cst_130 = arith.constant dense<0.000000e+00> : vector<16xf32>
    %324 = vector.multi_reduction <add>, %320, %cst_130 [1] : vector<16x32xf32> to vector<16xf32>
    %325 = vector.shape_cast %324 : vector<16xf32> to vector<16x1xf32>
    %cst_131 = arith.constant 3.200000e+01 : f32
    %326 = vector.broadcast %cst_131 : f32 to vector<16x1xf32>
    %327 = arith.divf %325, %326 : vector<16x1xf32>
    %328 = vector.broadcast %327 : vector<16x1xf32> to vector<16x32xf32>
    %329 = arith.subf %320, %328 : vector<16x32xf32>
    %330 = arith.mulf %329, %329 : vector<16x32xf32>
    %cst_132 = arith.constant dense<0.000000e+00> : vector<16xf32>
    %331 = vector.multi_reduction <add>, %330, %cst_132 [1] : vector<16x32xf32> to vector<16xf32>
    %332 = vector.shape_cast %331 : vector<16xf32> to vector<16x1xf32>
    %cst_133 = arith.constant 3.200000e+01 : f32
    %333 = vector.broadcast %cst_133 : f32 to vector<16x1xf32>
    %334 = arith.divf %332, %333 : vector<16x1xf32>
    %335 = vector.broadcast %327 : vector<16x1xf32> to vector<16x32xf32>
    %336 = arith.subf %320, %335 : vector<16x32xf32>
    %cst_134 = arith.constant 9.99999996E-13 : f32
    %337 = vector.broadcast %cst_134 : f32 to vector<16x1xf32>
    %338 = arith.addf %334, %337 : vector<16x1xf32>
    %339 = math.rsqrt %338 : vector<16x1xf32>
    %340 = vector.broadcast %339 : vector<16x1xf32> to vector<16x32xf32>
    %341 = arith.mulf %336, %340 : vector<16x32xf32>
    %342 = vector.broadcast %322 : vector<1x32xf32> to vector<16x32xf32>
    %343 = arith.mulf %341, %342 : vector<16x32xf32>
    %344 = vector.broadcast %323 : vector<1x32xf32> to vector<16x32xf32>
    %345 = arith.addf %343, %344 : vector<16x32xf32>
    %c496 = arith.constant 496 : index
    %c0_135 = arith.constant 0 : index
    %346 = vector.load %arg2[%c496, %c0_135] : memref<528x32xf32, #tpu.memory_space<vmem>>, vector<2x32xf32>
    %347 = vector.extract_strided_slice %346 {offsets = [0, 0], sizes = [1, 32], strides = [1, 1]} : vector<2x32xf32> to vector<1x32xf32>
    %348 = vector.extract_strided_slice %346 {offsets = [1, 0], sizes = [1, 32], strides = [1, 1]} : vector<2x32xf32> to vector<1x32xf32>
    %cst_136 = arith.constant dense<0.000000e+00> : vector<16xf32>
    %349 = vector.multi_reduction <add>, %345, %cst_136 [1] : vector<16x32xf32> to vector<16xf32>
    %350 = vector.shape_cast %349 : vector<16xf32> to vector<16x1xf32>
    %cst_137 = arith.constant 3.200000e+01 : f32
    %351 = vector.broadcast %cst_137 : f32 to vector<16x1xf32>
    %352 = arith.divf %350, %351 : vector<16x1xf32>
    %353 = vector.broadcast %352 : vector<16x1xf32> to vector<16x32xf32>
    %354 = arith.subf %345, %353 : vector<16x32xf32>
    %355 = arith.mulf %354, %354 : vector<16x32xf32>
    %cst_138 = arith.constant dense<0.000000e+00> : vector<16xf32>
    %356 = vector.multi_reduction <add>, %355, %cst_138 [1] : vector<16x32xf32> to vector<16xf32>
    %357 = vector.shape_cast %356 : vector<16xf32> to vector<16x1xf32>
    %cst_139 = arith.constant 3.200000e+01 : f32
    %358 = vector.broadcast %cst_139 : f32 to vector<16x1xf32>
    %359 = arith.divf %357, %358 : vector<16x1xf32>
    %360 = vector.broadcast %352 : vector<16x1xf32> to vector<16x32xf32>
    %361 = arith.subf %345, %360 : vector<16x32xf32>
    %cst_140 = arith.constant 9.99999996E-13 : f32
    %362 = vector.broadcast %cst_140 : f32 to vector<16x1xf32>
    %363 = arith.addf %359, %362 : vector<16x1xf32>
    %364 = math.rsqrt %363 : vector<16x1xf32>
    %365 = vector.broadcast %364 : vector<16x1xf32> to vector<16x32xf32>
    %366 = arith.mulf %361, %365 : vector<16x32xf32>
    %367 = vector.broadcast %347 : vector<1x32xf32> to vector<16x32xf32>
    %368 = arith.mulf %366, %367 : vector<16x32xf32>
    %369 = vector.broadcast %348 : vector<1x32xf32> to vector<16x32xf32>
    %370 = arith.addf %368, %369 : vector<16x32xf32>
    %c80_141 = arith.constant 80 : index
    %c0_142 = arith.constant 0 : index
    %371 = vector.load %arg4[%c80_141, %c0_142] : memref<160x96xf32, #tpu.memory_space<vmem>>, vector<32x96xf32>
    %c112_143 = arith.constant 112 : index
    %c0_144 = arith.constant 0 : index
    %372 = vector.load %arg4[%c112_143, %c0_144] : memref<160x96xf32, #tpu.memory_space<vmem>>, vector<1x96xf32>
    %cst_145 = arith.constant dense<0.000000e+00> : vector<16x96xf32>
    %373 = tpu.matmul %370, %371, %cst_145 {dimension_numbers = #tpu.dot_dimension_numbers<[1], [0], [0], [1], [0, 0, 1, 1], [], []>} : vector<16x32xf32>, vector<32x96xf32>, vector<16x96xf32> -> vector<16x96xf32>
    %374 = vector.broadcast %372 : vector<1x96xf32> to vector<16x96xf32>
    %375 = arith.addf %373, %374 : vector<16x96xf32>
    %376 = vector.extract_strided_slice %375 {offsets = [0, 0], sizes = [16, 32], strides = [1, 1]} : vector<16x96xf32> to vector<16x32xf32>
    %377 = vector.extract_strided_slice %375 {offsets = [0, 32], sizes = [16, 32], strides = [1, 1]} : vector<16x96xf32> to vector<16x32xf32>
    %378 = vector.extract_strided_slice %375 {offsets = [0, 64], sizes = [16, 32], strides = [1, 1]} : vector<16x96xf32> to vector<16x32xf32>
    %379 = vector.extract_strided_slice %376 {offsets = [0, 0], sizes = [16, 8], strides = [1, 1]} : vector<16x32xf32> to vector<16x8xf32>
    %380 = vector.extract_strided_slice %377 {offsets = [0, 0], sizes = [16, 8], strides = [1, 1]} : vector<16x32xf32> to vector<16x8xf32>
    %cst_146 = arith.constant dense<0.000000e+00> : vector<16x16xf32>
    %381 = tpu.matmul %379, %380, %cst_146 {dimension_numbers = #tpu.dot_dimension_numbers<[1], [1], [0], [0], [0, 0, 1, 0], [], []>} : vector<16x8xf32>, vector<16x8xf32>, vector<16x16xf32> -> vector<16x16xf32>
    %cst_147 = arith.constant 0.353553385 : f32
    %382 = vector.broadcast %cst_147 : f32 to vector<16x16xf32>
    %383 = arith.mulf %381, %382 : vector<16x16xf32>
    %384 = arith.addf %383, %2 : vector<16x16xf32>
    %cst_148 = arith.constant dense<0xFF800000> : vector<16xf32>
    %385 = vector.multi_reduction <maximumf>, %384, %cst_148 [1] : vector<16x16xf32> to vector<16xf32>
    %386 = vector.shape_cast %385 : vector<16xf32> to vector<16x1xf32>
    %387 = vector.broadcast %386 : vector<16x1xf32> to vector<16x16xf32>
    %388 = arith.subf %384, %387 : vector<16x16xf32>
    %389 = math.exp %388 : vector<16x16xf32>
    %cst_149 = arith.constant dense<0.000000e+00> : vector<16xf32>
    %390 = vector.multi_reduction <add>, %389, %cst_149 [1] : vector<16x16xf32> to vector<16xf32>
    %391 = vector.shape_cast %390 : vector<16xf32> to vector<16x1xf32>
    %392 = vector.broadcast %391 : vector<16x1xf32> to vector<16x16xf32>
    %393 = arith.divf %389, %392 : vector<16x16xf32>
    %394 = vector.extract_strided_slice %378 {offsets = [0, 0], sizes = [16, 8], strides = [1, 1]} : vector<16x32xf32> to vector<16x8xf32>
    %cst_150 = arith.constant dense<0.000000e+00> : vector<16x8xf32>
    %395 = tpu.matmul %393, %394, %cst_150 {dimension_numbers = #tpu.dot_dimension_numbers<[1], [0], [0], [1], [0, 0, 1, 1], [], []>} : vector<16x16xf32>, vector<16x8xf32>, vector<16x8xf32> -> vector<16x8xf32>
    %c0_151 = arith.constant 0 : index
    %c0_152 = arith.constant 0 : index
    %396 = vector.load %arg7[%c0_151, %c0_152] : memref<16x32xf32, #tpu.memory_space<vmem>>, vector<16x8xf32>
    tpu.vector_store %arg7[%c0_151, %c0_152], %395 {strides = array<i32>} : memref<16x32xf32, #tpu.memory_space<vmem>>, vector<16x8xf32>,
    %397 = vector.extract_strided_slice %376 {offsets = [0, 8], sizes = [16, 8], strides = [1, 1]} : vector<16x32xf32> to vector<16x8xf32>
    %398 = vector.extract_strided_slice %377 {offsets = [0, 8], sizes = [16, 8], strides = [1, 1]} : vector<16x32xf32> to vector<16x8xf32>
    %cst_153 = arith.constant dense<0.000000e+00> : vector<16x16xf32>
    %399 = tpu.matmul %397, %398, %cst_153 {dimension_numbers = #tpu.dot_dimension_numbers<[1], [1], [0], [0], [0, 0, 1, 0], [], []>} : vector<16x8xf32>, vector<16x8xf32>, vector<16x16xf32> -> vector<16x16xf32>
    %cst_154 = arith.constant 0.353553385 : f32
    %400 = vector.broadcast %cst_154 : f32 to vector<16x16xf32>
    %401 = arith.mulf %399, %400 : vector<16x16xf32>
    %402 = arith.addf %401, %2 : vector<16x16xf32>
    %cst_155 = arith.constant dense<0xFF800000> : vector<16xf32>
    %403 = vector.multi_reduction <maximumf>, %402, %cst_155 [1] : vector<16x16xf32> to vector<16xf32>
    %404 = vector.shape_cast %403 : vector<16xf32> to vector<16x1xf32>
    %405 = vector.broadcast %404 : vector<16x1xf32> to vector<16x16xf32>
    %406 = arith.subf %402, %405 : vector<16x16xf32>
    %407 = math.exp %406 : vector<16x16xf32>
    %cst_156 = arith.constant dense<0.000000e+00> : vector<16xf32>
    %408 = vector.multi_reduction <add>, %407, %cst_156 [1] : vector<16x16xf32> to vector<16xf32>
    %409 = vector.shape_cast %408 : vector<16xf32> to vector<16x1xf32>
    %410 = vector.broadcast %409 : vector<16x1xf32> to vector<16x16xf32>
    %411 = arith.divf %407, %410 : vector<16x16xf32>
    %412 = vector.extract_strided_slice %378 {offsets = [0, 8], sizes = [16, 8], strides = [1, 1]} : vector<16x32xf32> to vector<16x8xf32>
    %cst_157 = arith.constant dense<0.000000e+00> : vector<16x8xf32>
    %413 = tpu.matmul %411, %412, %cst_157 {dimension_numbers = #tpu.dot_dimension_numbers<[1], [0], [0], [1], [0, 0, 1, 1], [], []>} : vector<16x16xf32>, vector<16x8xf32>, vector<16x8xf32> -> vector<16x8xf32>
    %c0_158 = arith.constant 0 : index
    %c8_159 = arith.constant 8 : index
    %414 = vector.load %arg7[%c0_158, %c8_159] : memref<16x32xf32, #tpu.memory_space<vmem>>, vector<16x8xf32>
    tpu.vector_store %arg7[%c0_158, %c8_159], %413 {strides = array<i32>} : memref<16x32xf32, #tpu.memory_space<vmem>>, vector<16x8xf32>,
    %415 = vector.extract_strided_slice %376 {offsets = [0, 16], sizes = [16, 8], strides = [1, 1]} : vector<16x32xf32> to vector<16x8xf32>
    %416 = vector.extract_strided_slice %377 {offsets = [0, 16], sizes = [16, 8], strides = [1, 1]} : vector<16x32xf32> to vector<16x8xf32>
    %cst_160 = arith.constant dense<0.000000e+00> : vector<16x16xf32>
    %417 = tpu.matmul %415, %416, %cst_160 {dimension_numbers = #tpu.dot_dimension_numbers<[1], [1], [0], [0], [0, 0, 1, 0], [], []>} : vector<16x8xf32>, vector<16x8xf32>, vector<16x16xf32> -> vector<16x16xf32>
    %cst_161 = arith.constant 0.353553385 : f32
    %418 = vector.broadcast %cst_161 : f32 to vector<16x16xf32>
    %419 = arith.mulf %417, %418 : vector<16x16xf32>
    %420 = arith.addf %419, %2 : vector<16x16xf32>
    %cst_162 = arith.constant dense<0xFF800000> : vector<16xf32>
    %421 = vector.multi_reduction <maximumf>, %420, %cst_162 [1] : vector<16x16xf32> to vector<16xf32>
    %422 = vector.shape_cast %421 : vector<16xf32> to vector<16x1xf32>
    %423 = vector.broadcast %422 : vector<16x1xf32> to vector<16x16xf32>
    %424 = arith.subf %420, %423 : vector<16x16xf32>
    %425 = math.exp %424 : vector<16x16xf32>
    %cst_163 = arith.constant dense<0.000000e+00> : vector<16xf32>
    %426 = vector.multi_reduction <add>, %425, %cst_163 [1] : vector<16x16xf32> to vector<16xf32>
    %427 = vector.shape_cast %426 : vector<16xf32> to vector<16x1xf32>
    %428 = vector.broadcast %427 : vector<16x1xf32> to vector<16x16xf32>
    %429 = arith.divf %425, %428 : vector<16x16xf32>
    %430 = vector.extract_strided_slice %378 {offsets = [0, 16], sizes = [16, 8], strides = [1, 1]} : vector<16x32xf32> to vector<16x8xf32>
    %cst_164 = arith.constant dense<0.000000e+00> : vector<16x8xf32>
    %431 = tpu.matmul %429, %430, %cst_164 {dimension_numbers = #tpu.dot_dimension_numbers<[1], [0], [0], [1], [0, 0, 1, 1], [], []>} : vector<16x16xf32>, vector<16x8xf32>, vector<16x8xf32> -> vector<16x8xf32>
    %c0_165 = arith.constant 0 : index
    %c16_166 = arith.constant 16 : index
    %432 = vector.load %arg7[%c0_165, %c16_166] : memref<16x32xf32, #tpu.memory_space<vmem>>, vector<16x8xf32>
    tpu.vector_store %arg7[%c0_165, %c16_166], %431 {strides = array<i32>} : memref<16x32xf32, #tpu.memory_space<vmem>>, vector<16x8xf32>,
    %433 = vector.extract_strided_slice %376 {offsets = [0, 24], sizes = [16, 8], strides = [1, 1]} : vector<16x32xf32> to vector<16x8xf32>
    %434 = vector.extract_strided_slice %377 {offsets = [0, 24], sizes = [16, 8], strides = [1, 1]} : vector<16x32xf32> to vector<16x8xf32>
    %cst_167 = arith.constant dense<0.000000e+00> : vector<16x16xf32>
    %435 = tpu.matmul %433, %434, %cst_167 {dimension_numbers = #tpu.dot_dimension_numbers<[1], [1], [0], [0], [0, 0, 1, 0], [], []>} : vector<16x8xf32>, vector<16x8xf32>, vector<16x16xf32> -> vector<16x16xf32>
    %cst_168 = arith.constant 0.353553385 : f32
    %436 = vector.broadcast %cst_168 : f32 to vector<16x16xf32>
    %437 = arith.mulf %435, %436 : vector<16x16xf32>
    %438 = arith.addf %437, %2 : vector<16x16xf32>
    %cst_169 = arith.constant dense<0xFF800000> : vector<16xf32>
    %439 = vector.multi_reduction <maximumf>, %438, %cst_169 [1] : vector<16x16xf32> to vector<16xf32>
    %440 = vector.shape_cast %439 : vector<16xf32> to vector<16x1xf32>
    %441 = vector.broadcast %440 : vector<16x1xf32> to vector<16x16xf32>
    %442 = arith.subf %438, %441 : vector<16x16xf32>
    %443 = math.exp %442 : vector<16x16xf32>
    %cst_170 = arith.constant dense<0.000000e+00> : vector<16xf32>
    %444 = vector.multi_reduction <add>, %443, %cst_170 [1] : vector<16x16xf32> to vector<16xf32>
    %445 = vector.shape_cast %444 : vector<16xf32> to vector<16x1xf32>
    %446 = vector.broadcast %445 : vector<16x1xf32> to vector<16x16xf32>
    %447 = arith.divf %443, %446 : vector<16x16xf32>
    %448 = vector.extract_strided_slice %378 {offsets = [0, 24], sizes = [16, 8], strides = [1, 1]} : vector<16x32xf32> to vector<16x8xf32>
    %cst_171 = arith.constant dense<0.000000e+00> : vector<16x8xf32>
    %449 = tpu.matmul %447, %448, %cst_171 {dimension_numbers = #tpu.dot_dimension_numbers<[1], [0], [0], [1], [0, 0, 1, 1], [], []>} : vector<16x16xf32>, vector<16x8xf32>, vector<16x8xf32> -> vector<16x8xf32>
    %c0_172 = arith.constant 0 : index
    %c24_173 = arith.constant 24 : index
    %450 = vector.load %arg7[%c0_172, %c24_173] : memref<16x32xf32, #tpu.memory_space<vmem>>, vector<16x8xf32>
    tpu.vector_store %arg7[%c0_172, %c24_173], %449 {strides = array<i32>} : memref<16x32xf32, #tpu.memory_space<vmem>>, vector<16x8xf32>,
    %c0_174 = arith.constant 0 : index
    %c0_175 = arith.constant 0 : index
    %451 = vector.load %arg7[%c0_174, %c0_175] : memref<16x32xf32, #tpu.memory_space<vmem>>, vector<16x32xf32>
    %c344 = arith.constant 344 : index
    %c0_176 = arith.constant 0 : index
    %452 = vector.load %arg2[%c344, %c0_176] : memref<528x32xf32, #tpu.memory_space<vmem>>, vector<32x32xf32>
    %cst_177 = arith.constant dense<0.000000e+00> : vector<16x32xf32>
    %453 = tpu.matmul %451, %452, %cst_177 {dimension_numbers = #tpu.dot_dimension_numbers<[1], [0], [0], [1], [0, 0, 1, 1], [], []>} : vector<16x32xf32>, vector<32x32xf32>, vector<16x32xf32> -> vector<16x32xf32>
    %c376 = arith.constant 376 : index
    %c0_178 = arith.constant 0 : index
    %454 = vector.load %arg2[%c376, %c0_178] : memref<528x32xf32, #tpu.memory_space<vmem>>, vector<1x32xf32>
    %455 = vector.broadcast %454 : vector<1x32xf32> to vector<16x32xf32>
    %456 = arith.addf %453, %455 : vector<16x32xf32>
    %457 = arith.addf %345, %456 : vector<16x32xf32>
    %c504 = arith.constant 504 : index
    %c0_179 = arith.constant 0 : index
    %458 = vector.load %arg2[%c504, %c0_179] : memref<528x32xf32, #tpu.memory_space<vmem>>, vector<2x32xf32>
    %459 = vector.extract_strided_slice %458 {offsets = [0, 0], sizes = [1, 32], strides = [1, 1]} : vector<2x32xf32> to vector<1x32xf32>
    %460 = vector.extract_strided_slice %458 {offsets = [1, 0], sizes = [1, 32], strides = [1, 1]} : vector<2x32xf32> to vector<1x32xf32>
    %cst_180 = arith.constant dense<0.000000e+00> : vector<16xf32>
    %461 = vector.multi_reduction <add>, %457, %cst_180 [1] : vector<16x32xf32> to vector<16xf32>
    %462 = vector.shape_cast %461 : vector<16xf32> to vector<16x1xf32>
    %cst_181 = arith.constant 3.200000e+01 : f32
    %463 = vector.broadcast %cst_181 : f32 to vector<16x1xf32>
    %464 = arith.divf %462, %463 : vector<16x1xf32>
    %465 = vector.broadcast %464 : vector<16x1xf32> to vector<16x32xf32>
    %466 = arith.subf %457, %465 : vector<16x32xf32>
    %467 = arith.mulf %466, %466 : vector<16x32xf32>
    %cst_182 = arith.constant dense<0.000000e+00> : vector<16xf32>
    %468 = vector.multi_reduction <add>, %467, %cst_182 [1] : vector<16x32xf32> to vector<16xf32>
    %469 = vector.shape_cast %468 : vector<16xf32> to vector<16x1xf32>
    %cst_183 = arith.constant 3.200000e+01 : f32
    %470 = vector.broadcast %cst_183 : f32 to vector<16x1xf32>
    %471 = arith.divf %469, %470 : vector<16x1xf32>
    %472 = vector.broadcast %464 : vector<16x1xf32> to vector<16x32xf32>
    %473 = arith.subf %457, %472 : vector<16x32xf32>
    %cst_184 = arith.constant 9.99999996E-13 : f32
    %474 = vector.broadcast %cst_184 : f32 to vector<16x1xf32>
    %475 = arith.addf %471, %474 : vector<16x1xf32>
    %476 = math.rsqrt %475 : vector<16x1xf32>
    %477 = vector.broadcast %476 : vector<16x1xf32> to vector<16x32xf32>
    %478 = arith.mulf %473, %477 : vector<16x32xf32>
    %479 = vector.broadcast %459 : vector<1x32xf32> to vector<16x32xf32>
    %480 = arith.mulf %478, %479 : vector<16x32xf32>
    %481 = vector.broadcast %460 : vector<1x32xf32> to vector<16x32xf32>
    %482 = arith.addf %480, %481 : vector<16x32xf32>
    %c120 = arith.constant 120 : index
    %c0_185 = arith.constant 0 : index
    %483 = vector.load %arg4[%c120, %c0_185] : memref<160x96xf32, #tpu.memory_space<vmem>>, vector<32x96xf32>
    %c152 = arith.constant 152 : index
    %c0_186 = arith.constant 0 : index
    %484 = vector.load %arg4[%c152, %c0_186] : memref<160x96xf32, #tpu.memory_space<vmem>>, vector<1x96xf32>
    %cst_187 = arith.constant dense<0.000000e+00> : vector<16x96xf32>
    %485 = tpu.matmul %482, %483, %cst_187 {dimension_numbers = #tpu.dot_dimension_numbers<[1], [0], [0], [1], [0, 0, 1, 1], [], []>} : vector<16x32xf32>, vector<32x96xf32>, vector<16x96xf32> -> vector<16x96xf32>
    %486 = vector.broadcast %484 : vector<1x96xf32> to vector<16x96xf32>
    %487 = arith.addf %485, %486 : vector<16x96xf32>
    %cst_188 = arith.constant dense<0.000000e+00> : vector<16x96xf32>
    %488 = tpu.matmul %195, %483, %cst_188 {dimension_numbers = #tpu.dot_dimension_numbers<[1], [0], [0], [1], [0, 0, 1, 1], [], []>} : vector<16x32xf32>, vector<32x96xf32>, vector<16x96xf32> -> vector<16x96xf32>
    %489 = vector.broadcast %484 : vector<1x96xf32> to vector<16x96xf32>
    %490 = arith.addf %488, %489 : vector<16x96xf32>
    %491 = vector.extract_strided_slice %487 {offsets = [0, 0], sizes = [16, 32], strides = [1, 1]} : vector<16x96xf32> to vector<16x32xf32>
    %492 = vector.extract_strided_slice %490 {offsets = [0, 32], sizes = [16, 32], strides = [1, 1]} : vector<16x96xf32> to vector<16x32xf32>
    %493 = vector.extract_strided_slice %490 {offsets = [0, 64], sizes = [16, 32], strides = [1, 1]} : vector<16x96xf32> to vector<16x32xf32>
    %494 = vector.extract_strided_slice %491 {offsets = [0, 0], sizes = [16, 8], strides = [1, 1]} : vector<16x32xf32> to vector<16x8xf32>
    %495 = vector.extract_strided_slice %492 {offsets = [0, 0], sizes = [16, 8], strides = [1, 1]} : vector<16x32xf32> to vector<16x8xf32>
    %cst_189 = arith.constant dense<0.000000e+00> : vector<16x16xf32>
    %496 = tpu.matmul %494, %495, %cst_189 {dimension_numbers = #tpu.dot_dimension_numbers<[1], [1], [0], [0], [0, 0, 1, 0], [], []>} : vector<16x8xf32>, vector<16x8xf32>, vector<16x16xf32> -> vector<16x16xf32>
    %cst_190 = arith.constant 0.353553385 : f32
    %497 = vector.broadcast %cst_190 : f32 to vector<16x16xf32>
    %498 = arith.mulf %496, %497 : vector<16x16xf32>
    %499 = arith.addf %498, %3 : vector<16x16xf32>
    %cst_191 = arith.constant dense<0xFF800000> : vector<16xf32>
    %500 = vector.multi_reduction <maximumf>, %499, %cst_191 [1] : vector<16x16xf32> to vector<16xf32>
    %501 = vector.shape_cast %500 : vector<16xf32> to vector<16x1xf32>
    %502 = vector.broadcast %501 : vector<16x1xf32> to vector<16x16xf32>
    %503 = arith.subf %499, %502 : vector<16x16xf32>
    %504 = math.exp %503 : vector<16x16xf32>
    %cst_192 = arith.constant dense<0.000000e+00> : vector<16xf32>
    %505 = vector.multi_reduction <add>, %504, %cst_192 [1] : vector<16x16xf32> to vector<16xf32>
    %506 = vector.shape_cast %505 : vector<16xf32> to vector<16x1xf32>
    %507 = vector.broadcast %506 : vector<16x1xf32> to vector<16x16xf32>
    %508 = arith.divf %504, %507 : vector<16x16xf32>
    %509 = vector.extract_strided_slice %493 {offsets = [0, 0], sizes = [16, 8], strides = [1, 1]} : vector<16x32xf32> to vector<16x8xf32>
    %cst_193 = arith.constant dense<0.000000e+00> : vector<16x8xf32>
    %510 = tpu.matmul %508, %509, %cst_193 {dimension_numbers = #tpu.dot_dimension_numbers<[1], [0], [0], [1], [0, 0, 1, 1], [], []>} : vector<16x16xf32>, vector<16x8xf32>, vector<16x8xf32> -> vector<16x8xf32>
    %c0_194 = arith.constant 0 : index
    %c0_195 = arith.constant 0 : index
    %511 = vector.load %arg7[%c0_194, %c0_195] : memref<16x32xf32, #tpu.memory_space<vmem>>, vector<16x8xf32>
    tpu.vector_store %arg7[%c0_194, %c0_195], %510 {strides = array<i32>} : memref<16x32xf32, #tpu.memory_space<vmem>>, vector<16x8xf32>,
    %512 = vector.extract_strided_slice %491 {offsets = [0, 8], sizes = [16, 8], strides = [1, 1]} : vector<16x32xf32> to vector<16x8xf32>
    %513 = vector.extract_strided_slice %492 {offsets = [0, 8], sizes = [16, 8], strides = [1, 1]} : vector<16x32xf32> to vector<16x8xf32>
    %cst_196 = arith.constant dense<0.000000e+00> : vector<16x16xf32>
    %514 = tpu.matmul %512, %513, %cst_196 {dimension_numbers = #tpu.dot_dimension_numbers<[1], [1], [0], [0], [0, 0, 1, 0], [], []>} : vector<16x8xf32>, vector<16x8xf32>, vector<16x16xf32> -> vector<16x16xf32>
    %cst_197 = arith.constant 0.353553385 : f32
    %515 = vector.broadcast %cst_197 : f32 to vector<16x16xf32>
    %516 = arith.mulf %514, %515 : vector<16x16xf32>
    %517 = arith.addf %516, %3 : vector<16x16xf32>
    %cst_198 = arith.constant dense<0xFF800000> : vector<16xf32>
    %518 = vector.multi_reduction <maximumf>, %517, %cst_198 [1] : vector<16x16xf32> to vector<16xf32>
    %519 = vector.shape_cast %518 : vector<16xf32> to vector<16x1xf32>
    %520 = vector.broadcast %519 : vector<16x1xf32> to vector<16x16xf32>
    %521 = arith.subf %517, %520 : vector<16x16xf32>
    %522 = math.exp %521 : vector<16x16xf32>
    %cst_199 = arith.constant dense<0.000000e+00> : vector<16xf32>
    %523 = vector.multi_reduction <add>, %522, %cst_199 [1] : vector<16x16xf32> to vector<16xf32>
    %524 = vector.shape_cast %523 : vector<16xf32> to vector<16x1xf32>
    %525 = vector.broadcast %524 : vector<16x1xf32> to vector<16x16xf32>
    %526 = arith.divf %522, %525 : vector<16x16xf32>
    %527 = vector.extract_strided_slice %493 {offsets = [0, 8], sizes = [16, 8], strides = [1, 1]} : vector<16x32xf32> to vector<16x8xf32>
    %cst_200 = arith.constant dense<0.000000e+00> : vector<16x8xf32>
    %528 = tpu.matmul %526, %527, %cst_200 {dimension_numbers = #tpu.dot_dimension_numbers<[1], [0], [0], [1], [0, 0, 1, 1], [], []>} : vector<16x16xf32>, vector<16x8xf32>, vector<16x8xf32> -> vector<16x8xf32>
    %c0_201 = arith.constant 0 : index
    %c8_202 = arith.constant 8 : index
    %529 = vector.load %arg7[%c0_201, %c8_202] : memref<16x32xf32, #tpu.memory_space<vmem>>, vector<16x8xf32>
    tpu.vector_store %arg7[%c0_201, %c8_202], %528 {strides = array<i32>} : memref<16x32xf32, #tpu.memory_space<vmem>>, vector<16x8xf32>,
    %530 = vector.extract_strided_slice %491 {offsets = [0, 16], sizes = [16, 8], strides = [1, 1]} : vector<16x32xf32> to vector<16x8xf32>
    %531 = vector.extract_strided_slice %492 {offsets = [0, 16], sizes = [16, 8], strides = [1, 1]} : vector<16x32xf32> to vector<16x8xf32>
    %cst_203 = arith.constant dense<0.000000e+00> : vector<16x16xf32>
    %532 = tpu.matmul %530, %531, %cst_203 {dimension_numbers = #tpu.dot_dimension_numbers<[1], [1], [0], [0], [0, 0, 1, 0], [], []>} : vector<16x8xf32>, vector<16x8xf32>, vector<16x16xf32> -> vector<16x16xf32>
    %cst_204 = arith.constant 0.353553385 : f32
    %533 = vector.broadcast %cst_204 : f32 to vector<16x16xf32>
    %534 = arith.mulf %532, %533 : vector<16x16xf32>
    %535 = arith.addf %534, %3 : vector<16x16xf32>
    %cst_205 = arith.constant dense<0xFF800000> : vector<16xf32>
    %536 = vector.multi_reduction <maximumf>, %535, %cst_205 [1] : vector<16x16xf32> to vector<16xf32>
    %537 = vector.shape_cast %536 : vector<16xf32> to vector<16x1xf32>
    %538 = vector.broadcast %537 : vector<16x1xf32> to vector<16x16xf32>
    %539 = arith.subf %535, %538 : vector<16x16xf32>
    %540 = math.exp %539 : vector<16x16xf32>
    %cst_206 = arith.constant dense<0.000000e+00> : vector<16xf32>
    %541 = vector.multi_reduction <add>, %540, %cst_206 [1] : vector<16x16xf32> to vector<16xf32>
    %542 = vector.shape_cast %541 : vector<16xf32> to vector<16x1xf32>
    %543 = vector.broadcast %542 : vector<16x1xf32> to vector<16x16xf32>
    %544 = arith.divf %540, %543 : vector<16x16xf32>
    %545 = vector.extract_strided_slice %493 {offsets = [0, 16], sizes = [16, 8], strides = [1, 1]} : vector<16x32xf32> to vector<16x8xf32>
    %cst_207 = arith.constant dense<0.000000e+00> : vector<16x8xf32>
    %546 = tpu.matmul %544, %545, %cst_207 {dimension_numbers = #tpu.dot_dimension_numbers<[1], [0], [0], [1], [0, 0, 1, 1], [], []>} : vector<16x16xf32>, vector<16x8xf32>, vector<16x8xf32> -> vector<16x8xf32>
    %c0_208 = arith.constant 0 : index
    %c16_209 = arith.constant 16 : index
    %547 = vector.load %arg7[%c0_208, %c16_209] : memref<16x32xf32, #tpu.memory_space<vmem>>, vector<16x8xf32>
    tpu.vector_store %arg7[%c0_208, %c16_209], %546 {strides = array<i32>} : memref<16x32xf32, #tpu.memory_space<vmem>>, vector<16x8xf32>,
    %548 = vector.extract_strided_slice %491 {offsets = [0, 24], sizes = [16, 8], strides = [1, 1]} : vector<16x32xf32> to vector<16x8xf32>
    %549 = vector.extract_strided_slice %492 {offsets = [0, 24], sizes = [16, 8], strides = [1, 1]} : vector<16x32xf32> to vector<16x8xf32>
    %cst_210 = arith.constant dense<0.000000e+00> : vector<16x16xf32>
    %550 = tpu.matmul %548, %549, %cst_210 {dimension_numbers = #tpu.dot_dimension_numbers<[1], [1], [0], [0], [0, 0, 1, 0], [], []>} : vector<16x8xf32>, vector<16x8xf32>, vector<16x16xf32> -> vector<16x16xf32>
    %cst_211 = arith.constant 0.353553385 : f32
    %551 = vector.broadcast %cst_211 : f32 to vector<16x16xf32>
    %552 = arith.mulf %550, %551 : vector<16x16xf32>
    %553 = arith.addf %552, %3 : vector<16x16xf32>
    %cst_212 = arith.constant dense<0xFF800000> : vector<16xf32>
    %554 = vector.multi_reduction <maximumf>, %553, %cst_212 [1] : vector<16x16xf32> to vector<16xf32>
    %555 = vector.shape_cast %554 : vector<16xf32> to vector<16x1xf32>
    %556 = vector.broadcast %555 : vector<16x1xf32> to vector<16x16xf32>
    %557 = arith.subf %553, %556 : vector<16x16xf32>
    %558 = math.exp %557 : vector<16x16xf32>
    %cst_213 = arith.constant dense<0.000000e+00> : vector<16xf32>
    %559 = vector.multi_reduction <add>, %558, %cst_213 [1] : vector<16x16xf32> to vector<16xf32>
    %560 = vector.shape_cast %559 : vector<16xf32> to vector<16x1xf32>
    %561 = vector.broadcast %560 : vector<16x1xf32> to vector<16x16xf32>
    %562 = arith.divf %558, %561 : vector<16x16xf32>
    %563 = vector.extract_strided_slice %493 {offsets = [0, 24], sizes = [16, 8], strides = [1, 1]} : vector<16x32xf32> to vector<16x8xf32>
    %cst_214 = arith.constant dense<0.000000e+00> : vector<16x8xf32>
    %564 = tpu.matmul %562, %563, %cst_214 {dimension_numbers = #tpu.dot_dimension_numbers<[1], [0], [0], [1], [0, 0, 1, 1], [], []>} : vector<16x16xf32>, vector<16x8xf32>, vector<16x8xf32> -> vector<16x8xf32>
    %c0_215 = arith.constant 0 : index
    %c24_216 = arith.constant 24 : index
    %565 = vector.load %arg7[%c0_215, %c24_216] : memref<16x32xf32, #tpu.memory_space<vmem>>, vector<16x8xf32>
    tpu.vector_store %arg7[%c0_215, %c24_216], %564 {strides = array<i32>} : memref<16x32xf32, #tpu.memory_space<vmem>>, vector<16x8xf32>,
    %c0_217 = arith.constant 0 : index
    %c0_218 = arith.constant 0 : index
    %566 = vector.load %arg7[%c0_217, %c0_218] : memref<16x32xf32, #tpu.memory_space<vmem>>, vector<16x32xf32>
    %c384 = arith.constant 384 : index
    %c0_219 = arith.constant 0 : index
    %567 = vector.load %arg2[%c384, %c0_219] : memref<528x32xf32, #tpu.memory_space<vmem>>, vector<32x32xf32>
    %cst_220 = arith.constant dense<0.000000e+00> : vector<16x32xf32>
    %568 = tpu.matmul %566, %567, %cst_220 {dimension_numbers = #tpu.dot_dimension_numbers<[1], [0], [0], [1], [0, 0, 1, 1], [], []>} : vector<16x32xf32>, vector<32x32xf32>, vector<16x32xf32> -> vector<16x32xf32>
    %c416 = arith.constant 416 : index
    %c0_221 = arith.constant 0 : index
    %569 = vector.load %arg2[%c416, %c0_221] : memref<528x32xf32, #tpu.memory_space<vmem>>, vector<1x32xf32>
    %570 = vector.broadcast %569 : vector<1x32xf32> to vector<16x32xf32>
    %571 = arith.addf %568, %570 : vector<16x32xf32>
    %572 = arith.addf %457, %571 : vector<16x32xf32>
    %c512 = arith.constant 512 : index
    %c0_222 = arith.constant 0 : index
    %573 = vector.load %arg2[%c512, %c0_222] : memref<528x32xf32, #tpu.memory_space<vmem>>, vector<2x32xf32>
    %574 = vector.extract_strided_slice %573 {offsets = [0, 0], sizes = [1, 32], strides = [1, 1]} : vector<2x32xf32> to vector<1x32xf32>
    %575 = vector.extract_strided_slice %573 {offsets = [1, 0], sizes = [1, 32], strides = [1, 1]} : vector<2x32xf32> to vector<1x32xf32>
    %cst_223 = arith.constant dense<0.000000e+00> : vector<16xf32>
    %576 = vector.multi_reduction <add>, %572, %cst_223 [1] : vector<16x32xf32> to vector<16xf32>
    %577 = vector.shape_cast %576 : vector<16xf32> to vector<16x1xf32>
    %cst_224 = arith.constant 3.200000e+01 : f32
    %578 = vector.broadcast %cst_224 : f32 to vector<16x1xf32>
    %579 = arith.divf %577, %578 : vector<16x1xf32>
    %580 = vector.broadcast %579 : vector<16x1xf32> to vector<16x32xf32>
    %581 = arith.subf %572, %580 : vector<16x32xf32>
    %582 = arith.mulf %581, %581 : vector<16x32xf32>
    %cst_225 = arith.constant dense<0.000000e+00> : vector<16xf32>
    %583 = vector.multi_reduction <add>, %582, %cst_225 [1] : vector<16x32xf32> to vector<16xf32>
    %584 = vector.shape_cast %583 : vector<16xf32> to vector<16x1xf32>
    %cst_226 = arith.constant 3.200000e+01 : f32
    %585 = vector.broadcast %cst_226 : f32 to vector<16x1xf32>
    %586 = arith.divf %584, %585 : vector<16x1xf32>
    %587 = vector.broadcast %579 : vector<16x1xf32> to vector<16x32xf32>
    %588 = arith.subf %572, %587 : vector<16x32xf32>
    %cst_227 = arith.constant 9.99999996E-13 : f32
    %589 = vector.broadcast %cst_227 : f32 to vector<16x1xf32>
    %590 = arith.addf %586, %589 : vector<16x1xf32>
    %591 = math.rsqrt %590 : vector<16x1xf32>
    %592 = vector.broadcast %591 : vector<16x1xf32> to vector<16x32xf32>
    %593 = arith.mulf %588, %592 : vector<16x32xf32>
    %594 = vector.broadcast %574 : vector<1x32xf32> to vector<16x32xf32>
    %595 = arith.mulf %593, %594 : vector<16x32xf32>
    %596 = vector.broadcast %575 : vector<1x32xf32> to vector<16x32xf32>
    %597 = arith.addf %595, %596 : vector<16x32xf32>
    %c40_228 = arith.constant 40 : index
    %c0_229 = arith.constant 0 : index
    %598 = vector.load %arg3[%c40_228, %c0_229] : memref<80x64xf32, #tpu.memory_space<vmem>>, vector<32x64xf32>
    %cst_230 = arith.constant dense<0.000000e+00> : vector<16x64xf32>
    %599 = tpu.matmul %597, %598, %cst_230 {dimension_numbers = #tpu.dot_dimension_numbers<[1], [0], [0], [1], [0, 0, 1, 1], [], []>} : vector<16x32xf32>, vector<32x64xf32>, vector<16x64xf32> -> vector<16x64xf32>
    %c72_231 = arith.constant 72 : index
    %c0_232 = arith.constant 0 : index
    %600 = vector.load %arg3[%c72_231, %c0_232] : memref<80x64xf32, #tpu.memory_space<vmem>>, vector<1x64xf32>
    %601 = vector.broadcast %600 : vector<1x64xf32> to vector<16x64xf32>
    %602 = arith.addf %599, %601 : vector<16x64xf32>
    %603 = arith.mulf %602, %602 : vector<16x64xf32>
    %604 = arith.mulf %602, %603 : vector<16x64xf32>
    %cst_233 = arith.constant 4.471500e-02 : f32
    %605 = vector.broadcast %cst_233 : f32 to vector<16x64xf32>
    %606 = arith.mulf %605, %604 : vector<16x64xf32>
    %607 = arith.addf %602, %606 : vector<16x64xf32>
    %cst_234 = arith.constant 0.797884583 : f32
    %608 = vector.broadcast %cst_234 : f32 to vector<16x64xf32>
    %609 = arith.mulf %608, %607 : vector<16x64xf32>
    %610 = math.tanh %609 : vector<16x64xf32>
    %cst_235 = arith.constant 1.000000e+00 : f32
    %611 = vector.broadcast %cst_235 : f32 to vector<16x64xf32>
    %612 = arith.addf %611, %610 : vector<16x64xf32>
    %cst_236 = arith.constant 5.000000e-01 : f32
    %613 = vector.broadcast %cst_236 : f32 to vector<16x64xf32>
    %614 = arith.mulf %613, %612 : vector<16x64xf32>
    %615 = arith.mulf %602, %614 : vector<16x64xf32>
    %c424 = arith.constant 424 : index
    %c0_237 = arith.constant 0 : index
    %616 = vector.load %arg2[%c424, %c0_237] : memref<528x32xf32, #tpu.memory_space<vmem>>, vector<64x32xf32>
    %cst_238 = arith.constant dense<0.000000e+00> : vector<16x32xf32>
    %617 = tpu.matmul %615, %616, %cst_238 {dimension_numbers = #tpu.dot_dimension_numbers<[1], [0], [0], [1], [0, 0, 1, 1], [], []>} : vector<16x64xf32>, vector<64x32xf32>, vector<16x32xf32> -> vector<16x32xf32>
    %c488 = arith.constant 488 : index
    %c0_239 = arith.constant 0 : index
    %618 = vector.load %arg2[%c488, %c0_239] : memref<528x32xf32, #tpu.memory_space<vmem>>, vector<1x32xf32>
    %619 = vector.broadcast %618 : vector<1x32xf32> to vector<16x32xf32>
    %620 = arith.addf %617, %619 : vector<16x32xf32>
    %621 = arith.addf %572, %620 : vector<16x32xf32>
    %c520 = arith.constant 520 : index
    %c0_240 = arith.constant 0 : index
    %622 = vector.load %arg2[%c520, %c0_240] : memref<528x32xf32, #tpu.memory_space<vmem>>, vector<2x32xf32>
    %623 = vector.extract_strided_slice %622 {offsets = [0, 0], sizes = [1, 32], strides = [1, 1]} : vector<2x32xf32> to vector<1x32xf32>
    %624 = vector.extract_strided_slice %622 {offsets = [1, 0], sizes = [1, 32], strides = [1, 1]} : vector<2x32xf32> to vector<1x32xf32>
    %cst_241 = arith.constant dense<0.000000e+00> : vector<16xf32>
    %625 = vector.multi_reduction <add>, %621, %cst_241 [1] : vector<16x32xf32> to vector<16xf32>
    %626 = vector.shape_cast %625 : vector<16xf32> to vector<16x1xf32>
    %cst_242 = arith.constant 3.200000e+01 : f32
    %627 = vector.broadcast %cst_242 : f32 to vector<16x1xf32>
    %628 = arith.divf %626, %627 : vector<16x1xf32>
    %629 = vector.broadcast %628 : vector<16x1xf32> to vector<16x32xf32>
    %630 = arith.subf %621, %629 : vector<16x32xf32>
    %631 = arith.mulf %630, %630 : vector<16x32xf32>
    %cst_243 = arith.constant dense<0.000000e+00> : vector<16xf32>
    %632 = vector.multi_reduction <add>, %631, %cst_243 [1] : vector<16x32xf32> to vector<16xf32>
    %633 = vector.shape_cast %632 : vector<16xf32> to vector<16x1xf32>
    %cst_244 = arith.constant 3.200000e+01 : f32
    %634 = vector.broadcast %cst_244 : f32 to vector<16x1xf32>
    %635 = arith.divf %633, %634 : vector<16x1xf32>
    %636 = vector.broadcast %628 : vector<16x1xf32> to vector<16x32xf32>
    %637 = arith.subf %621, %636 : vector<16x32xf32>
    %cst_245 = arith.constant 9.99999996E-13 : f32
    %638 = vector.broadcast %cst_245 : f32 to vector<16x1xf32>
    %639 = arith.addf %635, %638 : vector<16x1xf32>
    %640 = math.rsqrt %639 : vector<16x1xf32>
    %641 = vector.broadcast %640 : vector<16x1xf32> to vector<16x32xf32>
    %642 = arith.mulf %637, %641 : vector<16x32xf32>
    %643 = vector.broadcast %623 : vector<1x32xf32> to vector<16x32xf32>
    %644 = arith.mulf %642, %643 : vector<16x32xf32>
    %645 = vector.broadcast %624 : vector<1x32xf32> to vector<16x32xf32>
    %646 = arith.addf %644, %645 : vector<16x32xf32>
    %c0_246 = arith.constant 0 : index
    %c0_247 = arith.constant 0 : index
    %647 = vector.load %arg5[%c0_246, %c0_247] : memref<16x32xf32, #tpu.memory_space<vmem>>, vector<16x32xf32>
    tpu.vector_store %arg5[%c0_246, %c0_247], %646 {strides = array<i32>} : memref<16x32xf32, #tpu.memory_space<vmem>>, vector<16x32xf32>,
    %c0_248 = arith.constant 0 : index
    %c0_249 = arith.constant 0 : index
    %648 = vector.load %arg6[%c0_248, %c0_249] : memref<16x32xf32, #tpu.memory_space<vmem>>, vector<16x32xf32>
    tpu.vector_store %arg6[%c0_248, %c0_249], %316 {strides = array<i32>} : memref<16x32xf32, #tpu.memory_space<vmem>>, vector<16x32xf32>,
    return
  }
  func.func @transform_0(%arg0: i32) -> (i32, i32) {
    %c0_i32 = arith.constant 0 : i32
    %c0_i32_0 = arith.constant 0 : i32
    %c0_i32_1 = arith.constant 0 : i32
    return %c0_i32, %c0_i32_0 : i32, i32
  }
  func.func @transform_1(%arg0: i32) -> (i32, i32) {
    %c0_i32 = arith.constant 0 : i32
    %c0_i32_0 = arith.constant 0 : i32
    %c0_i32_1 = arith.constant 0 : i32
    return %c0_i32, %c0_i32_0 : i32, i32
  }
  func.func @transform_2(%arg0: i32) -> (i32, i32) {
    %c0_i32 = arith.constant 0 : i32
    %c0_i32_0 = arith.constant 0 : i32
    %c0_i32_1 = arith.constant 0 : i32
    return %c0_i32, %c0_i32_0 : i32, i32
  }
  func.func @transform_3(%arg0: i32) -> (i32, i32) {
    %c0_i32 = arith.constant 0 : i32
    %c0_i32_0 = arith.constant 0 : i32
    %c0_i32_1 = arith.constant 0 : i32
    return %c0_i32, %c0_i32_0 : i32, i32
  }
  func.func @transform_4(%arg0: i32) -> (i32, i32) {
    %c0_i32 = arith.constant 0 : i32
    %c0_i32_0 = arith.constant 0 : i32
    %c0_i32_1 = arith.constant 0 : i32
    return %c0_i32, %c0_i32_0 : i32, i32
  }
  func.func @transform_5(%arg0: i32) -> (i32, i32) {
    %c0_i32 = arith.constant 0 : i32
    %c0_i32_0 = arith.constant 0 : i32
    %c0_i32_1 = arith.constant 0 : i32
    return %c0_i32, %c0_i32_0 : i32, i32
  }
}

</mosaic_0001>

<llo_original>
// kernel: eq.15
$region0: #{eq.15}
  %s0 = inlined_call_operand.vmem [shape: s32[2,8], index: 0, kind: input, shape index: {}]
  %s1 = inlined_call_operand.vmem [shape: s32[16], index: 1, kind: output, shape index: {}]
  $region1: #{eq.15} parent=0
    #allocation0 [shape = 'u8[4096]{0}', space=vmem, size = 0x1000, scoped, tag = 'scoped mem for output reshape']
    #allocation1 [shape = 'u8[4096]{0}', space=vmem, size = 0x1000, scoped, tag = 'scoped mem for input reshape']
    %s3 = ssub.s32 4, 1
    %v4 = vld [vmem:[%s0] sm:%s3]
    %5 = vst [vmem:[#allocation1] sm:%s3] %v4
    %v6 = vld [vmem:[#allocation1] sm:$0x1]
    %vm7 = vcmask 64512
    %8 = vst.msk [vmem:[#allocation0] sm:$0x1] %vm7, %v6
    %s9 = scalar_lea.vmem [#allocation1], 1
    %v10 = vld [vmem:[%s9] sm:$0x1]
    %11 = vrot.lane.b32.xlu0 %v10, 8
    %v12 = vpop.permute.xlu0 %11
    %vm13 = vcmask 130112
    %14 = vst.msk [vmem:[#allocation0] sm:$0x1] %vm13, %v12
    %s16 = ssub.s32 2, 1
    %v17 = vld [vmem:[#allocation0] sm:%s16]
    %s19 = ssub.s32 2, 1
    %20 = vst [vmem:[%s1] sm:%s19] %v17

// kernel: eq.1
$region0: #{eq.1}
  %s0 = inlined_call_operand.hbm [shape: s32[2,8], index: 0, kind: input, shape index: {}]
  %s1 = inlined_call_operand.vmem [shape: s32[16], index: 1, kind: output, shape index: {}]
  $region1: #{eq.1} parent=0
    #allocation0 [shape = 'u8[1024]{0}', space=vmem, size = 0x400, scoped, tag = 'operand span for operand 0']
    #allocation1 [shape = 's32[1]{0}', space=sflag, size = 0x4, scoped, tag = 'scoped memory for eq.1']
    #allocation2 [shape = 'u8[4096]{0}', space=vmem, size = 0x1000, scoped, tag = 'scoped mem for output reshape']
    #allocation3 [shape = 'u8[4096]{0}', space=vmem, size = 0x1000, scoped, tag = 'scoped mem for input reshape']
    %2 = vsyncpa [#allocation1], 0
    %4 = vsyncadd [#allocation1], 0
    %s6 = sshll.u32 %s0, 4
    %s7 = int_to_ptr.hbm [resolvable:$true] %s6
    %s8 = sshll.u32 [#allocation0], 4
    %s9 = int_to_ptr.vmem [resolvable:$true] %s8
    %11 = dma.hbm_to_vmem [thread:$0]  %s7, 32, %s9, [#allocation1]
    %13 = dma.done [#allocation1], 32
    %s15 = ssub.s32 4, 1
    %v16 = vld [vmem:[#allocation0] sm:%s15]
    %17 = vst [vmem:[#allocation3] sm:%s15] %v16
    %v18 = vld [vmem:[#allocation3] sm:$0x1]
    %vm19 = vcmask 64512
    %20 = vst.msk [vmem:[#allocation2] sm:$0x1] %vm19, %v18
    %s21 = scalar_lea.vmem [#allocation3], 1
    %v22 = vld [vmem:[%s21] sm:$0x1]
    %23 = vrot.lane.b32.xlu0 %v22, 8
    %v24 = vpop.permute.xlu0 %23
    %vm25 = vcmask 130112
    %26 = vst.msk [vmem:[#allocation2] sm:$0x1] %vm25, %v24
    %s28 = ssub.s32 2, 1
    %v29 = vld [vmem:[#allocation2] sm:%s28]
    %s31 = ssub.s32 2, 1
    %32 = vst [vmem:[%s1] sm:%s31] %v29
    %33 = vsyncpa [#allocation1], 1

// kernel: forward.1
$region0: #{forward.1}
  #allocation0 [shape = 'u32[]', space=smem, size = 0x4, offset = 0x4, fixed_abs, tag = 'smem constant byte address 0x4 - core index']
  #allocation1 [shape = 'u32[72,128]{1,0:T(1,128)}', space=vmem, size = 0x9000, scoped, tag = 'internal scratch']
  #allocation2 [shape = 'f32[16,32]{1,0:T(8,128)}', space=vmem, size = 0x2000, scoped, tag = 'scratch operand']
  %s0 = inlined_call_operand.vmem [shape: f32[144,64], index: 0, kind: input, shape index: {}]
  %s1 = inlined_call_operand.hbm [shape: f32[528,32], index: 1, kind: input, shape index: {}]
  %s2 = inlined_call_operand.vmem [shape: f32[80,64], index: 2, kind: input, shape index: {}]
  %s3 = inlined_call_operand.vmem [shape: f32[160,96], index: 3, kind: input, shape index: {}]
  %s4 = inlined_call_operand.hbm [shape: f32[16,32], index: 4, kind: output, shape index: {0}]
  %s5 = inlined_call_operand.hbm [shape: f32[16,32], index: 5, kind: output, shape index: {1}]
  %6 = xla_tuple %s4, %s5
  %s7 = sld [smem:[#allocation0]]
  $region38: #{forward.1} parent=0
    _
  %s9 = ssub.s32 1, %s7
  %s10 = scalar_select 0, %s9, %s7
  $region1: #{forward.1} parent=0
    #allocation3 [shape = 'u8[270336]{0}', space=vmem, size = 0x42000, scoped, tag = 'input window, operand 1, single buffered']
    #allocation4 [shape = 's32[1]{0}', space=sflag, size = 0x4, scoped, tag = 'scoped memory for forward.1']
    #allocation5 [shape = 's32[1]{0}', space=sflag, size = 0x4, scoped, tag = 'scoped memory for forward.1']
    #allocation6 [shape = 'u8[8192]{0}', space=vmem, size = 0x2000, scoped, tag = 'output window, operand 0, single buffered']
    #allocation7 [shape = 'u8[8192]{0}', space=vmem, size = 0x2000, scoped, tag = 'output window, operand 1, single buffered']
    #allocation8 [shape = 's32[1]{0}', space=sflag, size = 0x4, scoped, tag = 'scoped memory for forward.1']
    %11 = vsyncpa [#allocation4], 0
    %12 = vsyncpa [#allocation5], 0
    %13 = vsyncpa [#allocation8], 0
    // Predicated region
    $region2: #{forward.1} parent=1 // pred_check
      _
    $region3: #{forward.1} parent=1 // pred_check_branch
      %15 = sbr.rel (0) target = $region5
    $region4: #{forward.1} parent=1 // pred_region
      _
    $region5: #{forward.1} parent=1 // pred_fallthru
      _
    // Predicated region
    $region6: #{forward.1} parent=1 // pred_check
      _
    $region7: #{forward.1} parent=1 // pred_check_branch
      %17 = sbr.rel (0) target = $region9
    $region8: #{forward.1} parent=1 // pred_region
      %19 = vsyncadd [#allocation4], 0
      %s20 = sshll.u32 %s1, 4
      %s21 = int_to_ptr.hbm [resolvable:$true] %s20
      %s22 = sshll.u32 [#allocation3], 4
      %s23 = int_to_ptr.vmem [resolvable:$true] %s22
      %28 = dma.hbm_to_vmem [thread:$0]  %s21, 8448, %s23, [#allocation4], 128, 128, 8
    $region9: #{forward.1} parent=1 // pred_fallthru
      _
    // Predicated region
    $region10: #{forward.1} parent=1 // pred_check
      _
    $region11: #{forward.1} parent=1 // pred_check_branch
      %30 = sbr.rel (0) target = $region13
    $region12: #{forward.1} parent=1 // pred_region
      _
    $region13: #{forward.1} parent=1 // pred_fallthru
      _
    // Predicated region
    $region14: #{forward.1} parent=1 // pred_check
      _
    $region15: #{forward.1} parent=1 // pred_check_branch
      %32 = sbr.rel (0) target = $region17
    $region16: #{forward.1} parent=1 // pred_region
      _
    $region17: #{forward.1} parent=1 // pred_fallthru
      _
    // Predicated region
    $region18: #{forward.1} parent=1 // pred_check
      _
    $region19: #{forward.1} parent=1 // pred_check_branch
      %34 = sbr.rel (0) target = $region21
    $region20: #{forward.1} parent=1 // pred_region
      %36 = dma.done [#allocation4], 8448
    $region21: #{forward.1} parent=1 // pred_fallthru
      _
    %v37 = vld [vmem:[#allocation3] sm:$0xff]
    %v38 = vld [vmem:[#allocation3 + $0x8] sm:$0xff]
    %v39 = vld [vmem:[#allocation3 + $0x10] sm:$0xff]
    %v40 = vld [vmem:[#allocation3 + $0x18] sm:$0xff]
    %v41 = vld [vmem:[#allocation3 + $0x20] sm:$0xff]
    %v42 = vld [vmem:[#allocation3 + $0x28] sm:$0xff]
    %v43 = vld [vmem:[#allocation3 + $0x30] sm:$0xff]
    %v44 = vld [vmem:[#allocation3 + $0x38] sm:$0xff]
    %v45 = vld [vmem:[%s0 + $0x40] sm:$0xff]
    %v46 = vld [vmem:[%s0 + $0x48] sm:$0xff]
    %v47 = vld [vmem:[%s0 + $0x50] sm:$0xff]
    %v48 = vld [vmem:[%s0 + $0x58] sm:$0xff]
    %v49 = vld [vmem:[%s0 + $0x60] sm:$0xff]
    %v50 = vld [vmem:[%s0 + $0x68] sm:$0xff]
    %v51 = vld [vmem:[%s0 + $0x70] sm:$0xff]
    %v52 = vld [vmem:[%s0 + $0x78] sm:$0xff]
    %v53 = vld [vmem:[%s0 + $0x80] sm:$0xff]
    %v54 = vld [vmem:[%s0 + $0x88] sm:$0xff]
    %v55 = vld [vmem:[%s0] sm:$0xff]
    %v56 = vld [vmem:[%s0 + $0x8] sm:$0xff]
    %v57 = vld [vmem:[#allocation3 + $0x80] sm:$0xff]
    %v58 = vld [vmem:[#allocation3 + $0x88] sm:$0xff]
    %vm59 = vcmask 523264
    %v61 = vsel %vm59, %v55, 0
    %v64 = vsel %vm59, %v56, 0
    %66 = vmatpush.msra.mxu0 0.0
    %67 = vmatpush.msra.mxu0 0.0
    %68 = vmatpush.msra.mxu0 0.0
    %69 = vmatpush.msra.mxu0 0.0
    %70 = vmatpush.msra.mxu0 0.0
    %71 = vmatpush.msra.mxu0 0.0
    %72 = vmatpush.msra.mxu0 0.0
    %73 = vmatpush.msra.mxu0 0.0
    %74 = vmatpush.msra.mxu0 %v44
    %75 = vmatpush.msra.mxu0 %v43
    %76 = vmatpush.msra.mxu0 %v42
    %77 = vmatpush.msra.mxu0 %v41
    %78 = vmatpush.msra.mxu0 %v40
    %79 = vmatpush.msra.mxu0 %v39
    %80 = vmatpush.msra.mxu0 %v38
    %81 = vmatpush.msra.mxu0 %v37
    %82 = vmatmul.f32.gmra.mxu0 %v61
    %v83 = vpop.f32.mrf.mxu0
    %v84 = vadd.f32 %v57, %v83
    %85 = vmatmul.f32.gmra.mxu0 %v64
    %v86 = vpop.f32.mrf.mxu0
    %v87 = vadd.f32 %v58, %v86
    %88 = vdwg.mxu0
    %v89 = vld [vmem:[#allocation3 + $0xa0] sm:$0x3]
    %vm90 = vcmask 261120
    %v91 = vsel %vm90, %v84, 0.0
    %92 = vadd.xlane.f32.xlu0 %v91
    %v93 = vpop.xlane.xlu0 %92
    %v94 = vsel %vm90, %v87, 0.0
    %95 = vadd.xlane.f32.xlu0 %v94
    %v96 = vpop.xlane.xlu0 %95
    %v97 = vrcp.pop 32.0
    %v98 = vmul.f32 32.0, %v97
    %v99 = vsub.f32 1.0, %v98
    %v100 = vmul.f32 %v97, %v99
    %v101 = vadd.f32 %v97, %v100
    %vm102 = vweird.f32 %v97
    %v103 = vsel %vm102, %v97, %v101
    %v104 = vmul.f32 %v93, %v103
    %v105 = vmul.f32 %v96, %v103
    %v106 = vsub.f32 %v84, %v104
    %v107 = vsub.f32 %v87, %v105
    %v108 = vmul.f32 %v106, %v106
    %v109 = vmul.f32 %v107, %v107
    %v110 = vsel %vm90, %v108, 0.0
    %111 = vadd.xlane.f32.xlu0 %v110
    %v112 = vpop.xlane.xlu0 %111
    %v113 = vsel %vm90, %v109, 0.0
    %114 = vadd.xlane.f32.xlu0 %v113
    %v115 = vpop.xlane.xlu0 %114
    %v116 = vmul.f32 %v112, %v103
    %v117 = vmul.f32 %v115, %v103
    %v118 = vadd.f32 %v116, 1e-12
    %v119 = vadd.f32 %v117, 1e-12
    %v120 = vrsqrt.pop %v118
    %v121 = vmul.f32 %v120, %v118
    %v122 = vmul.f32 %v121, %v120
    %v123 = vmul.f32 0.5, %v122
    %v124 = vsub.f32 1.5, %v123
    %v125 = vmul.f32 %v120, %v124
    %vm126 = vweird.f32 %v118
    %vm127 = vweird.f32 %v120
    %vm128 = vmor %vm126, %vm127
    %v129 = vsel %vm128, %v120, %v125
    %v130 = vrsqrt.pop %v119
    %v131 = vmul.f32 %v130, %v119
    %v132 = vmul.f32 %v131, %v130
    %v133 = vmul.f32 0.5, %v132
    %v134 = vsub.f32 1.5, %v133
    %v135 = vmul.f32 %v130, %v134
    %vm136 = vweird.f32 %v119
    %vm137 = vweird.f32 %v130
    %vm138 = vmor %vm136, %vm137
    %v139 = vsel %vm138, %v130, %v135
    %v140 = vmul.f32 %v106, %v129
    %v141 = vmul.f32 %v107, %v139
    %v142 = vperm.slane %v89, 0
    %v143 = vmul.f32 %v140, %v142
    %v144 = vmul.f32 %v141, %v142
    %v145 = vperm.slane %v89, 1
    %v146 = vadd.f32 %v143, %v145
    %v147 = vadd.f32 %v144, %v145
    %v148 = vld [vmem:[%s3] sm:$0xff]
    %v149 = vld [vmem:[%s3 + $0x8] sm:$0xff]
    %v150 = vld [vmem:[%s3 + $0x10] sm:$0xff]
    %v151 = vld [vmem:[%s3 + $0x18] sm:$0xff]
    %v152 = vld [vmem:[%s3 + $0x20] sm:$0x1]
    %v153 = vperm.slane %v152, 0
    %v155 = vsel %vm90, %v146, 0
    %v158 = vsel %vm90, %v147, 0
    %160 = vmatpush.msra.mxu0 0.0
    %161 = vmatpush.msra.mxu0 0.0
    %162 = vmatpush.msra.mxu0 0.0
    %163 = vmatpush.msra.mxu0 0.0
    %164 = vmatpush.msra.mxu0 0.0
    %165 = vmatpush.msra.mxu0 0.0
    %166 = vmatpush.msra.mxu0 0.0
    %167 = vmatpush.msra.mxu0 0.0
    %168 = vmatpush.msra.mxu0 0.0
    %169 = vmatpush.msra.mxu0 0.0
    %170 = vmatpush.msra.mxu0 0.0
    %171 = vmatpush.msra.mxu0 0.0
    %172 = vmatpush.msra.mxu0 %v151
    %173 = vmatpush.msra.mxu0 %v150
    %174 = vmatpush.msra.mxu0 %v149
    %175 = vmatpush.msra.mxu0 %v148
    %176 = vmatmul.f32.gmra.mxu0 %v155
    %v177 = vpop.f32.mrf.mxu0
    %v178 = vadd.f32 %v153, %v177
    %179 = vmatmul.f32.gmra.mxu0 %v158
    %v180 = vpop.f32.mrf.mxu0
    %v181 = vadd.f32 %v153, %v180
    %182 = vdwg.mxu0
    %185 = vrot.lane.b32.xlu0 %v178, 96
    %v186 = vpop.permute.xlu0 %185
    %187 = vrot.lane.b32.xlu0 %v181, 96
    %v188 = vpop.permute.xlu0 %187
    %vm189 = vcmask 64512
    %v190 = vsel %vm189, %v178, 0
    %v192 = vsel %vm189, %v181, 0
    %v194 = vsel %vm189, %v186, 0
    %v196 = vsel %vm189, %v188, 0
    %198 = vmatpush.xpose.msra.mxu0 0.0
    %199 = vmatpush.xpose.msra.mxu0 0.0
    %200 = vmatpush.xpose.msra.mxu0 0.0
    %201 = vmatpush.xpose.msra.mxu0 0.0
    %202 = vmatpush.xpose.msra.mxu0 0.0
    %203 = vmatpush.xpose.msra.mxu0 0.0
    %204 = vmatpush.xpose.msra.mxu0 0.0
    %205 = vmatpush.xpose.msra.mxu0 0.0
    %206 = vmatpush.xpose.msra.mxu0 0.0
    %207 = vmatpush.xpose.msra.mxu0 0.0
    %208 = vmatpush.xpose.msra.mxu0 0.0
    %209 = vmatpush.xpose.msra.mxu0 0.0
    %210 = vmatpush.xpose.msra.mxu0 0.0
    %211 = vmatpush.xpose.msra.mxu0 0.0
    %212 = vmatpush.xpose.msra.mxu0 %v196
    %213 = vmatpush.xpose.msra.mxu0 %v194
    %214 = vmatmul.f32.gmra.mxu0 %v190
    %v215 = vpop.f32.mrf.mxu0
    %v216 = vadd.f32 0.0, %v215
    %217 = vmatmul.f32.gmra.mxu0 %v192
    %v218 = vpop.f32.mrf.mxu0
    %v219 = vadd.f32 0.0, %v218
    %220 = vdwg.mxu0
    %v221 = vmul.f32 %v216, 0.35355338
    %v222 = vmul.f32 %v219, 0.35355338
    %v223 = vadd.f32 %v221, %v45
    %v224 = vadd.f32 %v222, %v46
    %vm225 = vcmask 130048
    %v226 = vsel %vm225, %v223, -inf
    %227 = vmax.xlane.f32.xlu0 %v226
    %v228 = vpop.xlane.xlu0 %227
    %v229 = vsel %vm225, %v224, -inf
    %230 = vmax.xlane.f32.xlu0 %v229
    %v231 = vpop.xlane.xlu0 %230
    %v232 = vsub.f32 %v223, %v228
    %v233 = vsub.f32 %v224, %v231
    %v234 = vmul.f32 %v232, 1.442695
    %v235 = vpow.pop %v234
    %v236 = vmul.f32 %v233, 1.442695
    %v237 = vpow.pop %v236
    %v238 = vsel %vm225, %v235, 0.0
    %239 = vadd.xlane.f32.xlu0 %v238
    %v240 = vpop.xlane.xlu0 %239
    %v241 = vsel %vm225, %v237, 0.0
    %242 = vadd.xlane.f32.xlu0 %v241
    %v243 = vpop.xlane.xlu0 %242
    %v244 = vrcp.pop %v240
    %v245 = vmul.f32 %v240, %v244
    %v246 = vsub.f32 1.0, %v245
    %v247 = vmul.f32 %v244, %v246
    %v248 = vadd.f32 %v244, %v247
    %vm249 = vweird.f32 %v240
    %vm250 = vweird.f32 %v244
    %vm251 = vmor %vm249, %vm250
    %v252 = vsel %vm251, %v244, %v248
    %v253 = vand.u32 2147483647, %v240
    %vm254 = vcmp.eq.f32.partialorder %v253, 8.507059e+37
    %v255 = vand.u32 %v240, 2147483648
    %v256 = vor.u32 1.1754944e-38, %v255
    %v257 = vsel %vm254, %v256, %v252
    %v258 = vmul.f32 %v235, %v257
    %v259 = vrcp.pop %v243
    %v260 = vmul.f32 %v243, %v259
    %v261 = vsub.f32 1.0, %v260
    %v262 = vmul.f32 %v259, %v261
    %v263 = vadd.f32 %v259, %v262
    %vm264 = vweird.f32 %v243
    %vm265 = vweird.f32 %v259
    %vm266 = vmor %vm264, %vm265
    %v267 = vsel %vm266, %v259, %v263
    %v268 = vand.u32 2147483647, %v243
    %vm269 = vcmp.eq.f32.partialorder %v268, 8.507059e+37
    %v270 = vand.u32 %v243, 2147483648
    %v271 = vor.u32 1.1754944e-38, %v270
    %v272 = vsel %vm269, %v271, %v267
    %v273 = vmul.f32 %v237, %v272
    %274 = vrot.lane.b32.xlu0 %v178, 64
    %v275 = vpop.permute.xlu0 %274
    %276 = vrot.lane.b32.xlu0 %v181, 64
    %v277 = vpop.permute.xlu0 %276
    %v281 = vsel %vm225, %v258, 0
    %v284 = vsel %vm225, %v273, 0
    %286 = vmatpush.msra.mxu0 0.0
    %287 = vmatpush.msra.mxu0 0.0
    %288 = vmatpush.msra.mxu0 0.0
    %289 = vmatpush.msra.mxu0 0.0
    %290 = vmatpush.msra.mxu0 0.0
    %291 = vmatpush.msra.mxu0 0.0
    %292 = vmatpush.msra.mxu0 0.0
    %293 = vmatpush.msra.mxu0 0.0
    %294 = vmatpush.msra.mxu0 0.0
    %295 = vmatpush.msra.mxu0 0.0
    %296 = vmatpush.msra.mxu0 0.0
    %297 = vmatpush.msra.mxu0 0.0
    %298 = vmatpush.msra.mxu0 0.0
    %299 = vmatpush.msra.mxu0 0.0
    %300 = vmatpush.msra.mxu0 %v277
    %301 = vmatpush.msra.mxu0 %v275
    %302 = vmatmul.f32.gmra.mxu0 %v281
    %v303 = vpop.f32.mrf.mxu0
    %v304 = vadd.f32 0.0, %v303
    %305 = vmatmul.f32.gmra.mxu0 %v284
    %v306 = vpop.f32.mrf.mxu0
    %v307 = vadd.f32 0.0, %v306
    %308 = vdwg.mxu0
    %309 = vst.msk [vmem:[#allocation2] sm:$0xff] %vm189, %v304
    %310 = vst.msk [vmem:[#allocation2 + $0x8] sm:$0xff] %vm189, %v307
    %311 = vrot.lane.b32.xlu0 %v178, 120
    %v312 = vpop.permute.xlu0 %311
    %313 = vrot.lane.b32.xlu0 %v181, 120
    %v314 = vpop.permute.xlu0 %313
    %315 = vrot.lane.b32.xlu0 %v178, 88
    %v316 = vpop.permute.xlu0 %315
    %317 = vrot.lane.b32.xlu0 %v181, 88
    %v318 = vpop.permute.xlu0 %317
    %v319 = vsel %vm189, %v312, 0
    %v321 = vsel %vm189, %v314, 0
    %v323 = vsel %vm189, %v316, 0
    %v325 = vsel %vm189, %v318, 0
    %327 = vmatpush.xpose.msra.mxu0 0.0
    %328 = vmatpush.xpose.msra.mxu0 0.0
    %329 = vmatpush.xpose.msra.mxu0 0.0
    %330 = vmatpush.xpose.msra.mxu0 0.0
    %331 = vmatpush.xpose.msra.mxu0 0.0
    %332 = vmatpush.xpose.msra.mxu0 0.0
    %333 = vmatpush.xpose.msra.mxu0 0.0
    %334 = vmatpush.xpose.msra.mxu0 0.0
    %335 = vmatpush.xpose.msra.mxu0 0.0
    %336 = vmatpush.xpose.msra.mxu0 0.0
    %337 = vmatpush.xpose.msra.mxu0 0.0
    %338 = vmatpush.xpose.msra.mxu0 0.0
    %339 = vmatpush.xpose.msra.mxu0 0.0
    %340 = vmatpush.xpose.msra.mxu0 0.0
    %341 = vmatpush.xpose.msra.mxu0 %v325
    %342 = vmatpush.xpose.msra.mxu0 %v323
    %343 = vmatmul.f32.gmra.mxu0 %v319
    %v344 = vpop.f32.mrf.mxu0
    %v345 = vadd.f32 0.0, %v344
    %346 = vmatmul.f32.gmra.mxu0 %v321
    %v347 = vpop.f32.mrf.mxu0
    %v348 = vadd.f32 0.0, %v347
    %349 = vdwg.mxu0
    %v350 = vmul.f32 %v345, 0.35355338
    %v351 = vmul.f32 %v348, 0.35355338
    %v352 = vadd.f32 %v350, %v45
    %v353 = vadd.f32 %v351, %v46
    %v354 = vsel %vm225, %v352, -inf
    %355 = vmax.xlane.f32.xlu0 %v354
    %v356 = vpop.xlane.xlu0 %355
    %v357 = vsel %vm225, %v353, -inf
    %358 = vmax.xlane.f32.xlu0 %v357
    %v359 = vpop.xlane.xlu0 %358
    %v360 = vsub.f32 %v352, %v356
    %v361 = vsub.f32 %v353, %v359
    %v362 = vmul.f32 %v360, 1.442695
    %v363 = vpow.pop %v362
    %v364 = vmul.f32 %v361, 1.442695
    %v365 = vpow.pop %v364
    %v366 = vsel %vm225, %v363, 0.0
    %367 = vadd.xlane.f32.xlu0 %v366
    %v368 = vpop.xlane.xlu0 %367
    %v369 = vsel %vm225, %v365, 0.0
    %370 = vadd.xlane.f32.xlu0 %v369
    %v371 = vpop.xlane.xlu0 %370
    %v372 = vrcp.pop %v368
    %v373 = vmul.f32 %v368, %v372
    %v374 = vsub.f32 1.0, %v373
    %v375 = vmul.f32 %v372, %v374
    %v376 = vadd.f32 %v372, %v375
    %vm377 = vweird.f32 %v368
    %vm378 = vweird.f32 %v372
    %vm379 = vmor %vm377, %vm378
    %v380 = vsel %vm379, %v372, %v376
    %v381 = vand.u32 2147483647, %v368
    %vm382 = vcmp.eq.f32.partialorder %v381, 8.507059e+37
    %v383 = vand.u32 %v368, 2147483648
    %v384 = vor.u32 1.1754944e-38, %v383
    %v385 = vsel %vm382, %v384, %v380
    %v386 = vmul.f32 %v363, %v385
    %v387 = vrcp.pop %v371
    %v388 = vmul.f32 %v371, %v387
    %v389 = vsub.f32 1.0, %v388
    %v390 = vmul.f32 %v387, %v389
    %v391 = vadd.f32 %v387, %v390
    %vm392 = vweird.f32 %v371
    %vm393 = vweird.f32 %v387
    %vm394 = vmor %vm392, %vm393
    %v395 = vsel %vm394, %v387, %v391
    %v396 = vand.u32 2147483647, %v371
    %vm397 = vcmp.eq.f32.partialorder %v396, 8.507059e+37
    %v398 = vand.u32 %v371, 2147483648
    %v399 = vor.u32 1.1754944e-38, %v398
    %v400 = vsel %vm397, %v399, %v395
    %v401 = vmul.f32 %v365, %v400
    %402 = vrot.lane.b32.xlu0 %v178, 56
    %v403 = vpop.permute.xlu0 %402
    %404 = vrot.lane.b32.xlu0 %v181, 56
    %v405 = vpop.permute.xlu0 %404
    %v409 = vsel %vm225, %v386, 0
    %v412 = vsel %vm225, %v401, 0
    %414 = vmatpush.msra.mxu0 0.0
    %415 = vmatpush.msra.mxu0 0.0
    %416 = vmatpush.msra.mxu0 0.0
    %417 = vmatpush.msra.mxu0 0.0
    %418 = vmatpush.msra.mxu0 0.0
    %419 = vmatpush.msra.mxu0 0.0
    %420 = vmatpush.msra.mxu0 0.0
    %421 = vmatpush.msra.mxu0 0.0
    %422 = vmatpush.msra.mxu0 0.0
    %423 = vmatpush.msra.mxu0 0.0
    %424 = vmatpush.msra.mxu0 0.0
    %425 = vmatpush.msra.mxu0 0.0
    %426 = vmatpush.msra.mxu0 0.0
    %427 = vmatpush.msra.mxu0 0.0
    %428 = vmatpush.msra.mxu0 %v405
    %429 = vmatpush.msra.mxu0 %v403
    %430 = vmatmul.f32.gmra.mxu0 %v409
    %v431 = vpop.f32.mrf.mxu0
    %v432 = vadd.f32 0.0, %v431
    %433 = vmatmul.f32.gmra.mxu0 %v412
    %v434 = vpop.f32.mrf.mxu0
    %v435 = vadd.f32 0.0, %v434
    %436 = vdwg.mxu0
    %439 = vrot.lane.b32.xlu0 %v432, 8
    %v440 = vpop.permute.xlu0 %439
    %441 = vrot.lane.b32.xlu0 %v435, 8
    %v442 = vpop.permute.xlu0 %441
    %vm445 = vcmask 130112
    %446 = vst.msk [vmem:[#allocation2] sm:$0xff] %vm445, %v440
    %447 = vst.msk [vmem:[#allocation2 + $0x8] sm:$0xff] %vm445, %v442
    %448 = vrot.lane.b32.xlu0 %v178, 112
    %v449 = vpop.permute.xlu0 %448
    %450 = vrot.lane.b32.xlu0 %v181, 112
    %v451 = vpop.permute.xlu0 %450
    %452 = vrot.lane.b32.xlu0 %v178, 80
    %v453 = vpop.permute.xlu0 %452
    %454 = vrot.lane.b32.xlu0 %v181, 80
    %v455 = vpop.permute.xlu0 %454
    %v456 = vsel %vm189, %v449, 0
    %v458 = vsel %vm189, %v451, 0
    %v460 = vsel %vm189, %v453, 0
    %v462 = vsel %vm189, %v455, 0
    %464 = vmatpush.xpose.msra.mxu0 0.0
    %465 = vmatpush.xpose.msra.mxu0 0.0
    %466 = vmatpush.xpose.msra.mxu0 0.0
    %467 = vmatpush.xpose.msra.mxu0 0.0
    %468 = vmatpush.xpose.msra.mxu0 0.0
    %469 = vmatpush.xpose.msra.mxu0 0.0
    %470 = vmatpush.xpose.msra.mxu0 0.0
    %471 = vmatpush.xpose.msra.mxu0 0.0
    %472 = vmatpush.xpose.msra.mxu0 0.0
    %473 = vmatpush.xpose.msra.mxu0 0.0
    %474 = vmatpush.xpose.msra.mxu0 0.0
    %475 = vmatpush.xpose.msra.mxu0 0.0
    %476 = vmatpush.xpose.msra.mxu0 0.0
    %477 = vmatpush.xpose.msra.mxu0 0.0
    %478 = vmatpush.xpose.msra.mxu0 %v462
    %479 = vmatpush.xpose.msra.mxu0 %v460
    %480 = vmatmul.f32.gmra.mxu0 %v456
    %v481 = vpop.f32.mrf.mxu0
    %v482 = vadd.f32 0.0, %v481
    %483 = vmatmul.f32.gmra.mxu0 %v458
    %v484 = vpop.f32.mrf.mxu0
    %v485 = vadd.f32 0.0, %v484
    %486 = vdwg.mxu0
    %v487 = vmul.f32 %v482, 0.35355338
    %v488 = vmul.f32 %v485, 0.35355338
    %v489 = vadd.f32 %v487, %v45
    %v490 = vadd.f32 %v488, %v46
    %v491 = vsel %vm225, %v489, -inf
    %492 = vmax.xlane.f32.xlu0 %v491
    %v493 = vpop.xlane.xlu0 %492
    %v494 = vsel %vm225, %v490, -inf
    %495 = vmax.xlane.f32.xlu0 %v494
    %v496 = vpop.xlane.xlu0 %495
    %v497 = vsub.f32 %v489, %v493
    %v498 = vsub.f32 %v490, %v496
    %v499 = vmul.f32 %v497, 1.442695
    %v500 = vpow.pop %v499
    %v501 = vmul.f32 %v498, 1.442695
    %v502 = vpow.pop %v501
    %v503 = vsel %vm225, %v500, 0.0
    %504 = vadd.xlane.f32.xlu0 %v503
    %v505 = vpop.xlane.xlu0 %504
    %v506 = vsel %vm225, %v502, 0.0
    %507 = vadd.xlane.f32.xlu0 %v506
    %v508 = vpop.xlane.xlu0 %507
    %v509 = vrcp.pop %v505
    %v510 = vmul.f32 %v505, %v509
    %v511 = vsub.f32 1.0, %v510
    %v512 = vmul.f32 %v509, %v511
    %v513 = vadd.f32 %v509, %v512
    %vm514 = vweird.f32 %v505
    %vm515 = vweird.f32 %v509
    %vm516 = vmor %vm514, %vm515
    %v517 = vsel %vm516, %v509, %v513
    %v518 = vand.u32 2147483647, %v505
    %vm519 = vcmp.eq.f32.partialorder %v518, 8.507059e+37
    %v520 = vand.u32 %v505, 2147483648
    %v521 = vor.u32 1.1754944e-38, %v520
    %v522 = vsel %vm519, %v521, %v517
    %v523 = vmul.f32 %v500, %v522
    %v524 = vrcp.pop %v508
    %v525 = vmul.f32 %v508, %v524
    %v526 = vsub.f32 1.0, %v525
    %v527 = vmul.f32 %v524, %v526
    %v528 = vadd.f32 %v524, %v527
    %vm529 = vweird.f32 %v508
    %vm530 = vweird.f32 %v524
    %vm531 = vmor %vm529, %vm530
    %v532 = vsel %vm531, %v524, %v528
    %v533 = vand.u32 2147483647, %v508
    %vm534 = vcmp.eq.f32.partialorder %v533, 8.507059e+37
    %v535 = vand.u32 %v508, 2147483648
    %v536 = vor.u32 1.1754944e-38, %v535
    %v537 = vsel %vm534, %v536, %v532
    %v538 = vmul.f32 %v502, %v537
    %539 = vrot.lane.b32.xlu0 %v178, 48
    %v540 = vpop.permute.xlu0 %539
    %541 = vrot.lane.b32.xlu0 %v181, 48
    %v542 = vpop.permute.xlu0 %541
    %v546 = vsel %vm225, %v523, 0
    %v549 = vsel %vm225, %v538, 0
    %551 = vmatpush.msra.mxu0 0.0
    %552 = vmatpush.msra.mxu0 0.0
    %553 = vmatpush.msra.mxu0 0.0
    %554 = vmatpush.msra.mxu0 0.0
    %555 = vmatpush.msra.mxu0 0.0
    %556 = vmatpush.msra.mxu0 0.0
    %557 = vmatpush.msra.mxu0 0.0
    %558 = vmatpush.msra.mxu0 0.0
    %559 = vmatpush.msra.mxu0 0.0
    %560 = vmatpush.msra.mxu0 0.0
    %561 = vmatpush.msra.mxu0 0.0
    %562 = vmatpush.msra.mxu0 0.0
    %563 = vmatpush.msra.mxu0 0.0
    %564 = vmatpush.msra.mxu0 0.0
    %565 = vmatpush.msra.mxu0 %v542
    %566 = vmatpush.msra.mxu0 %v540
    %567 = vmatmul.f32.gmra.mxu0 %v546
    %v568 = vpop.f32.mrf.mxu0
    %v569 = vadd.f32 0.0, %v568
    %570 = vmatmul.f32.gmra.mxu0 %v549
    %v571 = vpop.f32.mrf.mxu0
    %v572 = vadd.f32 0.0, %v571
    %573 = vdwg.mxu0
    %576 = vrot.lane.b32.xlu0 %v569, 16
    %v577 = vpop.permute.xlu0 %576
    %578 = vrot.lane.b32.xlu0 %v572, 16
    %v579 = vpop.permute.xlu0 %578
    %vm582 = vcmask 195712
    %583 = vst.msk [vmem:[#allocation2] sm:$0xff] %vm582, %v577
    %584 = vst.msk [vmem:[#allocation2 + $0x8] sm:$0xff] %vm582, %v579
    %585 = vrot.lane.b32.xlu0 %v178, 104
    %v586 = vpop.permute.xlu0 %585
    %587 = vrot.lane.b32.xlu0 %v181, 104
    %v588 = vpop.permute.xlu0 %587
    %589 = vrot.lane.b32.xlu0 %v178, 72
    %v590 = vpop.permute.xlu0 %589
    %591 = vrot.lane.b32.xlu0 %v181, 72
    %v592 = vpop.permute.xlu0 %591
    %v593 = vsel %vm189, %v586, 0
    %v595 = vsel %vm189, %v588, 0
    %v597 = vsel %vm189, %v590, 0
    %v599 = vsel %vm189, %v592, 0
    %601 = vmatpush.xpose.msra.mxu0 0.0
    %602 = vmatpush.xpose.msra.mxu0 0.0
    %603 = vmatpush.xpose.msra.mxu0 0.0
    %604 = vmatpush.xpose.msra.mxu0 0.0
    %605 = vmatpush.xpose.msra.mxu0 0.0
    %606 = vmatpush.xpose.msra.mxu0 0.0
    %607 = vmatpush.xpose.msra.mxu0 0.0
    %608 = vmatpush.xpose.msra.mxu0 0.0
    %609 = vmatpush.xpose.msra.mxu0 0.0
    %610 = vmatpush.xpose.msra.mxu0 0.0
    %611 = vmatpush.xpose.msra.mxu0 0.0
    %612 = vmatpush.xpose.msra.mxu0 0.0
    %613 = vmatpush.xpose.msra.mxu0 0.0
    %614 = vmatpush.xpose.msra.mxu0 0.0
    %615 = vmatpush.xpose.msra.mxu0 %v599
    %616 = vmatpush.xpose.msra.mxu0 %v597
    %617 = vmatmul.f32.gmra.mxu0 %v593
    %v618 = vpop.f32.mrf.mxu0
    %v619 = vadd.f32 0.0, %v618
    %620 = vmatmul.f32.gmra.mxu0 %v595
    %v621 = vpop.f32.mrf.mxu0
    %v622 = vadd.f32 0.0, %v621
    %623 = vdwg.mxu0
    %v624 = vmul.f32 %v619, 0.35355338
    %v625 = vmul.f32 %v622, 0.35355338
    %v626 = vadd.f32 %v624, %v45
    %v627 = vadd.f32 %v625, %v46
    %v628 = vsel %vm225, %v626, -inf
    %629 = vmax.xlane.f32.xlu0 %v628
    %v630 = vpop.xlane.xlu0 %629
    %v631 = vsel %vm225, %v627, -inf
    %632 = vmax.xlane.f32.xlu0 %v631
    %v633 = vpop.xlane.xlu0 %632
    %v634 = vsub.f32 %v626, %v630
    %v635 = vsub.f32 %v627, %v633
    %v636 = vmul.f32 %v634, 1.442695
    %v637 = vpow.pop %v636
    %v638 = vmul.f32 %v635, 1.442695
    %v639 = vpow.pop %v638
    %v640 = vsel %vm225, %v637, 0.0
    %641 = vadd.xlane.f32.xlu0 %v640
    %v642 = vpop.xlane.xlu0 %641
    %v643 = vsel %vm225, %v639, 0.0
    %644 = vadd.xlane.f32.xlu0 %v643
    %v645 = vpop.xlane.xlu0 %644
    %v646 = vrcp.pop %v642
    %v647 = vmul.f32 %v642, %v646
    %v648 = vsub.f32 1.0, %v647
    %v649 = vmul.f32 %v646, %v648
    %v650 = vadd.f32 %v646, %v649
    %vm651 = vweird.f32 %v642
    %vm652 = vweird.f32 %v646
    %vm653 = vmor %vm651, %vm652
    %v654 = vsel %vm653, %v646, %v650
    %v655 = vand.u32 2147483647, %v642
    %vm656 = vcmp.eq.f32.partialorder %v655, 8.507059e+37
    %v657 = vand.u32 %v642, 2147483648
    %v658 = vor.u32 1.1754944e-38, %v657
    %v659 = vsel %vm656, %v658, %v654
    %v660 = vmul.f32 %v637, %v659
    %v661 = vrcp.pop %v645
    %v662 = vmul.f32 %v645, %v661
    %v663 = vsub.f32 1.0, %v662
    %v664 = vmul.f32 %v661, %v663
    %v665 = vadd.f32 %v661, %v664
    %vm666 = vweird.f32 %v645
    %vm667 = vweird.f32 %v661
    %vm668 = vmor %vm666, %vm667
    %v669 = vsel %vm668, %v661, %v665
    %v670 = vand.u32 2147483647, %v645
    %vm671 = vcmp.eq.f32.partialorder %v670, 8.507059e+37
    %v672 = vand.u32 %v645, 2147483648
    %v673 = vor.u32 1.1754944e-38, %v672
    %v674 = vsel %vm671, %v673, %v669
    %v675 = vmul.f32 %v639, %v674
    %676 = vrot.lane.b32.xlu0 %v178, 40
    %v677 = vpop.permute.xlu0 %676
    %678 = vrot.lane.b32.xlu0 %v181, 40
    %v679 = vpop.permute.xlu0 %678
    %v683 = vsel %vm225, %v660, 0
    %v686 = vsel %vm225, %v675, 0
    %688 = vmatpush.msra.mxu0 0.0
    %689 = vmatpush.msra.mxu0 0.0
    %690 = vmatpush.msra.mxu0 0.0
    %691 = vmatpush.msra.mxu0 0.0
    %692 = vmatpush.msra.mxu0 0.0
    %693 = vmatpush.msra.mxu0 0.0
    %694 = vmatpush.msra.mxu0 0.0
    %695 = vmatpush.msra.mxu0 0.0
    %696 = vmatpush.msra.mxu0 0.0
    %697 = vmatpush.msra.mxu0 0.0
    %698 = vmatpush.msra.mxu0 0.0
    %699 = vmatpush.msra.mxu0 0.0
    %700 = vmatpush.msra.mxu0 0.0
    %701 = vmatpush.msra.mxu0 0.0
    %702 = vmatpush.msra.mxu0 %v679
    %703 = vmatpush.msra.mxu0 %v677
    %704 = vmatmul.f32.gmra.mxu0 %v683
    %v705 = vpop.f32.mrf.mxu0
    %v706 = vadd.f32 0.0, %v705
    %707 = vmatmul.f32.gmra.mxu0 %v686
    %v708 = vpop.f32.mrf.mxu0
    %v709 = vadd.f32 0.0, %v708
    %710 = vdwg.mxu0
    %713 = vrot.lane.b32.xlu0 %v706, 24
    %v714 = vpop.permute.xlu0 %713
    %715 = vrot.lane.b32.xlu0 %v709, 24
    %v716 = vpop.permute.xlu0 %715
    %vm719 = vcmask 261312
    %720 = vst.msk [vmem:[#allocation2] sm:$0xff] %vm719, %v714
    %721 = vst.msk [vmem:[#allocation2 + $0x8] sm:$0xff] %vm719, %v716
    %v722 = vld [vmem:[#allocation2] sm:$0xff]
    %v723 = vld [vmem:[#allocation2 + $0x8] sm:$0xff]
    %v724 = vld [vmem:[#allocation3 + $0xa8] sm:$0xff]
    %v725 = vld [vmem:[#allocation3 + $0xb0] sm:$0xff]
    %v726 = vld [vmem:[#allocation3 + $0xb8] sm:$0xff]
    %v727 = vld [vmem:[#allocation3 + $0xc0] sm:$0xff]
    %v728 = vld [vmem:[#allocation3 + $0xc8] sm:$0x1]
    %v729 = vperm.slane %v728, 0
    %v731 = vsel %vm90, %v722, 0
    %v734 = vsel %vm90, %v723, 0
    %736 = vmatpush.msra.mxu0 0.0
    %737 = vmatpush.msra.mxu0 0.0
    %738 = vmatpush.msra.mxu0 0.0
    %739 = vmatpush.msra.mxu0 0.0
    %740 = vmatpush.msra.mxu0 0.0
    %741 = vmatpush.msra.mxu0 0.0
    %742 = vmatpush.msra.mxu0 0.0
    %743 = vmatpush.msra.mxu0 0.0
    %744 = vmatpush.msra.mxu0 0.0
    %745 = vmatpush.msra.mxu0 0.0
    %746 = vmatpush.msra.mxu0 0.0
    %747 = vmatpush.msra.mxu0 0.0
    %748 = vmatpush.msra.mxu0 %v727
    %749 = vmatpush.msra.mxu0 %v726
    %750 = vmatpush.msra.mxu0 %v725
    %751 = vmatpush.msra.mxu0 %v724
    %752 = vmatmul.f32.gmra.mxu0 %v731
    %v753 = vpop.f32.mrf.mxu0
    %v754 = vadd.f32 %v729, %v753
    %755 = vmatmul.f32.gmra.mxu0 %v734
    %v756 = vpop.f32.mrf.mxu0
    %v757 = vadd.f32 %v729, %v756
    %758 = vdwg.mxu0
    %v759 = vadd.f32 %v146, %v754
    %v760 = vadd.f32 %v147, %v757
    %v761 = vld [vmem:[#allocation3 + $0xd0] sm:$0x3]
    %v762 = vsel %vm90, %v759, 0.0
    %763 = vadd.xlane.f32.xlu0 %v762
    %v764 = vpop.xlane.xlu0 %763
    %v765 = vsel %vm90, %v760, 0.0
    %766 = vadd.xlane.f32.xlu0 %v765
    %v767 = vpop.xlane.xlu0 %766
    %v768 = vmul.f32 %v764, %v103
    %v769 = vmul.f32 %v767, %v103
    %v770 = vsub.f32 %v759, %v768
    %v771 = vsub.f32 %v760, %v769
    %v772 = vmul.f32 %v770, %v770
    %v773 = vmul.f32 %v771, %v771
    %v774 = vsel %vm90, %v772, 0.0
    %775 = vadd.xlane.f32.xlu0 %v774
    %v776 = vpop.xlane.xlu0 %775
    %v777 = vsel %vm90, %v773, 0.0
    %778 = vadd.xlane.f32.xlu0 %v777
    %v779 = vpop.xlane.xlu0 %778
    %v780 = vmul.f32 %v776, %v103
    %v781 = vmul.f32 %v779, %v103
    %v782 = vadd.f32 %v780, 1e-12
    %v783 = vadd.f32 %v781, 1e-12
    %v784 = vrsqrt.pop %v782
    %v785 = vmul.f32 %v784, %v782
    %v786 = vmul.f32 %v785, %v784
    %v787 = vmul.f32 0.5, %v786
    %v788 = vsub.f32 1.5, %v787
    %v789 = vmul.f32 %v784, %v788
    %vm790 = vweird.f32 %v782
    %vm791 = vweird.f32 %v784
    %vm792 = vmor %vm790, %vm791
    %v793 = vsel %vm792, %v784, %v789
    %v794 = vrsqrt.pop %v783
    %v795 = vmul.f32 %v794, %v783
    %v796 = vmul.f32 %v795, %v794
    %v797 = vmul.f32 0.5, %v796
    %v798 = vsub.f32 1.5, %v797
    %v799 = vmul.f32 %v794, %v798
    %vm800 = vweird.f32 %v783
    %vm801 = vweird.f32 %v794
    %vm802 = vmor %vm800, %vm801
    %v803 = vsel %vm802, %v794, %v799
    %v804 = vmul.f32 %v770, %v793
    %v805 = vmul.f32 %v771, %v803
    %v806 = vperm.slane %v761, 0
    %v807 = vmul.f32 %v804, %v806
    %v808 = vmul.f32 %v805, %v806
    %v809 = vperm.slane %v761, 1
    %v810 = vadd.f32 %v807, %v809
    %v811 = vadd.f32 %v808, %v809
    %v812 = vld [vmem:[%s2] sm:$0xff]
    %v813 = vld [vmem:[%s2 + $0x8] sm:$0xff]
    %v814 = vld [vmem:[%s2 + $0x10] sm:$0xff]
    %v815 = vld [vmem:[%s2 + $0x18] sm:$0xff]
    %v816 = vld [vmem:[%s2 + $0x20] sm:$0x1]
    %v817 = vperm.slane %v816, 0
    %v819 = vsel %vm90, %v810, 0
    %v822 = vsel %vm90, %v811, 0
    %824 = vmatpush.msra.mxu0 0.0
    %825 = vmatpush.msra.mxu0 0.0
    %826 = vmatpush.msra.mxu0 0.0
    %827 = vmatpush.msra.mxu0 0.0
    %828 = vmatpush.msra.mxu0 0.0
    %829 = vmatpush.msra.mxu0 0.0
    %830 = vmatpush.msra.mxu0 0.0
    %831 = vmatpush.msra.mxu0 0.0
    %832 = vmatpush.msra.mxu0 0.0
    %833 = vmatpush.msra.mxu0 0.0
    %834 = vmatpush.msra.mxu0 0.0
    %835 = vmatpush.msra.mxu0 0.0
    %836 = vmatpush.msra.mxu0 %v815
    %837 = vmatpush.msra.mxu0 %v814
    %838 = vmatpush.msra.mxu0 %v813
    %839 = vmatpush.msra.mxu0 %v812
    %840 = vmatmul.f32.gmra.mxu0 %v819
    %v841 = vpop.f32.mrf.mxu0
    %v842 = vadd.f32 %v817, %v841
    %843 = vmatmul.f32.gmra.mxu0 %v822
    %v844 = vpop.f32.mrf.mxu0
    %v845 = vadd.f32 %v817, %v844
    %846 = vdwg.mxu0
    %v847 = vmul.f32 %v842, %v842
    %v848 = vmul.f32 %v845, %v845
    %v849 = vmul.f32 %v842, %v847
    %v850 = vmul.f32 %v845, %v848
    %v851 = vmul.f32 %v849, 0.044715
    %v852 = vmul.f32 %v850, 0.044715
    %v853 = vadd.f32 %v842, %v851
    %v854 = vadd.f32 %v845, %v852
    %v855 = vmul.f32 %v853, 0.7978846
    %v856 = vmul.f32 %v854, 0.7978846
    %v857 = vtanh.pop %v855
    %v858 = vtanh.pop %v856
    %v859 = vadd.f32 %v857, 1.0
    %v860 = vadd.f32 %v858, 1.0
    %v861 = vmul.f32 %v859, 0.5
    %v862 = vmul.f32 %v860, 0.5
    %v863 = vmul.f32 %v842, %v861
    %v864 = vmul.f32 %v845, %v862
    %v865 = vld [vmem:[#allocation3 + $0xd8] sm:$0xff]
    %v866 = vld [vmem:[#allocation3 + $0xe0] sm:$0xff]
    %v867 = vld [vmem:[#allocation3 + $0xe8] sm:$0xff]
    %v868 = vld [vmem:[#allocation3 + $0xf0] sm:$0xff]
    %v869 = vld [vmem:[#allocation3 + $0xf8] sm:$0xff]
    %v870 = vld [vmem:[#allocation3 + $0x100] sm:$0xff]
    %v871 = vld [vmem:[#allocation3 + $0x108] sm:$0xff]
    %v872 = vld [vmem:[#allocation3 + $0x110] sm:$0xff]
    %v873 = vld [vmem:[#allocation3 + $0x118] sm:$0x1]
    %v874 = vperm.slane %v873, 0
    %v876 = vsel %vm59, %v863, 0
    %v879 = vsel %vm59, %v864, 0
    %881 = vmatpush.msra.mxu0 0.0
    %882 = vmatpush.msra.mxu0 0.0
    %883 = vmatpush.msra.mxu0 0.0
    %884 = vmatpush.msra.mxu0 0.0
    %885 = vmatpush.msra.mxu0 0.0
    %886 = vmatpush.msra.mxu0 0.0
    %887 = vmatpush.msra.mxu0 0.0
    %888 = vmatpush.msra.mxu0 0.0
    %889 = vmatpush.msra.mxu0 %v872
    %890 = vmatpush.msra.mxu0 %v871
    %891 = vmatpush.msra.mxu0 %v870
    %892 = vmatpush.msra.mxu0 %v869
    %893 = vmatpush.msra.mxu0 %v868
    %894 = vmatpush.msra.mxu0 %v867
    %895 = vmatpush.msra.mxu0 %v866
    %896 = vmatpush.msra.mxu0 %v865
    %897 = vmatmul.f32.gmra.mxu0 %v876
    %v898 = vpop.f32.mrf.mxu0
    %v899 = vadd.f32 %v874, %v898
    %900 = vmatmul.f32.gmra.mxu0 %v879
    %v901 = vpop.f32.mrf.mxu0
    %v902 = vadd.f32 %v874, %v901
    %903 = vdwg.mxu0
    %v904 = vadd.f32 %v810, %v899
    %v905 = vadd.f32 %v811, %v902
    %v906 = vld [vmem:[#allocation3 + $0x120] sm:$0x3]
    %v907 = vsel %vm90, %v904, 0.0
    %908 = vadd.xlane.f32.xlu0 %v907
    %v909 = vpop.xlane.xlu0 %908
    %v910 = vsel %vm90, %v905, 0.0
    %911 = vadd.xlane.f32.xlu0 %v910
    %v912 = vpop.xlane.xlu0 %911
    %v913 = vmul.f32 %v909, %v103
    %v914 = vmul.f32 %v912, %v103
    %v915 = vsub.f32 %v904, %v913
    %v916 = vsub.f32 %v905, %v914
    %v917 = vmul.f32 %v915, %v915
    %v918 = vmul.f32 %v916, %v916
    %v919 = vsel %vm90, %v917, 0.0
    %920 = vadd.xlane.f32.xlu0 %v919
    %v921 = vpop.xlane.xlu0 %920
    %v922 = vsel %vm90, %v918, 0.0
    %923 = vadd.xlane.f32.xlu0 %v922
    %v924 = vpop.xlane.xlu0 %923
    %v925 = vmul.f32 %v921, %v103
    %v926 = vmul.f32 %v924, %v103
    %v927 = vadd.f32 %v925, 1e-12
    %v928 = vadd.f32 %v926, 1e-12
    %v929 = vrsqrt.pop %v927
    %v930 = vmul.f32 %v929, %v927
    %v931 = vmul.f32 %v930, %v929
    %v932 = vmul.f32 0.5, %v931
    %v933 = vsub.f32 1.5, %v932
    %v934 = vmul.f32 %v929, %v933
    %vm935 = vweird.f32 %v927
    %vm936 = vweird.f32 %v929
    %vm937 = vmor %vm935, %vm936
    %v938 = vsel %vm937, %v929, %v934
    %v939 = vrsqrt.pop %v928
    %v940 = vmul.f32 %v939, %v928
    %v941 = vmul.f32 %v940, %v939
    %v942 = vmul.f32 0.5, %v941
    %v943 = vsub.f32 1.5, %v942
    %v944 = vmul.f32 %v939, %v943
    %vm945 = vweird.f32 %v928
    %vm946 = vweird.f32 %v939
    %vm947 = vmor %vm945, %vm946
    %v948 = vsel %vm947, %v939, %v944
    %v949 = vmul.f32 %v915, %v938
    %v950 = vmul.f32 %v916, %v948
    %v951 = vperm.slane %v906, 0
    %v952 = vmul.f32 %v949, %v951
    %v953 = vmul.f32 %v950, %v951
    %v954 = vperm.slane %v906, 1
    %v955 = vadd.f32 %v952, %v954
    %v956 = vadd.f32 %v953, %v954
    %v957 = vld [vmem:[%s0 + $0x20] sm:$0xff]
    %v958 = vld [vmem:[%s0 + $0x28] sm:$0xff]
    %v959 = vld [vmem:[%s0 + $0x30] sm:$0xff]
    %v960 = vld [vmem:[%s0 + $0x38] sm:$0xff]
    %v961 = vld [vmem:[#allocation3 + $0x40] sm:$0xff]
    %v962 = vld [vmem:[#allocation3 + $0x48] sm:$0xff]
    %v963 = vld [vmem:[#allocation3 + $0x50] sm:$0xff]
    %v964 = vld [vmem:[#allocation3 + $0x58] sm:$0xff]
    %v965 = vld [vmem:[#allocation3 + $0x60] sm:$0xff]
    %v966 = vld [vmem:[#allocation3 + $0x68] sm:$0xff]
    %v967 = vld [vmem:[#allocation3 + $0x70] sm:$0xff]
    %v968 = vld [vmem:[#allocation3 + $0x78] sm:$0xff]
    %v970 = vsel %vm59, %v959, 0
    %v973 = vsel %vm59, %v960, 0
    %975 = vmatpush.msra.mxu0 0.0
    %976 = vmatpush.msra.mxu0 0.0
    %977 = vmatpush.msra.mxu0 0.0
    %978 = vmatpush.msra.mxu0 0.0
    %979 = vmatpush.msra.mxu0 0.0
    %980 = vmatpush.msra.mxu0 0.0
    %981 = vmatpush.msra.mxu0 0.0
    %982 = vmatpush.msra.mxu0 0.0
    %983 = vmatpush.msra.mxu0 %v968
    %984 = vmatpush.msra.mxu0 %v967
    %985 = vmatpush.msra.mxu0 %v966
    %986 = vmatpush.msra.mxu0 %v965
    %987 = vmatpush.msra.mxu0 %v964
    %988 = vmatpush.msra.mxu0 %v963
    %989 = vmatpush.msra.mxu0 %v962
    %990 = vmatpush.msra.mxu0 %v961
    %991 = vmatmul.f32.gmra.mxu0 %v970
    %v992 = vpop.f32.mrf.mxu0
    %v993 = vadd.f32 0.0, %v992
    %994 = vmatmul.f32.gmra.mxu0 %v973
    %v995 = vpop.f32.mrf.mxu0
    %v996 = vadd.f32 0.0, %v995
    %997 = vdwg.mxu0
    %v999 = vsel %vm59, %v957, 0
    %v1002 = vsel %vm59, %v958, 0
    %1004 = vmatpush.msra.mxu0 0.0
    %1005 = vmatpush.msra.mxu0 0.0
    %1006 = vmatpush.msra.mxu0 0.0
    %1007 = vmatpush.msra.mxu0 0.0
    %1008 = vmatpush.msra.mxu0 0.0
    %1009 = vmatpush.msra.mxu0 0.0
    %1010 = vmatpush.msra.mxu0 0.0
    %1011 = vmatpush.msra.mxu0 0.0
    %1012 = vmatpush.msra.mxu0 %v44
    %1013 = vmatpush.msra.mxu0 %v43
    %1014 = vmatpush.msra.mxu0 %v42
    %1015 = vmatpush.msra.mxu0 %v41
    %1016 = vmatpush.msra.mxu0 %v40
    %1017 = vmatpush.msra.mxu0 %v39
    %1018 = vmatpush.msra.mxu0 %v38
    %1019 = vmatpush.msra.mxu0 %v37
    %1020 = vmatmul.f32.gmra.mxu0 %v999
    %v1021 = vpop.f32.mrf.mxu0
    %v1022 = vadd.f32 %v993, %v1021
    %1023 = vmatmul.f32.gmra.mxu0 %v1002
    %v1024 = vpop.f32.mrf.mxu0
    %v1025 = vadd.f32 %v996, %v1024
    %1026 = vdwg.mxu0
    %v1027 = vld [vmem:[#allocation3 + $0x128] sm:$0x3]
    %v1028 = vsel %vm90, %v1022, 0.0
    %1029 = vadd.xlane.f32.xlu0 %v1028
    %v1030 = vpop.xlane.xlu0 %1029
    %v1031 = vsel %vm90, %v1025, 0.0
    %1032 = vadd.xlane.f32.xlu0 %v1031
    %v1033 = vpop.xlane.xlu0 %1032
    %v1034 = vmul.f32 %v1030, %v103
    %v1035 = vmul.f32 %v1033, %v103
    %v1036 = vsub.f32 %v1022, %v1034
    %v1037 = vsub.f32 %v1025, %v1035
    %v1038 = vmul.f32 %v1036, %v1036
    %v1039 = vmul.f32 %v1037, %v1037
    %v1040 = vsel %vm90, %v1038, 0.0
    %1041 = vadd.xlane.f32.xlu0 %v1040
    %v1042 = vpop.xlane.xlu0 %1041
    %v1043 = vsel %vm90, %v1039, 0.0
    %1044 = vadd.xlane.f32.xlu0 %v1043
    %v1045 = vpop.xlane.xlu0 %1044
    %v1046 = vmul.f32 %v1042, %v103
    %v1047 = vmul.f32 %v1045, %v103
    %v1048 = vadd.f32 %v1046, 1e-12
    %v1049 = vadd.f32 %v1047, 1e-12
    %v1050 = vrsqrt.pop %v1048
    %v1051 = vmul.f32 %v1050, %v1048
    %v1052 = vmul.f32 %v1051, %v1050
    %v1053 = vmul.f32 0.5, %v1052
    %v1054 = vsub.f32 1.5, %v1053
    %v1055 = vmul.f32 %v1050, %v1054
    %vm1056 = vweird.f32 %v1048
    %vm1057 = vweird.f32 %v1050
    %vm1058 = vmor %vm1056, %vm1057
    %v1059 = vsel %vm1058, %v1050, %v1055
    %v1060 = vrsqrt.pop %v1049
    %v1061 = vmul.f32 %v1060, %v1049
    %v1062 = vmul.f32 %v1061, %v1060
    %v1063 = vmul.f32 0.5, %v1062
    %v1064 = vsub.f32 1.5, %v1063
    %v1065 = vmul.f32 %v1060, %v1064
    %vm1066 = vweird.f32 %v1049
    %vm1067 = vweird.f32 %v1060
    %vm1068 = vmor %vm1066, %vm1067
    %v1069 = vsel %vm1068, %v1060, %v1065
    %v1070 = vmul.f32 %v1036, %v1059
    %v1071 = vmul.f32 %v1037, %v1069
    %v1072 = vperm.slane %v1027, 0
    %v1073 = vmul.f32 %v1070, %v1072
    %v1074 = vmul.f32 %v1071, %v1072
    %v1075 = vperm.slane %v1027, 1
    %v1076 = vadd.f32 %v1073, %v1075
    %v1077 = vadd.f32 %v1074, %v1075
    %v1078 = vld [vmem:[%s3 + $0x28] sm:$0xff]
    %v1079 = vld [vmem:[%s3 + $0x30] sm:$0xff]
    %v1080 = vld [vmem:[%s3 + $0x38] sm:$0xff]
    %v1081 = vld [vmem:[%s3 + $0x40] sm:$0xff]
    %v1082 = vld [vmem:[%s3 + $0x48] sm:$0x1]
    %v1083 = vperm.slane %v1082, 0
    %v1085 = vsel %vm90, %v955, 0
    %v1088 = vsel %vm90, %v956, 0
    %1090 = vmatpush.msra.mxu0 0.0
    %1091 = vmatpush.msra.mxu0 0.0
    %1092 = vmatpush.msra.mxu0 0.0
    %1093 = vmatpush.msra.mxu0 0.0
    %1094 = vmatpush.msra.mxu0 0.0
    %1095 = vmatpush.msra.mxu0 0.0
    %1096 = vmatpush.msra.mxu0 0.0
    %1097 = vmatpush.msra.mxu0 0.0
    %1098 = vmatpush.msra.mxu0 0.0
    %1099 = vmatpush.msra.mxu0 0.0
    %1100 = vmatpush.msra.mxu0 0.0
    %1101 = vmatpush.msra.mxu0 0.0
    %1102 = vmatpush.msra.mxu0 %v1081
    %1103 = vmatpush.msra.mxu0 %v1080
    %1104 = vmatpush.msra.mxu0 %v1079
    %1105 = vmatpush.msra.mxu0 %v1078
    %1106 = vmatmul.f32.gmra.mxu0 %v1085
    %v1107 = vpop.f32.mrf.mxu0
    %v1108 = vadd.f32 %v1083, %v1107
    %1109 = vmatmul.f32.gmra.mxu0 %v1088
    %v1110 = vpop.f32.mrf.mxu0
    %v1111 = vadd.f32 %v1083, %v1110
    %1112 = vdwg.mxu0
    %v1114 = vsel %vm90, %v1076, 0
    %v1117 = vsel %vm90, %v1077, 0
    %1119 = vmatpush.msra.mxu0 0.0
    %1120 = vmatpush.msra.mxu0 0.0
    %1121 = vmatpush.msra.mxu0 0.0
    %1122 = vmatpush.msra.mxu0 0.0
    %1123 = vmatpush.msra.mxu0 0.0
    %1124 = vmatpush.msra.mxu0 0.0
    %1125 = vmatpush.msra.mxu0 0.0
    %1126 = vmatpush.msra.mxu0 0.0
    %1127 = vmatpush.msra.mxu0 0.0
    %1128 = vmatpush.msra.mxu0 0.0
    %1129 = vmatpush.msra.mxu0 0.0
    %1130 = vmatpush.msra.mxu0 0.0
    %1131 = vmatpush.msra.mxu0 %v1081
    %1132 = vmatpush.msra.mxu0 %v1080
    %1133 = vmatpush.msra.mxu0 %v1079
    %1134 = vmatpush.msra.mxu0 %v1078
    %1135 = vmatmul.f32.gmra.mxu0 %v1114
    %v1136 = vpop.f32.mrf.mxu0
    %v1137 = vadd.f32 %v1083, %v1136
    %1138 = vmatmul.f32.gmra.mxu0 %v1117
    %v1139 = vpop.f32.mrf.mxu0
    %v1140 = vadd.f32 %v1083, %v1139
    %1141 = vdwg.mxu0
    %1144 = vrot.lane.b32.xlu0 %v1137, 96
    %v1145 = vpop.permute.xlu0 %1144
    %1146 = vrot.lane.b32.xlu0 %v1140, 96
    %v1147 = vpop.permute.xlu0 %1146
    %v1149 = vsel %vm189, %v1108, 0
    %v1152 = vsel %vm189, %v1111, 0
    %v1154 = vsel %vm189, %v1145, 0
    %v1156 = vsel %vm189, %v1147, 0
    %1158 = vmatpush.xpose.msra.mxu0 0.0
    %1159 = vmatpush.xpose.msra.mxu0 0.0
    %1160 = vmatpush.xpose.msra.mxu0 0.0
    %1161 = vmatpush.xpose.msra.mxu0 0.0
    %1162 = vmatpush.xpose.msra.mxu0 0.0
    %1163 = vmatpush.xpose.msra.mxu0 0.0
    %1164 = vmatpush.xpose.msra.mxu0 0.0
    %1165 = vmatpush.xpose.msra.mxu0 0.0
    %1166 = vmatpush.xpose.msra.mxu0 0.0
    %1167 = vmatpush.xpose.msra.mxu0 0.0
    %1168 = vmatpush.xpose.msra.mxu0 0.0
    %1169 = vmatpush.xpose.msra.mxu0 0.0
    %1170 = vmatpush.xpose.msra.mxu0 0.0
    %1171 = vmatpush.xpose.msra.mxu0 0.0
    %1172 = vmatpush.xpose.msra.mxu0 %v1156
    %1173 = vmatpush.xpose.msra.mxu0 %v1154
    %1174 = vmatmul.f32.gmra.mxu0 %v1149
    %v1175 = vpop.f32.mrf.mxu0
    %v1176 = vadd.f32 0.0, %v1175
    %1177 = vmatmul.f32.gmra.mxu0 %v1152
    %v1178 = vpop.f32.mrf.mxu0
    %v1179 = vadd.f32 0.0, %v1178
    %1180 = vdwg.mxu0
    %v1181 = vmul.f32 %v1176, 0.35355338
    %v1182 = vmul.f32 %v1179, 0.35355338
    %v1183 = vadd.f32 %v1181, %v51
    %v1184 = vadd.f32 %v1182, %v52
    %v1185 = vsel %vm225, %v1183, -inf
    %1186 = vmax.xlane.f32.xlu0 %v1185
    %v1187 = vpop.xlane.xlu0 %1186
    %v1188 = vsel %vm225, %v1184, -inf
    %1189 = vmax.xlane.f32.xlu0 %v1188
    %v1190 = vpop.xlane.xlu0 %1189
    %v1191 = vsub.f32 %v1183, %v1187
    %v1192 = vsub.f32 %v1184, %v1190
    %v1193 = vmul.f32 %v1191, 1.442695
    %v1194 = vpow.pop %v1193
    %v1195 = vmul.f32 %v1192, 1.442695
    %v1196 = vpow.pop %v1195
    %v1197 = vsel %vm225, %v1194, 0.0
    %1198 = vadd.xlane.f32.xlu0 %v1197
    %v1199 = vpop.xlane.xlu0 %1198
    %v1200 = vsel %vm225, %v1196, 0.0
    %1201 = vadd.xlane.f32.xlu0 %v1200
    %v1202 = vpop.xlane.xlu0 %1201
    %v1203 = vrcp.pop %v1199
    %v1204 = vmul.f32 %v1199, %v1203
    %v1205 = vsub.f32 1.0, %v1204
    %v1206 = vmul.f32 %v1203, %v1205
    %v1207 = vadd.f32 %v1203, %v1206
    %vm1208 = vweird.f32 %v1199
    %vm1209 = vweird.f32 %v1203
    %vm1210 = vmor %vm1208, %vm1209
    %v1211 = vsel %vm1210, %v1203, %v1207
    %v1212 = vand.u32 2147483647, %v1199
    %vm1213 = vcmp.eq.f32.partialorder %v1212, 8.507059e+37
    %v1214 = vand.u32 %v1199, 2147483648
    %v1215 = vor.u32 1.1754944e-38, %v1214
    %v1216 = vsel %vm1213, %v1215, %v1211
    %v1217 = vmul.f32 %v1194, %v1216
    %v1218 = vrcp.pop %v1202
    %v1219 = vmul.f32 %v1202, %v1218
    %v1220 = vsub.f32 1.0, %v1219
    %v1221 = vmul.f32 %v1218, %v1220
    %v1222 = vadd.f32 %v1218, %v1221
    %vm1223 = vweird.f32 %v1202
    %vm1224 = vweird.f32 %v1218
    %vm1225 = vmor %vm1223, %vm1224
    %v1226 = vsel %vm1225, %v1218, %v1222
    %v1227 = vand.u32 2147483647, %v1202
    %vm1228 = vcmp.eq.f32.partialorder %v1227, 8.507059e+37
    %v1229 = vand.u32 %v1202, 2147483648
    %v1230 = vor.u32 1.1754944e-38, %v1229
    %v1231 = vsel %vm1228, %v1230, %v1226
    %v1232 = vmul.f32 %v1196, %v1231
    %1233 = vrot.lane.b32.xlu0 %v1137, 64
    %v1234 = vpop.permute.xlu0 %1233
    %1235 = vrot.lane.b32.xlu0 %v1140, 64
    %v1236 = vpop.permute.xlu0 %1235
    %v1240 = vsel %vm225, %v1217, 0
    %v1243 = vsel %vm225, %v1232, 0
    %1245 = vmatpush.msra.mxu0 0.0
    %1246 = vmatpush.msra.mxu0 0.0
    %1247 = vmatpush.msra.mxu0 0.0
    %1248 = vmatpush.msra.mxu0 0.0
    %1249 = vmatpush.msra.mxu0 0.0
    %1250 = vmatpush.msra.mxu0 0.0
    %1251 = vmatpush.msra.mxu0 0.0
    %1252 = vmatpush.msra.mxu0 0.0
    %1253 = vmatpush.msra.mxu0 0.0
    %1254 = vmatpush.msra.mxu0 0.0
    %1255 = vmatpush.msra.mxu0 0.0
    %1256 = vmatpush.msra.mxu0 0.0
    %1257 = vmatpush.msra.mxu0 0.0
    %1258 = vmatpush.msra.mxu0 0.0
    %1259 = vmatpush.msra.mxu0 %v1236
    %1260 = vmatpush.msra.mxu0 %v1234
    %1261 = vmatmul.f32.gmra.mxu0 %v1240
    %v1262 = vpop.f32.mrf.mxu0
    %v1263 = vadd.f32 0.0, %v1262
    %1264 = vmatmul.f32.gmra.mxu0 %v1243
    %v1265 = vpop.f32.mrf.mxu0
    %v1266 = vadd.f32 0.0, %v1265
    %1267 = vdwg.mxu0
    %1268 = vst.msk [vmem:[#allocation2] sm:$0xff] %vm189, %v1263
    %1269 = vst.msk [vmem:[#allocation2 + $0x8] sm:$0xff] %vm189, %v1266
    %1270 = vrot.lane.b32.xlu0 %v1108, 120
    %v1271 = vpop.permute.xlu0 %1270
    %1272 = vrot.lane.b32.xlu0 %v1111, 120
    %v1273 = vpop.permute.xlu0 %1272
    %1274 = vrot.lane.b32.xlu0 %v1137, 88
    %v1275 = vpop.permute.xlu0 %1274
    %1276 = vrot.lane.b32.xlu0 %v1140, 88
    %v1277 = vpop.permute.xlu0 %1276
    %v1278 = vsel %vm189, %v1271, 0
    %v1280 = vsel %vm189, %v1273, 0
    %v1282 = vsel %vm189, %v1275, 0
    %v1284 = vsel %vm189, %v1277, 0
    %1286 = vmatpush.xpose.msra.mxu0 0.0
    %1287 = vmatpush.xpose.msra.mxu0 0.0
    %1288 = vmatpush.xpose.msra.mxu0 0.0
    %1289 = vmatpush.xpose.msra.mxu0 0.0
    %1290 = vmatpush.xpose.msra.mxu0 0.0
    %1291 = vmatpush.xpose.msra.mxu0 0.0
    %1292 = vmatpush.xpose.msra.mxu0 0.0
    %1293 = vmatpush.xpose.msra.mxu0 0.0
    %1294 = vmatpush.xpose.msra.mxu0 0.0
    %1295 = vmatpush.xpose.msra.mxu0 0.0
    %1296 = vmatpush.xpose.msra.mxu0 0.0
    %1297 = vmatpush.xpose.msra.mxu0 0.0
    %1298 = vmatpush.xpose.msra.mxu0 0.0
    %1299 = vmatpush.xpose.msra.mxu0 0.0
    %1300 = vmatpush.xpose.msra.mxu0 %v1284
    %1301 = vmatpush.xpose.msra.mxu0 %v1282
    %1302 = vmatmul.f32.gmra.mxu0 %v1278
    %v1303 = vpop.f32.mrf.mxu0
    %v1304 = vadd.f32 0.0, %v1303
    %1305 = vmatmul.f32.gmra.mxu0 %v1280
    %v1306 = vpop.f32.mrf.mxu0
    %v1307 = vadd.f32 0.0, %v1306
    %1308 = vdwg.mxu0
    %v1309 = vmul.f32 %v1304, 0.35355338
    %v1310 = vmul.f32 %v1307, 0.35355338
    %v1311 = vadd.f32 %v1309, %v51
    %v1312 = vadd.f32 %v1310, %v52
    %v1313 = vsel %vm225, %v1311, -inf
    %1314 = vmax.xlane.f32.xlu0 %v1313
    %v1315 = vpop.xlane.xlu0 %1314
    %v1316 = vsel %vm225, %v1312, -inf
    %1317 = vmax.xlane.f32.xlu0 %v1316
    %v1318 = vpop.xlane.xlu0 %1317
    %v1319 = vsub.f32 %v1311, %v1315
    %v1320 = vsub.f32 %v1312, %v1318
    %v1321 = vmul.f32 %v1319, 1.442695
    %v1322 = vpow.pop %v1321
    %v1323 = vmul.f32 %v1320, 1.442695
    %v1324 = vpow.pop %v1323
    %v1325 = vsel %vm225, %v1322, 0.0
    %1326 = vadd.xlane.f32.xlu0 %v1325
    %v1327 = vpop.xlane.xlu0 %1326
    %v1328 = vsel %vm225, %v1324, 0.0
    %1329 = vadd.xlane.f32.xlu0 %v1328
    %v1330 = vpop.xlane.xlu0 %1329
    %v1331 = vrcp.pop %v1327
    %v1332 = vmul.f32 %v1327, %v1331
    %v1333 = vsub.f32 1.0, %v1332
    %v1334 = vmul.f32 %v1331, %v1333
    %v1335 = vadd.f32 %v1331, %v1334
    %vm1336 = vweird.f32 %v1327
    %vm1337 = vweird.f32 %v1331
    %vm1338 = vmor %vm1336, %vm1337
    %v1339 = vsel %vm1338, %v1331, %v1335
    %v1340 = vand.u32 2147483647, %v1327
    %vm1341 = vcmp.eq.f32.partialorder %v1340, 8.507059e+37
    %v1342 = vand.u32 %v1327, 2147483648
    %v1343 = vor.u32 1.1754944e-38, %v1342
    %v1344 = vsel %vm1341, %v1343, %v1339
    %v1345 = vmul.f32 %v1322, %v1344
    %v1346 = vrcp.pop %v1330
    %v1347 = vmul.f32 %v1330, %v1346
    %v1348 = vsub.f32 1.0, %v1347
    %v1349 = vmul.f32 %v1346, %v1348
    %v1350 = vadd.f32 %v1346, %v1349
    %vm1351 = vweird.f32 %v1330
    %vm1352 = vweird.f32 %v1346
    %vm1353 = vmor %vm1351, %vm1352
    %v1354 = vsel %vm1353, %v1346, %v1350
    %v1355 = vand.u32 2147483647, %v1330
    %vm1356 = vcmp.eq.f32.partialorder %v1355, 8.507059e+37
    %v1357 = vand.u32 %v1330, 2147483648
    %v1358 = vor.u32 1.1754944e-38, %v1357
    %v1359 = vsel %vm1356, %v1358, %v1354
    %v1360 = vmul.f32 %v1324, %v1359
    %1361 = vrot.lane.b32.xlu0 %v1137, 56
    %v1362 = vpop.permute.xlu0 %1361
    %1363 = vrot.lane.b32.xlu0 %v1140, 56
    %v1364 = vpop.permute.xlu0 %1363
    %v1368 = vsel %vm225, %v1345, 0
    %v1371 = vsel %vm225, %v1360, 0
    %1373 = vmatpush.msra.mxu0 0.0
    %1374 = vmatpush.msra.mxu0 0.0
    %1375 = vmatpush.msra.mxu0 0.0
    %1376 = vmatpush.msra.mxu0 0.0
    %1377 = vmatpush.msra.mxu0 0.0
    %1378 = vmatpush.msra.mxu0 0.0
    %1379 = vmatpush.msra.mxu0 0.0
    %1380 = vmatpush.msra.mxu0 0.0
    %1381 = vmatpush.msra.mxu0 0.0
    %1382 = vmatpush.msra.mxu0 0.0
    %1383 = vmatpush.msra.mxu0 0.0
    %1384 = vmatpush.msra.mxu0 0.0
    %1385 = vmatpush.msra.mxu0 0.0
    %1386 = vmatpush.msra.mxu0 0.0
    %1387 = vmatpush.msra.mxu0 %v1364
    %1388 = vmatpush.msra.mxu0 %v1362
    %1389 = vmatmul.f32.gmra.mxu0 %v1368
    %v1390 = vpop.f32.mrf.mxu0
    %v1391 = vadd.f32 0.0, %v1390
    %1392 = vmatmul.f32.gmra.mxu0 %v1371
    %v1393 = vpop.f32.mrf.mxu0
    %v1394 = vadd.f32 0.0, %v1393
    %1395 = vdwg.mxu0
    %1398 = vrot.lane.b32.xlu0 %v1391, 8
    %v1399 = vpop.permute.xlu0 %1398
    %1400 = vrot.lane.b32.xlu0 %v1394, 8
    %v1401 = vpop.permute.xlu0 %1400
    %1404 = vst.msk [vmem:[#allocation2] sm:$0xff] %vm445, %v1399
    %1405 = vst.msk [vmem:[#allocation2 + $0x8] sm:$0xff] %vm445, %v1401
    %1406 = vrot.lane.b32.xlu0 %v1108, 112
    %v1407 = vpop.permute.xlu0 %1406
    %1408 = vrot.lane.b32.xlu0 %v1111, 112
    %v1409 = vpop.permute.xlu0 %1408
    %1410 = vrot.lane.b32.xlu0 %v1137, 80
    %v1411 = vpop.permute.xlu0 %1410
    %1412 = vrot.lane.b32.xlu0 %v1140, 80
    %v1413 = vpop.permute.xlu0 %1412
    %v1414 = vsel %vm189, %v1407, 0
    %v1416 = vsel %vm189, %v1409, 0
    %v1418 = vsel %vm189, %v1411, 0
    %v1420 = vsel %vm189, %v1413, 0
    %1422 = vmatpush.xpose.msra.mxu0 0.0
    %1423 = vmatpush.xpose.msra.mxu0 0.0
    %1424 = vmatpush.xpose.msra.mxu0 0.0
    %1425 = vmatpush.xpose.msra.mxu0 0.0
    %1426 = vmatpush.xpose.msra.mxu0 0.0
    %1427 = vmatpush.xpose.msra.mxu0 0.0
    %1428 = vmatpush.xpose.msra.mxu0 0.0
    %1429 = vmatpush.xpose.msra.mxu0 0.0
    %1430 = vmatpush.xpose.msra.mxu0 0.0
    %1431 = vmatpush.xpose.msra.mxu0 0.0
    %1432 = vmatpush.xpose.msra.mxu0 0.0
    %1433 = vmatpush.xpose.msra.mxu0 0.0
    %1434 = vmatpush.xpose.msra.mxu0 0.0
    %1435 = vmatpush.xpose.msra.mxu0 0.0
    %1436 = vmatpush.xpose.msra.mxu0 %v1420
    %1437 = vmatpush.xpose.msra.mxu0 %v1418
    %1438 = vmatmul.f32.gmra.mxu0 %v1414
    %v1439 = vpop.f32.mrf.mxu0
    %v1440 = vadd.f32 0.0, %v1439
    %1441 = vmatmul.f32.gmra.mxu0 %v1416
    %v1442 = vpop.f32.mrf.mxu0
    %v1443 = vadd.f32 0.0, %v1442
    %1444 = vdwg.mxu0
    %v1445 = vmul.f32 %v1440, 0.35355338
    %v1446 = vmul.f32 %v1443, 0.35355338
    %v1447 = vadd.f32 %v1445, %v51
    %v1448 = vadd.f32 %v1446, %v52
    %v1449 = vsel %vm225, %v1447, -inf
    %1450 = vmax.xlane.f32.xlu0 %v1449
    %v1451 = vpop.xlane.xlu0 %1450
    %v1452 = vsel %vm225, %v1448, -inf
    %1453 = vmax.xlane.f32.xlu0 %v1452
    %v1454 = vpop.xlane.xlu0 %1453
    %v1455 = vsub.f32 %v1447, %v1451
    %v1456 = vsub.f32 %v1448, %v1454
    %v1457 = vmul.f32 %v1455, 1.442695
    %v1458 = vpow.pop %v1457
    %v1459 = vmul.f32 %v1456, 1.442695
    %v1460 = vpow.pop %v1459
    %v1461 = vsel %vm225, %v1458, 0.0
    %1462 = vadd.xlane.f32.xlu0 %v1461
    %v1463 = vpop.xlane.xlu0 %1462
    %v1464 = vsel %vm225, %v1460, 0.0
    %1465 = vadd.xlane.f32.xlu0 %v1464
    %v1466 = vpop.xlane.xlu0 %1465
    %v1467 = vrcp.pop %v1463
    %v1468 = vmul.f32 %v1463, %v1467
    %v1469 = vsub.f32 1.0, %v1468
    %v1470 = vmul.f32 %v1467, %v1469
    %v1471 = vadd.f32 %v1467, %v1470
    %vm1472 = vweird.f32 %v1463
    %vm1473 = vweird.f32 %v1467
    %vm1474 = vmor %vm1472, %vm1473
    %v1475 = vsel %vm1474, %v1467, %v1471
    %v1476 = vand.u32 2147483647, %v1463
    %vm1477 = vcmp.eq.f32.partialorder %v1476, 8.507059e+37
    %v1478 = vand.u32 %v1463, 2147483648
    %v1479 = vor.u32 1.1754944e-38, %v1478
    %v1480 = vsel %vm1477, %v1479, %v1475
    %v1481 = vmul.f32 %v1458, %v1480
    %v1482 = vrcp.pop %v1466
    %v1483 = vmul.f32 %v1466, %v1482
    %v1484 = vsub.f32 1.0, %v1483
    %v1485 = vmul.f32 %v1482, %v1484
    %v1486 = vadd.f32 %v1482, %v1485
    %vm1487 = vweird.f32 %v1466
    %vm1488 = vweird.f32 %v1482
    %vm1489 = vmor %vm1487, %vm1488
    %v1490 = vsel %vm1489, %v1482, %v1486
    %v1491 = vand.u32 2147483647, %v1466
    %vm1492 = vcmp.eq.f32.partialorder %v1491, 8.507059e+37
    %v1493 = vand.u32 %v1466, 2147483648
    %v1494 = vor.u32 1.1754944e-38, %v1493
    %v1495 = vsel %vm1492, %v1494, %v1490
    %v1496 = vmul.f32 %v1460, %v1495
    %1497 = vrot.lane.b32.xlu0 %v1137, 48
    %v1498 = vpop.permute.xlu0 %1497
    %1499 = vrot.lane.b32.xlu0 %v1140, 48
    %v1500 = vpop.permute.xlu0 %1499
    %v1504 = vsel %vm225, %v1481, 0
    %v1507 = vsel %vm225, %v1496, 0
    %1509 = vmatpush.msra.mxu0 0.0
    %1510 = vmatpush.msra.mxu0 0.0
    %1511 = vmatpush.msra.mxu0 0.0
    %1512 = vmatpush.msra.mxu0 0.0
    %1513 = vmatpush.msra.mxu0 0.0
    %1514 = vmatpush.msra.mxu0 0.0
    %1515 = vmatpush.msra.mxu0 0.0
    %1516 = vmatpush.msra.mxu0 0.0
    %1517 = vmatpush.msra.mxu0 0.0
    %1518 = vmatpush.msra.mxu0 0.0
    %1519 = vmatpush.msra.mxu0 0.0
    %1520 = vmatpush.msra.mxu0 0.0
    %1521 = vmatpush.msra.mxu0 0.0
    %1522 = vmatpush.msra.mxu0 0.0
    %1523 = vmatpush.msra.mxu0 %v1500
    %1524 = vmatpush.msra.mxu0 %v1498
    %1525 = vmatmul.f32.gmra.mxu0 %v1504
    %v1526 = vpop.f32.mrf.mxu0
    %v1527 = vadd.f32 0.0, %v1526
    %1528 = vmatmul.f32.gmra.mxu0 %v1507
    %v1529 = vpop.f32.mrf.mxu0
    %v1530 = vadd.f32 0.0, %v1529
    %1531 = vdwg.mxu0
    %1534 = vrot.lane.b32.xlu0 %v1527, 16
    %v1535 = vpop.permute.xlu0 %1534
    %1536 = vrot.lane.b32.xlu0 %v1530, 16
    %v1537 = vpop.permute.xlu0 %1536
    %1540 = vst.msk [vmem:[#allocation2] sm:$0xff] %vm582, %v1535
    %1541 = vst.msk [vmem:[#allocation2 + $0x8] sm:$0xff] %vm582, %v1537
    %1542 = vrot.lane.b32.xlu0 %v1108, 104
    %v1543 = vpop.permute.xlu0 %1542
    %1544 = vrot.lane.b32.xlu0 %v1111, 104
    %v1545 = vpop.permute.xlu0 %1544
    %1546 = vrot.lane.b32.xlu0 %v1137, 72
    %v1547 = vpop.permute.xlu0 %1546
    %1548 = vrot.lane.b32.xlu0 %v1140, 72
    %v1549 = vpop.permute.xlu0 %1548
    %v1550 = vsel %vm189, %v1543, 0
    %v1552 = vsel %vm189, %v1545, 0
    %v1554 = vsel %vm189, %v1547, 0
    %v1556 = vsel %vm189, %v1549, 0
    %1558 = vmatpush.xpose.msra.mxu0 0.0
    %1559 = vmatpush.xpose.msra.mxu0 0.0
    %1560 = vmatpush.xpose.msra.mxu0 0.0
    %1561 = vmatpush.xpose.msra.mxu0 0.0
    %1562 = vmatpush.xpose.msra.mxu0 0.0
    %1563 = vmatpush.xpose.msra.mxu0 0.0
    %1564 = vmatpush.xpose.msra.mxu0 0.0
    %1565 = vmatpush.xpose.msra.mxu0 0.0
    %1566 = vmatpush.xpose.msra.mxu0 0.0
    %1567 = vmatpush.xpose.msra.mxu0 0.0
    %1568 = vmatpush.xpose.msra.mxu0 0.0
    %1569 = vmatpush.xpose.msra.mxu0 0.0
    %1570 = vmatpush.xpose.msra.mxu0 0.0
    %1571 = vmatpush.xpose.msra.mxu0 0.0
    %1572 = vmatpush.xpose.msra.mxu0 %v1556
    %1573 = vmatpush.xpose.msra.mxu0 %v1554
    %1574 = vmatmul.f32.gmra.mxu0 %v1550
    %v1575 = vpop.f32.mrf.mxu0
    %v1576 = vadd.f32 0.0, %v1575
    %1577 = vmatmul.f32.gmra.mxu0 %v1552
    %v1578 = vpop.f32.mrf.mxu0
    %v1579 = vadd.f32 0.0, %v1578
    %1580 = vdwg.mxu0
    %v1581 = vmul.f32 %v1576, 0.35355338
    %v1582 = vmul.f32 %v1579, 0.35355338
    %v1583 = vadd.f32 %v1581, %v51
    %v1584 = vadd.f32 %v1582, %v52
    %v1585 = vsel %vm225, %v1583, -inf
    %1586 = vmax.xlane.f32.xlu0 %v1585
    %v1587 = vpop.xlane.xlu0 %1586
    %v1588 = vsel %vm225, %v1584, -inf
    %1589 = vmax.xlane.f32.xlu0 %v1588
    %v1590 = vpop.xlane.xlu0 %1589
    %v1591 = vsub.f32 %v1583, %v1587
    %v1592 = vsub.f32 %v1584, %v1590
    %v1593 = vmul.f32 %v1591, 1.442695
    %v1594 = vpow.pop %v1593
    %v1595 = vmul.f32 %v1592, 1.442695
    %v1596 = vpow.pop %v1595
    %v1597 = vsel %vm225, %v1594, 0.0
    %1598 = vadd.xlane.f32.xlu0 %v1597
    %v1599 = vpop.xlane.xlu0 %1598
    %v1600 = vsel %vm225, %v1596, 0.0
    %1601 = vadd.xlane.f32.xlu0 %v1600
    %v1602 = vpop.xlane.xlu0 %1601
    %v1603 = vrcp.pop %v1599
    %v1604 = vmul.f32 %v1599, %v1603
    %v1605 = vsub.f32 1.0, %v1604
    %v1606 = vmul.f32 %v1603, %v1605
    %v1607 = vadd.f32 %v1603, %v1606
    %vm1608 = vweird.f32 %v1599
    %vm1609 = vweird.f32 %v1603
    %vm1610 = vmor %vm1608, %vm1609
    %v1611 = vsel %vm1610, %v1603, %v1607
    %v1612 = vand.u32 2147483647, %v1599
    %vm1613 = vcmp.eq.f32.partialorder %v1612, 8.507059e+37
    %v1614 = vand.u32 %v1599, 2147483648
    %v1615 = vor.u32 1.1754944e-38, %v1614
    %v1616 = vsel %vm1613, %v1615, %v1611
    %v1617 = vmul.f32 %v1594, %v1616
    %v1618 = vrcp.pop %v1602
    %v1619 = vmul.f32 %v1602, %v1618
    %v1620 = vsub.f32 1.0, %v1619
    %v1621 = vmul.f32 %v1618, %v1620
    %v1622 = vadd.f32 %v1618, %v1621
    %vm1623 = vweird.f32 %v1602
    %vm1624 = vweird.f32 %v1618
    %vm1625 = vmor %vm1623, %vm1624
    %v1626 = vsel %vm1625, %v1618, %v1622
    %v1627 = vand.u32 2147483647, %v1602
    %vm1628 = vcmp.eq.f32.partialorder %v1627, 8.507059e+37
    %v1629 = vand.u32 %v1602, 2147483648
    %v1630 = vor.u32 1.1754944e-38, %v1629
    %v1631 = vsel %vm1628, %v1630, %v1626
    %v1632 = vmul.f32 %v1596, %v1631
    %1633 = vrot.lane.b32.xlu0 %v1137, 40
    %v1634 = vpop.permute.xlu0 %1633
    %1635 = vrot.lane.b32.xlu0 %v1140, 40
    %v1636 = vpop.permute.xlu0 %1635
    %v1640 = vsel %vm225, %v1617, 0
    %v1643 = vsel %vm225, %v1632, 0
    %1645 = vmatpush.msra.mxu0 0.0
    %1646 = vmatpush.msra.mxu0 0.0
    %1647 = vmatpush.msra.mxu0 0.0
    %1648 = vmatpush.msra.mxu0 0.0
    %1649 = vmatpush.msra.mxu0 0.0
    %1650 = vmatpush.msra.mxu0 0.0
    %1651 = vmatpush.msra.mxu0 0.0
    %1652 = vmatpush.msra.mxu0 0.0
    %1653 = vmatpush.msra.mxu0 0.0
    %1654 = vmatpush.msra.mxu0 0.0
    %1655 = vmatpush.msra.mxu0 0.0
    %1656 = vmatpush.msra.mxu0 0.0
    %1657 = vmatpush.msra.mxu0 0.0
    %1658 = vmatpush.msra.mxu0 0.0
    %1659 = vmatpush.msra.mxu0 %v1636
    %1660 = vmatpush.msra.mxu0 %v1634
    %1661 = vmatmul.f32.gmra.mxu0 %v1640
    %v1662 = vpop.f32.mrf.mxu0
    %v1663 = vadd.f32 0.0, %v1662
    %1664 = vmatmul.f32.gmra.mxu0 %v1643
    %v1665 = vpop.f32.mrf.mxu0
    %v1666 = vadd.f32 0.0, %v1665
    %1667 = vdwg.mxu0
    %1670 = vrot.lane.b32.xlu0 %v1663, 24
    %v1671 = vpop.permute.xlu0 %1670
    %1672 = vrot.lane.b32.xlu0 %v1666, 24
    %v1673 = vpop.permute.xlu0 %1672
    %1676 = vst.msk [vmem:[#allocation2] sm:$0xff] %vm719, %v1671
    %1677 = vst.msk [vmem:[#allocation2 + $0x8] sm:$0xff] %vm719, %v1673
    %v1678 = vld [vmem:[#allocation2] sm:$0xff]
    %v1679 = vld [vmem:[#allocation2 + $0x8] sm:$0xff]
    %v1680 = vld [vmem:[#allocation3 + $0x130] sm:$0xff]
    %v1681 = vld [vmem:[#allocation3 + $0x138] sm:$0xff]
    %v1682 = vld [vmem:[#allocation3 + $0x140] sm:$0xff]
    %v1683 = vld [vmem:[#allocation3 + $0x148] sm:$0xff]
    %v1684 = vld [vmem:[#allocation3 + $0x150] sm:$0x1]
    %v1685 = vperm.slane %v1684, 0
    %v1687 = vsel %vm90, %v1678, 0
    %v1690 = vsel %vm90, %v1679, 0
    %1692 = vmatpush.msra.mxu0 0.0
    %1693 = vmatpush.msra.mxu0 0.0
    %1694 = vmatpush.msra.mxu0 0.0
    %1695 = vmatpush.msra.mxu0 0.0
    %1696 = vmatpush.msra.mxu0 0.0
    %1697 = vmatpush.msra.mxu0 0.0
    %1698 = vmatpush.msra.mxu0 0.0
    %1699 = vmatpush.msra.mxu0 0.0
    %1700 = vmatpush.msra.mxu0 0.0
    %1701 = vmatpush.msra.mxu0 0.0
    %1702 = vmatpush.msra.mxu0 0.0
    %1703 = vmatpush.msra.mxu0 0.0
    %1704 = vmatpush.msra.mxu0 %v1683
    %1705 = vmatpush.msra.mxu0 %v1682
    %1706 = vmatpush.msra.mxu0 %v1681
    %1707 = vmatpush.msra.mxu0 %v1680
    %1708 = vmatmul.f32.gmra.mxu0 %v1687
    %v1709 = vpop.f32.mrf.mxu0
    %v1710 = vadd.f32 %v1685, %v1709
    %1711 = vmatmul.f32.gmra.mxu0 %v1690
    %v1712 = vpop.f32.mrf.mxu0
    %v1713 = vadd.f32 %v1685, %v1712
    %1714 = vdwg.mxu0
    %v1715 = vmul.f32 %v1710, %v53
    %v1716 = vmul.f32 %v1713, %v54
    %v1717 = vld [vmem:[%s0 + $0x10] sm:$0xff]
    %v1718 = vld [vmem:[%s0 + $0x18] sm:$0xff]
    %v1719 = vld [vmem:[#allocation3 + $0x90] sm:$0xff]
    %v1720 = vld [vmem:[#allocation3 + $0x98] sm:$0xff]
    %v1722 = vsel %vm59, %v1717, 0
    %v1725 = vsel %vm59, %v1718, 0
    %1727 = vmatpush.msra.mxu0 0.0
    %1728 = vmatpush.msra.mxu0 0.0
    %1729 = vmatpush.msra.mxu0 0.0
    %1730 = vmatpush.msra.mxu0 0.0
    %1731 = vmatpush.msra.mxu0 0.0
    %1732 = vmatpush.msra.mxu0 0.0
    %1733 = vmatpush.msra.mxu0 0.0
    %1734 = vmatpush.msra.mxu0 0.0
    %1735 = vmatpush.msra.mxu0 %v44
    %1736 = vmatpush.msra.mxu0 %v43
    %1737 = vmatpush.msra.mxu0 %v42
    %1738 = vmatpush.msra.mxu0 %v41
    %1739 = vmatpush.msra.mxu0 %v40
    %1740 = vmatpush.msra.mxu0 %v39
    %1741 = vmatpush.msra.mxu0 %v38
    %1742 = vmatpush.msra.mxu0 %v37
    %1743 = vmatmul.f32.gmra.mxu0 %v1722
    %v1744 = vpop.f32.mrf.mxu0
    %v1745 = vadd.f32 %v1719, %v1744
    %1746 = vmatmul.f32.gmra.mxu0 %v1725
    %v1747 = vpop.f32.mrf.mxu0
    %v1748 = vadd.f32 %v1720, %v1747
    %1749 = vdwg.mxu0
    %v1750 = vld [vmem:[#allocation3 + $0xa0] sm:$0x3]
    %v1751 = vsel %vm90, %v1745, 0.0
    %1752 = vadd.xlane.f32.xlu0 %v1751
    %v1753 = vpop.xlane.xlu0 %1752
    %v1754 = vsel %vm90, %v1748, 0.0
    %1755 = vadd.xlane.f32.xlu0 %v1754
    %v1756 = vpop.xlane.xlu0 %1755
    %v1757 = vmul.f32 %v1753, %v103
    %v1758 = vmul.f32 %v1756, %v103
    %v1759 = vsub.f32 %v1745, %v1757
    %v1760 = vsub.f32 %v1748, %v1758
    %v1761 = vmul.f32 %v1759, %v1759
    %v1762 = vmul.f32 %v1760, %v1760
    %v1763 = vsel %vm90, %v1761, 0.0
    %1764 = vadd.xlane.f32.xlu0 %v1763
    %v1765 = vpop.xlane.xlu0 %1764
    %v1766 = vsel %vm90, %v1762, 0.0
    %1767 = vadd.xlane.f32.xlu0 %v1766
    %v1768 = vpop.xlane.xlu0 %1767
    %v1769 = vmul.f32 %v1765, %v103
    %v1770 = vmul.f32 %v1768, %v103
    %v1771 = vadd.f32 %v1769, 1e-12
    %v1772 = vadd.f32 %v1770, 1e-12
    %v1773 = vrsqrt.pop %v1771
    %v1774 = vmul.f32 %v1773, %v1771
    %v1775 = vmul.f32 %v1774, %v1773
    %v1776 = vmul.f32 0.5, %v1775
    %v1777 = vsub.f32 1.5, %v1776
    %v1778 = vmul.f32 %v1773, %v1777
    %vm1779 = vweird.f32 %v1771
    %vm1780 = vweird.f32 %v1773
    %vm1781 = vmor %vm1779, %vm1780
    %v1782 = vsel %vm1781, %v1773, %v1778
    %v1783 = vrsqrt.pop %v1772
    %v1784 = vmul.f32 %v1783, %v1772
    %v1785 = vmul.f32 %v1784, %v1783
    %v1786 = vmul.f32 0.5, %v1785
    %v1787 = vsub.f32 1.5, %v1786
    %v1788 = vmul.f32 %v1783, %v1787
    %vm1789 = vweird.f32 %v1772
    %vm1790 = vweird.f32 %v1783
    %vm1791 = vmor %vm1789, %vm1790
    %v1792 = vsel %vm1791, %v1783, %v1788
    %v1793 = vmul.f32 %v1759, %v1782
    %v1794 = vmul.f32 %v1760, %v1792
    %v1795 = vperm.slane %v1750, 0
    %v1796 = vmul.f32 %v1793, %v1795
    %v1797 = vmul.f32 %v1794, %v1795
    %v1798 = vperm.slane %v1750, 1
    %v1799 = vadd.f32 %v1796, %v1798
    %v1800 = vadd.f32 %v1797, %v1798
    %v1801 = vld [vmem:[#allocation3 + $0x1f0] sm:$0x3]
    %v1802 = vsel %vm90, %v1799, 0.0
    %1803 = vadd.xlane.f32.xlu0 %v1802
    %v1804 = vpop.xlane.xlu0 %1803
    %v1805 = vsel %vm90, %v1800, 0.0
    %1806 = vadd.xlane.f32.xlu0 %v1805
    %v1807 = vpop.xlane.xlu0 %1806
    %v1808 = vmul.f32 %v1804, %v103
    %v1809 = vmul.f32 %v1807, %v103
    %v1810 = vsub.f32 %v1799, %v1808
    %v1811 = vsub.f32 %v1800, %v1809
    %v1812 = vmul.f32 %v1810, %v1810
    %v1813 = vmul.f32 %v1811, %v1811
    %v1814 = vsel %vm90, %v1812, 0.0
    %1815 = vadd.xlane.f32.xlu0 %v1814
    %v1816 = vpop.xlane.xlu0 %1815
    %v1817 = vsel %vm90, %v1813, 0.0
    %1818 = vadd.xlane.f32.xlu0 %v1817
    %v1819 = vpop.xlane.xlu0 %1818
    %v1820 = vmul.f32 %v1816, %v103
    %v1821 = vmul.f32 %v1819, %v103
    %v1822 = vadd.f32 %v1820, 1e-12
    %v1823 = vadd.f32 %v1821, 1e-12
    %v1824 = vrsqrt.pop %v1822
    %v1825 = vmul.f32 %v1824, %v1822
    %v1826 = vmul.f32 %v1825, %v1824
    %v1827 = vmul.f32 0.5, %v1826
    %v1828 = vsub.f32 1.5, %v1827
    %v1829 = vmul.f32 %v1824, %v1828
    %vm1830 = vweird.f32 %v1822
    %vm1831 = vweird.f32 %v1824
    %vm1832 = vmor %vm1830, %vm1831
    %v1833 = vsel %vm1832, %v1824, %v1829
    %v1834 = vrsqrt.pop %v1823
    %v1835 = vmul.f32 %v1834, %v1823
    %v1836 = vmul.f32 %v1835, %v1834
    %v1837 = vmul.f32 0.5, %v1836
    %v1838 = vsub.f32 1.5, %v1837
    %v1839 = vmul.f32 %v1834, %v1838
    %vm1840 = vweird.f32 %v1823
    %vm1841 = vweird.f32 %v1834
    %vm1842 = vmor %vm1840, %vm1841
    %v1843 = vsel %vm1842, %v1834, %v1839
    %v1844 = vmul.f32 %v1810, %v1833
    %v1845 = vmul.f32 %v1811, %v1843
    %v1846 = vperm.slane %v1801, 0
    %v1847 = vmul.f32 %v1844, %v1846
    %v1848 = vmul.f32 %v1845, %v1846
    %v1849 = vperm.slane %v1801, 1
    %v1850 = vadd.f32 %v1847, %v1849
    %v1851 = vadd.f32 %v1848, %v1849
    %v1852 = vld [vmem:[%s3 + $0x50] sm:$0xff]
    %v1853 = vld [vmem:[%s3 + $0x58] sm:$0xff]
    %v1854 = vld [vmem:[%s3 + $0x60] sm:$0xff]
    %v1855 = vld [vmem:[%s3 + $0x68] sm:$0xff]
    %v1856 = vld [vmem:[%s3 + $0x70] sm:$0x1]
    %v1857 = vperm.slane %v1856, 0
    %v1859 = vsel %vm90, %v1850, 0
    %v1862 = vsel %vm90, %v1851, 0
    %1864 = vmatpush.msra.mxu0 0.0
    %1865 = vmatpush.msra.mxu0 0.0
    %1866 = vmatpush.msra.mxu0 0.0
    %1867 = vmatpush.msra.mxu0 0.0
    %1868 = vmatpush.msra.mxu0 0.0
    %1869 = vmatpush.msra.mxu0 0.0
    %1870 = vmatpush.msra.mxu0 0.0
    %1871 = vmatpush.msra.mxu0 0.0
    %1872 = vmatpush.msra.mxu0 0.0
    %1873 = vmatpush.msra.mxu0 0.0
    %1874 = vmatpush.msra.mxu0 0.0
    %1875 = vmatpush.msra.mxu0 0.0
    %1876 = vmatpush.msra.mxu0 %v1855
    %1877 = vmatpush.msra.mxu0 %v1854
    %1878 = vmatpush.msra.mxu0 %v1853
    %1879 = vmatpush.msra.mxu0 %v1852
    %1880 = vmatmul.f32.gmra.mxu0 %v1859
    %v1881 = vpop.f32.mrf.mxu0
    %v1882 = vadd.f32 %v1857, %v1881
    %1883 = vmatmul.f32.gmra.mxu0 %v1862
    %v1884 = vpop.f32.mrf.mxu0
    %v1885 = vadd.f32 %v1857, %v1884
    %1886 = vdwg.mxu0
    %1889 = vrot.lane.b32.xlu0 %v1882, 96
    %v1890 = vpop.permute.xlu0 %1889
    %1891 = vrot.lane.b32.xlu0 %v1885, 96
    %v1892 = vpop.permute.xlu0 %1891
    %v1893 = vsel %vm189, %v1882, 0
    %v1895 = vsel %vm189, %v1885, 0
    %v1897 = vsel %vm189, %v1890, 0
    %v1899 = vsel %vm189, %v1892, 0
    %1901 = vmatpush.xpose.msra.mxu0 0.0
    %1902 = vmatpush.xpose.msra.mxu0 0.0
    %1903 = vmatpush.xpose.msra.mxu0 0.0
    %1904 = vmatpush.xpose.msra.mxu0 0.0
    %1905 = vmatpush.xpose.msra.mxu0 0.0
    %1906 = vmatpush.xpose.msra.mxu0 0.0
    %1907 = vmatpush.xpose.msra.mxu0 0.0
    %1908 = vmatpush.xpose.msra.mxu0 0.0
    %1909 = vmatpush.xpose.msra.mxu0 0.0
    %1910 = vmatpush.xpose.msra.mxu0 0.0
    %1911 = vmatpush.xpose.msra.mxu0 0.0
    %1912 = vmatpush.xpose.msra.mxu0 0.0
    %1913 = vmatpush.xpose.msra.mxu0 0.0
    %1914 = vmatpush.xpose.msra.mxu0 0.0
    %1915 = vmatpush.xpose.msra.mxu0 %v1899
    %1916 = vmatpush.xpose.msra.mxu0 %v1897
    %1917 = vmatmul.f32.gmra.mxu0 %v1893
    %v1918 = vpop.f32.mrf.mxu0
    %v1919 = vadd.f32 0.0, %v1918
    %1920 = vmatmul.f32.gmra.mxu0 %v1895
    %v1921 = vpop.f32.mrf.mxu0
    %v1922 = vadd.f32 0.0, %v1921
    %1923 = vdwg.mxu0
    %v1924 = vmul.f32 %v1919, 0.35355338
    %v1925 = vmul.f32 %v1922, 0.35355338
    %v1926 = vadd.f32 %v1924, %v47
    %v1927 = vadd.f32 %v1925, %v48
    %v1928 = vsel %vm225, %v1926, -inf
    %1929 = vmax.xlane.f32.xlu0 %v1928
    %v1930 = vpop.xlane.xlu0 %1929
    %v1931 = vsel %vm225, %v1927, -inf
    %1932 = vmax.xlane.f32.xlu0 %v1931
    %v1933 = vpop.xlane.xlu0 %1932
    %v1934 = vsub.f32 %v1926, %v1930
    %v1935 = vsub.f32 %v1927, %v1933
    %v1936 = vmul.f32 %v1934, 1.442695
    %v1937 = vpow.pop %v1936
    %v1938 = vmul.f32 %v1935, 1.442695
    %v1939 = vpow.pop %v1938
    %v1940 = vsel %vm225, %v1937, 0.0
    %1941 = vadd.xlane.f32.xlu0 %v1940
    %v1942 = vpop.xlane.xlu0 %1941
    %v1943 = vsel %vm225, %v1939, 0.0
    %1944 = vadd.xlane.f32.xlu0 %v1943
    %v1945 = vpop.xlane.xlu0 %1944
    %v1946 = vrcp.pop %v1942
    %v1947 = vmul.f32 %v1942, %v1946
    %v1948 = vsub.f32 1.0, %v1947
    %v1949 = vmul.f32 %v1946, %v1948
    %v1950 = vadd.f32 %v1946, %v1949
    %vm1951 = vweird.f32 %v1942
    %vm1952 = vweird.f32 %v1946
    %vm1953 = vmor %vm1951, %vm1952
    %v1954 = vsel %vm1953, %v1946, %v1950
    %v1955 = vand.u32 2147483647, %v1942
    %vm1956 = vcmp.eq.f32.partialorder %v1955, 8.507059e+37
    %v1957 = vand.u32 %v1942, 2147483648
    %v1958 = vor.u32 1.1754944e-38, %v1957
    %v1959 = vsel %vm1956, %v1958, %v1954
    %v1960 = vmul.f32 %v1937, %v1959
    %v1961 = vrcp.pop %v1945
    %v1962 = vmul.f32 %v1945, %v1961
    %v1963 = vsub.f32 1.0, %v1962
    %v1964 = vmul.f32 %v1961, %v1963
    %v1965 = vadd.f32 %v1961, %v1964
    %vm1966 = vweird.f32 %v1945
    %vm1967 = vweird.f32 %v1961
    %vm1968 = vmor %vm1966, %vm1967
    %v1969 = vsel %vm1968, %v1961, %v1965
    %v1970 = vand.u32 2147483647, %v1945
    %vm1971 = vcmp.eq.f32.partialorder %v1970, 8.507059e+37
    %v1972 = vand.u32 %v1945, 2147483648
    %v1973 = vor.u32 1.1754944e-38, %v1972
    %v1974 = vsel %vm1971, %v1973, %v1969
    %v1975 = vmul.f32 %v1939, %v1974
    %1976 = vrot.lane.b32.xlu0 %v1882, 64
    %v1977 = vpop.permute.xlu0 %1976
    %1978 = vrot.lane.b32.xlu0 %v1885, 64
    %v1979 = vpop.permute.xlu0 %1978
    %v1983 = vsel %vm225, %v1960, 0
    %v1986 = vsel %vm225, %v1975, 0
    %1988 = vmatpush.msra.mxu0 0.0
    %1989 = vmatpush.msra.mxu0 0.0
    %1990 = vmatpush.msra.mxu0 0.0
    %1991 = vmatpush.msra.mxu0 0.0
    %1992 = vmatpush.msra.mxu0 0.0
    %1993 = vmatpush.msra.mxu0 0.0
    %1994 = vmatpush.msra.mxu0 0.0
    %1995 = vmatpush.msra.mxu0 0.0
    %1996 = vmatpush.msra.mxu0 0.0
    %1997 = vmatpush.msra.mxu0 0.0
    %1998 = vmatpush.msra.mxu0 0.0
    %1999 = vmatpush.msra.mxu0 0.0
    %2000 = vmatpush.msra.mxu0 0.0
    %2001 = vmatpush.msra.mxu0 0.0
    %2002 = vmatpush.msra.mxu0 %v1979
    %2003 = vmatpush.msra.mxu0 %v1977
    %2004 = vmatmul.f32.gmra.mxu0 %v1983
    %v2005 = vpop.f32.mrf.mxu0
    %v2006 = vadd.f32 0.0, %v2005
    %2007 = vmatmul.f32.gmra.mxu0 %v1986
    %v2008 = vpop.f32.mrf.mxu0
    %v2009 = vadd.f32 0.0, %v2008
    %2010 = vdwg.mxu0
    %2011 = vst.msk [vmem:[#allocation2] sm:$0xff] %vm189, %v2006
    %2012 = vst.msk [vmem:[#allocation2 + $0x8] sm:$0xff] %vm189, %v2009
    %2013 = vrot.lane.b32.xlu0 %v1882, 120
    %v2014 = vpop.permute.xlu0 %2013
    %2015 = vrot.lane.b32.xlu0 %v1885, 120
    %v2016 = vpop.permute.xlu0 %2015
    %2017 = vrot.lane.b32.xlu0 %v1882, 88
    %v2018 = vpop.permute.xlu0 %2017
    %2019 = vrot.lane.b32.xlu0 %v1885, 88
    %v2020 = vpop.permute.xlu0 %2019
    %v2021 = vsel %vm189, %v2014, 0
    %v2023 = vsel %vm189, %v2016, 0
    %v2025 = vsel %vm189, %v2018, 0
    %v2027 = vsel %vm189, %v2020, 0
    %2029 = vmatpush.xpose.msra.mxu0 0.0
    %2030 = vmatpush.xpose.msra.mxu0 0.0
    %2031 = vmatpush.xpose.msra.mxu0 0.0
    %2032 = vmatpush.xpose.msra.mxu0 0.0
    %2033 = vmatpush.xpose.msra.mxu0 0.0
    %2034 = vmatpush.xpose.msra.mxu0 0.0
    %2035 = vmatpush.xpose.msra.mxu0 0.0
    %2036 = vmatpush.xpose.msra.mxu0 0.0
    %2037 = vmatpush.xpose.msra.mxu0 0.0
    %2038 = vmatpush.xpose.msra.mxu0 0.0
    %2039 = vmatpush.xpose.msra.mxu0 0.0
    %2040 = vmatpush.xpose.msra.mxu0 0.0
    %2041 = vmatpush.xpose.msra.mxu0 0.0
    %2042 = vmatpush.xpose.msra.mxu0 0.0
    %2043 = vmatpush.xpose.msra.mxu0 %v2027
    %2044 = vmatpush.xpose.msra.mxu0 %v2025
    %2045 = vmatmul.f32.gmra.mxu0 %v2021
    %v2046 = vpop.f32.mrf.mxu0
    %v2047 = vadd.f32 0.0, %v2046
    %2048 = vmatmul.f32.gmra.mxu0 %v2023
    %v2049 = vpop.f32.mrf.mxu0
    %v2050 = vadd.f32 0.0, %v2049
    %2051 = vdwg.mxu0
    %v2052 = vmul.f32 %v2047, 0.35355338
    %v2053 = vmul.f32 %v2050, 0.35355338
    %v2054 = vadd.f32 %v2052, %v47
    %v2055 = vadd.f32 %v2053, %v48
    %v2056 = vsel %vm225, %v2054, -inf
    %2057 = vmax.xlane.f32.xlu0 %v2056
    %v2058 = vpop.xlane.xlu0 %2057
    %v2059 = vsel %vm225, %v2055, -inf
    %2060 = vmax.xlane.f32.xlu0 %v2059
    %v2061 = vpop.xlane.xlu0 %2060
    %v2062 = vsub.f32 %v2054, %v2058
    %v2063 = vsub.f32 %v2055, %v2061
    %v2064 = vmul.f32 %v2062, 1.442695
    %v2065 = vpow.pop %v2064
    %v2066 = vmul.f32 %v2063, 1.442695
    %v2067 = vpow.pop %v2066
    %v2068 = vsel %vm225, %v2065, 0.0
    %2069 = vadd.xlane.f32.xlu0 %v2068
    %v2070 = vpop.xlane.xlu0 %2069
    %v2071 = vsel %vm225, %v2067, 0.0
    %2072 = vadd.xlane.f32.xlu0 %v2071
    %v2073 = vpop.xlane.xlu0 %2072
    %v2074 = vrcp.pop %v2070
    %v2075 = vmul.f32 %v2070, %v2074
    %v2076 = vsub.f32 1.0, %v2075
    %v2077 = vmul.f32 %v2074, %v2076
    %v2078 = vadd.f32 %v2074, %v2077
    %vm2079 = vweird.f32 %v2070
    %vm2080 = vweird.f32 %v2074
    %vm2081 = vmor %vm2079, %vm2080
    %v2082 = vsel %vm2081, %v2074, %v2078
    %v2083 = vand.u32 2147483647, %v2070
    %vm2084 = vcmp.eq.f32.partialorder %v2083, 8.507059e+37
    %v2085 = vand.u32 %v2070, 2147483648
    %v2086 = vor.u32 1.1754944e-38, %v2085
    %v2087 = vsel %vm2084, %v2086, %v2082
    %v2088 = vmul.f32 %v2065, %v2087
    %v2089 = vrcp.pop %v2073
    %v2090 = vmul.f32 %v2073, %v2089
    %v2091 = vsub.f32 1.0, %v2090
    %v2092 = vmul.f32 %v2089, %v2091
    %v2093 = vadd.f32 %v2089, %v2092
    %vm2094 = vweird.f32 %v2073
    %vm2095 = vweird.f32 %v2089
    %vm2096 = vmor %vm2094, %vm2095
    %v2097 = vsel %vm2096, %v2089, %v2093
    %v2098 = vand.u32 2147483647, %v2073
    %vm2099 = vcmp.eq.f32.partialorder %v2098, 8.507059e+37
    %v2100 = vand.u32 %v2073, 2147483648
    %v2101 = vor.u32 1.1754944e-38, %v2100
    %v2102 = vsel %vm2099, %v2101, %v2097
    %v2103 = vmul.f32 %v2067, %v2102
    %2104 = vrot.lane.b32.xlu0 %v1882, 56
    %v2105 = vpop.permute.xlu0 %2104
    %2106 = vrot.lane.b32.xlu0 %v1885, 56
    %v2107 = vpop.permute.xlu0 %2106
    %v2111 = vsel %vm225, %v2088, 0
    %v2114 = vsel %vm225, %v2103, 0
    %2116 = vmatpush.msra.mxu0 0.0
    %2117 = vmatpush.msra.mxu0 0.0
    %2118 = vmatpush.msra.mxu0 0.0
    %2119 = vmatpush.msra.mxu0 0.0
    %2120 = vmatpush.msra.mxu0 0.0
    %2121 = vmatpush.msra.mxu0 0.0
    %2122 = vmatpush.msra.mxu0 0.0
    %2123 = vmatpush.msra.mxu0 0.0
    %2124 = vmatpush.msra.mxu0 0.0
    %2125 = vmatpush.msra.mxu0 0.0
    %2126 = vmatpush.msra.mxu0 0.0
    %2127 = vmatpush.msra.mxu0 0.0
    %2128 = vmatpush.msra.mxu0 0.0
    %2129 = vmatpush.msra.mxu0 0.0
    %2130 = vmatpush.msra.mxu0 %v2107
    %2131 = vmatpush.msra.mxu0 %v2105
    %2132 = vmatmul.f32.gmra.mxu0 %v2111
    %v2133 = vpop.f32.mrf.mxu0
    %v2134 = vadd.f32 0.0, %v2133
    %2135 = vmatmul.f32.gmra.mxu0 %v2114
    %v2136 = vpop.f32.mrf.mxu0
    %v2137 = vadd.f32 0.0, %v2136
    %2138 = vdwg.mxu0
    %2141 = vrot.lane.b32.xlu0 %v2134, 8
    %v2142 = vpop.permute.xlu0 %2141
    %2143 = vrot.lane.b32.xlu0 %v2137, 8
    %v2144 = vpop.permute.xlu0 %2143
    %2147 = vst.msk [vmem:[#allocation2] sm:$0xff] %vm445, %v2142
    %2148 = vst.msk [vmem:[#allocation2 + $0x8] sm:$0xff] %vm445, %v2144
    %2149 = vrot.lane.b32.xlu0 %v1882, 112
    %v2150 = vpop.permute.xlu0 %2149
    %2151 = vrot.lane.b32.xlu0 %v1885, 112
    %v2152 = vpop.permute.xlu0 %2151
    %2153 = vrot.lane.b32.xlu0 %v1882, 80
    %v2154 = vpop.permute.xlu0 %2153
    %2155 = vrot.lane.b32.xlu0 %v1885, 80
    %v2156 = vpop.permute.xlu0 %2155
    %v2157 = vsel %vm189, %v2150, 0
    %v2159 = vsel %vm189, %v2152, 0
    %v2161 = vsel %vm189, %v2154, 0
    %v2163 = vsel %vm189, %v2156, 0
    %2165 = vmatpush.xpose.msra.mxu0 0.0
    %2166 = vmatpush.xpose.msra.mxu0 0.0
    %2167 = vmatpush.xpose.msra.mxu0 0.0
    %2168 = vmatpush.xpose.msra.mxu0 0.0
    %2169 = vmatpush.xpose.msra.mxu0 0.0
    %2170 = vmatpush.xpose.msra.mxu0 0.0
    %2171 = vmatpush.xpose.msra.mxu0 0.0
    %2172 = vmatpush.xpose.msra.mxu0 0.0
    %2173 = vmatpush.xpose.msra.mxu0 0.0
    %2174 = vmatpush.xpose.msra.mxu0 0.0
    %2175 = vmatpush.xpose.msra.mxu0 0.0
    %2176 = vmatpush.xpose.msra.mxu0 0.0
    %2177 = vmatpush.xpose.msra.mxu0 0.0
    %2178 = vmatpush.xpose.msra.mxu0 0.0
    %2179 = vmatpush.xpose.msra.mxu0 %v2163
    %2180 = vmatpush.xpose.msra.mxu0 %v2161
    %2181 = vmatmul.f32.gmra.mxu0 %v2157
    %v2182 = vpop.f32.mrf.mxu0
    %v2183 = vadd.f32 0.0, %v2182
    %2184 = vmatmul.f32.gmra.mxu0 %v2159
    %v2185 = vpop.f32.mrf.mxu0
    %v2186 = vadd.f32 0.0, %v2185
    %2187 = vdwg.mxu0
    %v2188 = vmul.f32 %v2183, 0.35355338
    %v2189 = vmul.f32 %v2186, 0.35355338
    %v2190 = vadd.f32 %v2188, %v47
    %v2191 = vadd.f32 %v2189, %v48
    %v2192 = vsel %vm225, %v2190, -inf
    %2193 = vmax.xlane.f32.xlu0 %v2192
    %v2194 = vpop.xlane.xlu0 %2193
    %v2195 = vsel %vm225, %v2191, -inf
    %2196 = vmax.xlane.f32.xlu0 %v2195
    %v2197 = vpop.xlane.xlu0 %2196
    %v2198 = vsub.f32 %v2190, %v2194
    %v2199 = vsub.f32 %v2191, %v2197
    %v2200 = vmul.f32 %v2198, 1.442695
    %v2201 = vpow.pop %v2200
    %v2202 = vmul.f32 %v2199, 1.442695
    %v2203 = vpow.pop %v2202
    %v2204 = vsel %vm225, %v2201, 0.0
    %2205 = vadd.xlane.f32.xlu0 %v2204
    %v2206 = vpop.xlane.xlu0 %2205
    %v2207 = vsel %vm225, %v2203, 0.0
    %2208 = vadd.xlane.f32.xlu0 %v2207
    %v2209 = vpop.xlane.xlu0 %2208
    %v2210 = vrcp.pop %v2206
    %v2211 = vmul.f32 %v2206, %v2210
    %v2212 = vsub.f32 1.0, %v2211
    %v2213 = vmul.f32 %v2210, %v2212
    %v2214 = vadd.f32 %v2210, %v2213
    %vm2215 = vweird.f32 %v2206
    %vm2216 = vweird.f32 %v2210
    %vm2217 = vmor %vm2215, %vm2216
    %v2218 = vsel %vm2217, %v2210, %v2214
    %v2219 = vand.u32 2147483647, %v2206
    %vm2220 = vcmp.eq.f32.partialorder %v2219, 8.507059e+37
    %v2221 = vand.u32 %v2206, 2147483648
    %v2222 = vor.u32 1.1754944e-38, %v2221
    %v2223 = vsel %vm2220, %v2222, %v2218
    %v2224 = vmul.f32 %v2201, %v2223
    %v2225 = vrcp.pop %v2209
    %v2226 = vmul.f32 %v2209, %v2225
    %v2227 = vsub.f32 1.0, %v2226
    %v2228 = vmul.f32 %v2225, %v2227
    %v2229 = vadd.f32 %v2225, %v2228
    %vm2230 = vweird.f32 %v2209
    %vm2231 = vweird.f32 %v2225
    %vm2232 = vmor %vm2230, %vm2231
    %v2233 = vsel %vm2232, %v2225, %v2229
    %v2234 = vand.u32 2147483647, %v2209
    %vm2235 = vcmp.eq.f32.partialorder %v2234, 8.507059e+37
    %v2236 = vand.u32 %v2209, 2147483648
    %v2237 = vor.u32 1.1754944e-38, %v2236
    %v2238 = vsel %vm2235, %v2237, %v2233
    %v2239 = vmul.f32 %v2203, %v2238
    %2240 = vrot.lane.b32.xlu0 %v1882, 48
    %v2241 = vpop.permute.xlu0 %2240
    %2242 = vrot.lane.b32.xlu0 %v1885, 48
    %v2243 = vpop.permute.xlu0 %2242
    %v2247 = vsel %vm225, %v2224, 0
    %v2250 = vsel %vm225, %v2239, 0
    %2252 = vmatpush.msra.mxu0 0.0
    %2253 = vmatpush.msra.mxu0 0.0
    %2254 = vmatpush.msra.mxu0 0.0
    %2255 = vmatpush.msra.mxu0 0.0
    %2256 = vmatpush.msra.mxu0 0.0
    %2257 = vmatpush.msra.mxu0 0.0
    %2258 = vmatpush.msra.mxu0 0.0
    %2259 = vmatpush.msra.mxu0 0.0
    %2260 = vmatpush.msra.mxu0 0.0
    %2261 = vmatpush.msra.mxu0 0.0
    %2262 = vmatpush.msra.mxu0 0.0
    %2263 = vmatpush.msra.mxu0 0.0
    %2264 = vmatpush.msra.mxu0 0.0
    %2265 = vmatpush.msra.mxu0 0.0
    %2266 = vmatpush.msra.mxu0 %v2243
    %2267 = vmatpush.msra.mxu0 %v2241
    %2268 = vmatmul.f32.gmra.mxu0 %v2247
    %v2269 = vpop.f32.mrf.mxu0
    %v2270 = vadd.f32 0.0, %v2269
    %2271 = vmatmul.f32.gmra.mxu0 %v2250
    %v2272 = vpop.f32.mrf.mxu0
    %v2273 = vadd.f32 0.0, %v2272
    %2274 = vdwg.mxu0
    %2277 = vrot.lane.b32.xlu0 %v2270, 16
    %v2278 = vpop.permute.xlu0 %2277
    %2279 = vrot.lane.b32.xlu0 %v2273, 16
    %v2280 = vpop.permute.xlu0 %2279
    %2283 = vst.msk [vmem:[#allocation2] sm:$0xff] %vm582, %v2278
    %2284 = vst.msk [vmem:[#allocation2 + $0x8] sm:$0xff] %vm582, %v2280
    %2285 = vrot.lane.b32.xlu0 %v1882, 104
    %v2286 = vpop.permute.xlu0 %2285
    %2287 = vrot.lane.b32.xlu0 %v1885, 104
    %v2288 = vpop.permute.xlu0 %2287
    %2289 = vrot.lane.b32.xlu0 %v1882, 72
    %v2290 = vpop.permute.xlu0 %2289
    %2291 = vrot.lane.b32.xlu0 %v1885, 72
    %v2292 = vpop.permute.xlu0 %2291
    %v2293 = vsel %vm189, %v2286, 0
    %v2295 = vsel %vm189, %v2288, 0
    %v2297 = vsel %vm189, %v2290, 0
    %v2299 = vsel %vm189, %v2292, 0
    %2301 = vmatpush.xpose.msra.mxu0 0.0
    %2302 = vmatpush.xpose.msra.mxu0 0.0
    %2303 = vmatpush.xpose.msra.mxu0 0.0
    %2304 = vmatpush.xpose.msra.mxu0 0.0
    %2305 = vmatpush.xpose.msra.mxu0 0.0
    %2306 = vmatpush.xpose.msra.mxu0 0.0
    %2307 = vmatpush.xpose.msra.mxu0 0.0
    %2308 = vmatpush.xpose.msra.mxu0 0.0
    %2309 = vmatpush.xpose.msra.mxu0 0.0
    %2310 = vmatpush.xpose.msra.mxu0 0.0
    %2311 = vmatpush.xpose.msra.mxu0 0.0
    %2312 = vmatpush.xpose.msra.mxu0 0.0
    %2313 = vmatpush.xpose.msra.mxu0 0.0
    %2314 = vmatpush.xpose.msra.mxu0 0.0
    %2315 = vmatpush.xpose.msra.mxu0 %v2299
    %2316 = vmatpush.xpose.msra.mxu0 %v2297
    %2317 = vmatmul.f32.gmra.mxu0 %v2293
    %v2318 = vpop.f32.mrf.mxu0
    %v2319 = vadd.f32 0.0, %v2318
    %2320 = vmatmul.f32.gmra.mxu0 %v2295
    %v2321 = vpop.f32.mrf.mxu0
    %v2322 = vadd.f32 0.0, %v2321
    %2323 = vdwg.mxu0
    %v2324 = vmul.f32 %v2319, 0.35355338
    %v2325 = vmul.f32 %v2322, 0.35355338
    %v2326 = vadd.f32 %v2324, %v47
    %v2327 = vadd.f32 %v2325, %v48
    %v2328 = vsel %vm225, %v2326, -inf
    %2329 = vmax.xlane.f32.xlu0 %v2328
    %v2330 = vpop.xlane.xlu0 %2329
    %v2331 = vsel %vm225, %v2327, -inf
    %2332 = vmax.xlane.f32.xlu0 %v2331
    %v2333 = vpop.xlane.xlu0 %2332
    %v2334 = vsub.f32 %v2326, %v2330
    %v2335 = vsub.f32 %v2327, %v2333
    %v2336 = vmul.f32 %v2334, 1.442695
    %v2337 = vpow.pop %v2336
    %v2338 = vmul.f32 %v2335, 1.442695
    %v2339 = vpow.pop %v2338
    %v2340 = vsel %vm225, %v2337, 0.0
    %2341 = vadd.xlane.f32.xlu0 %v2340
    %v2342 = vpop.xlane.xlu0 %2341
    %v2343 = vsel %vm225, %v2339, 0.0
    %2344 = vadd.xlane.f32.xlu0 %v2343
    %v2345 = vpop.xlane.xlu0 %2344
    %v2346 = vrcp.pop %v2342
    %v2347 = vmul.f32 %v2342, %v2346
    %v2348 = vsub.f32 1.0, %v2347
    %v2349 = vmul.f32 %v2346, %v2348
    %v2350 = vadd.f32 %v2346, %v2349
    %vm2351 = vweird.f32 %v2342
    %vm2352 = vweird.f32 %v2346
    %vm2353 = vmor %vm2351, %vm2352
    %v2354 = vsel %vm2353, %v2346, %v2350
    %v2355 = vand.u32 2147483647, %v2342
    %vm2356 = vcmp.eq.f32.partialorder %v2355, 8.507059e+37
    %v2357 = vand.u32 %v2342, 2147483648
    %v2358 = vor.u32 1.1754944e-38, %v2357
    %v2359 = vsel %vm2356, %v2358, %v2354
    %v2360 = vmul.f32 %v2337, %v2359
    %v2361 = vrcp.pop %v2345
    %v2362 = vmul.f32 %v2345, %v2361
    %v2363 = vsub.f32 1.0, %v2362
    %v2364 = vmul.f32 %v2361, %v2363
    %v2365 = vadd.f32 %v2361, %v2364
    %vm2366 = vweird.f32 %v2345
    %vm2367 = vweird.f32 %v2361
    %vm2368 = vmor %vm2366, %vm2367
    %v2369 = vsel %vm2368, %v2361, %v2365
    %v2370 = vand.u32 2147483647, %v2345
    %vm2371 = vcmp.eq.f32.partialorder %v2370, 8.507059e+37
    %v2372 = vand.u32 %v2345, 2147483648
    %v2373 = vor.u32 1.1754944e-38, %v2372
    %v2374 = vsel %vm2371, %v2373, %v2369
    %v2375 = vmul.f32 %v2339, %v2374
    %2376 = vrot.lane.b32.xlu0 %v1882, 40
    %v2377 = vpop.permute.xlu0 %2376
    %2378 = vrot.lane.b32.xlu0 %v1885, 40
    %v2379 = vpop.permute.xlu0 %2378
    %v2383 = vsel %vm225, %v2360, 0
    %v2386 = vsel %vm225, %v2375, 0
    %2388 = vmatpush.msra.mxu0 0.0
    %2389 = vmatpush.msra.mxu0 0.0
    %2390 = vmatpush.msra.mxu0 0.0
    %2391 = vmatpush.msra.mxu0 0.0
    %2392 = vmatpush.msra.mxu0 0.0
    %2393 = vmatpush.msra.mxu0 0.0
    %2394 = vmatpush.msra.mxu0 0.0
    %2395 = vmatpush.msra.mxu0 0.0
    %2396 = vmatpush.msra.mxu0 0.0
    %2397 = vmatpush.msra.mxu0 0.0
    %2398 = vmatpush.msra.mxu0 0.0
    %2399 = vmatpush.msra.mxu0 0.0
    %2400 = vmatpush.msra.mxu0 0.0
    %2401 = vmatpush.msra.mxu0 0.0
    %2402 = vmatpush.msra.mxu0 %v2379
    %2403 = vmatpush.msra.mxu0 %v2377
    %2404 = vmatmul.f32.gmra.mxu0 %v2383
    %v2405 = vpop.f32.mrf.mxu0
    %v2406 = vadd.f32 0.0, %v2405
    %2407 = vmatmul.f32.gmra.mxu0 %v2386
    %v2408 = vpop.f32.mrf.mxu0
    %v2409 = vadd.f32 0.0, %v2408
    %2410 = vdwg.mxu0
    %2413 = vrot.lane.b32.xlu0 %v2406, 24
    %v2414 = vpop.permute.xlu0 %2413
    %2415 = vrot.lane.b32.xlu0 %v2409, 24
    %v2416 = vpop.permute.xlu0 %2415
    %2419 = vst.msk [vmem:[#allocation2] sm:$0xff] %vm719, %v2414
    %2420 = vst.msk [vmem:[#allocation2 + $0x8] sm:$0xff] %vm719, %v2416
    %v2421 = vld [vmem:[#allocation2] sm:$0xff]
    %v2422 = vld [vmem:[#allocation2 + $0x8] sm:$0xff]
    %v2423 = vld [vmem:[#allocation3 + $0x158] sm:$0xff]
    %v2424 = vld [vmem:[#allocation3 + $0x160] sm:$0xff]
    %v2425 = vld [vmem:[#allocation3 + $0x168] sm:$0xff]
    %v2426 = vld [vmem:[#allocation3 + $0x170] sm:$0xff]
    %v2427 = vld [vmem:[#allocation3 + $0x178] sm:$0x1]
    %v2428 = vperm.slane %v2427, 0
    %v2430 = vsel %vm90, %v2421, 0
    %v2433 = vsel %vm90, %v2422, 0
    %2435 = vmatpush.msra.mxu0 0.0
    %2436 = vmatpush.msra.mxu0 0.0
    %2437 = vmatpush.msra.mxu0 0.0
    %2438 = vmatpush.msra.mxu0 0.0
    %2439 = vmatpush.msra.mxu0 0.0
    %2440 = vmatpush.msra.mxu0 0.0
    %2441 = vmatpush.msra.mxu0 0.0
    %2442 = vmatpush.msra.mxu0 0.0
    %2443 = vmatpush.msra.mxu0 0.0
    %2444 = vmatpush.msra.mxu0 0.0
    %2445 = vmatpush.msra.mxu0 0.0
    %2446 = vmatpush.msra.mxu0 0.0
    %2447 = vmatpush.msra.mxu0 %v2426
    %2448 = vmatpush.msra.mxu0 %v2425
    %2449 = vmatpush.msra.mxu0 %v2424
    %2450 = vmatpush.msra.mxu0 %v2423
    %2451 = vmatmul.f32.gmra.mxu0 %v2430
    %v2452 = vpop.f32.mrf.mxu0
    %v2453 = vadd.f32 %v2428, %v2452
    %2454 = vmatmul.f32.gmra.mxu0 %v2433
    %v2455 = vpop.f32.mrf.mxu0
    %v2456 = vadd.f32 %v2428, %v2455
    %2457 = vdwg.mxu0
    %v2458 = vadd.f32 %v1799, %v2453
    %v2459 = vadd.f32 %v1800, %v2456
    %v2460 = vld [vmem:[#allocation3 + $0x1f8] sm:$0x3]
    %v2461 = vsel %vm90, %v2458, 0.0
    %2462 = vadd.xlane.f32.xlu0 %v2461
    %v2463 = vpop.xlane.xlu0 %2462
    %v2464 = vsel %vm90, %v2459, 0.0
    %2465 = vadd.xlane.f32.xlu0 %v2464
    %v2466 = vpop.xlane.xlu0 %2465
    %v2467 = vmul.f32 %v2463, %v103
    %v2468 = vmul.f32 %v2466, %v103
    %v2469 = vsub.f32 %v2458, %v2467
    %v2470 = vsub.f32 %v2459, %v2468
    %v2471 = vmul.f32 %v2469, %v2469
    %v2472 = vmul.f32 %v2470, %v2470
    %v2473 = vsel %vm90, %v2471, 0.0
    %2474 = vadd.xlane.f32.xlu0 %v2473
    %v2475 = vpop.xlane.xlu0 %2474
    %v2476 = vsel %vm90, %v2472, 0.0
    %2477 = vadd.xlane.f32.xlu0 %v2476
    %v2478 = vpop.xlane.xlu0 %2477
    %v2479 = vmul.f32 %v2475, %v103
    %v2480 = vmul.f32 %v2478, %v103
    %v2481 = vadd.f32 %v2479, 1e-12
    %v2482 = vadd.f32 %v2480, 1e-12
    %v2483 = vrsqrt.pop %v2481
    %v2484 = vmul.f32 %v2483, %v2481
    %v2485 = vmul.f32 %v2484, %v2483
    %v2486 = vmul.f32 0.5, %v2485
    %v2487 = vsub.f32 1.5, %v2486
    %v2488 = vmul.f32 %v2483, %v2487
    %vm2489 = vweird.f32 %v2481
    %vm2490 = vweird.f32 %v2483
    %vm2491 = vmor %vm2489, %vm2490
    %v2492 = vsel %vm2491, %v2483, %v2488
    %v2493 = vrsqrt.pop %v2482
    %v2494 = vmul.f32 %v2493, %v2482
    %v2495 = vmul.f32 %v2494, %v2493
    %v2496 = vmul.f32 0.5, %v2495
    %v2497 = vsub.f32 1.5, %v2496
    %v2498 = vmul.f32 %v2493, %v2497
    %vm2499 = vweird.f32 %v2482
    %vm2500 = vweird.f32 %v2493
    %vm2501 = vmor %vm2499, %vm2500
    %v2502 = vsel %vm2501, %v2493, %v2498
    %v2503 = vmul.f32 %v2469, %v2492
    %v2504 = vmul.f32 %v2470, %v2502
    %v2505 = vperm.slane %v2460, 0
    %v2506 = vmul.f32 %v2503, %v2505
    %v2507 = vmul.f32 %v2504, %v2505
    %v2508 = vperm.slane %v2460, 1
    %v2509 = vadd.f32 %v2506, %v2508
    %v2510 = vadd.f32 %v2507, %v2508
    %v2511 = vld [vmem:[%s3 + $0x78] sm:$0xff]
    %v2512 = vld [vmem:[%s3 + $0x80] sm:$0xff]
    %v2513 = vld [vmem:[%s3 + $0x88] sm:$0xff]
    %v2514 = vld [vmem:[%s3 + $0x90] sm:$0xff]
    %v2515 = vld [vmem:[%s3 + $0x98] sm:$0x1]
    %v2516 = vperm.slane %v2515, 0
    %v2518 = vsel %vm90, %v2509, 0
    %v2521 = vsel %vm90, %v2510, 0
    %2523 = vmatpush.msra.mxu0 0.0
    %2524 = vmatpush.msra.mxu0 0.0
    %2525 = vmatpush.msra.mxu0 0.0
    %2526 = vmatpush.msra.mxu0 0.0
    %2527 = vmatpush.msra.mxu0 0.0
    %2528 = vmatpush.msra.mxu0 0.0
    %2529 = vmatpush.msra.mxu0 0.0
    %2530 = vmatpush.msra.mxu0 0.0
    %2531 = vmatpush.msra.mxu0 0.0
    %2532 = vmatpush.msra.mxu0 0.0
    %2533 = vmatpush.msra.mxu0 0.0
    %2534 = vmatpush.msra.mxu0 0.0
    %2535 = vmatpush.msra.mxu0 %v2514
    %2536 = vmatpush.msra.mxu0 %v2513
    %2537 = vmatpush.msra.mxu0 %v2512
    %2538 = vmatpush.msra.mxu0 %v2511
    %2539 = vmatmul.f32.gmra.mxu0 %v2518
    %v2540 = vpop.f32.mrf.mxu0
    %v2541 = vadd.f32 %v2516, %v2540
    %2542 = vmatmul.f32.gmra.mxu0 %v2521
    %v2543 = vpop.f32.mrf.mxu0
    %v2544 = vadd.f32 %v2516, %v2543
    %2545 = vdwg.mxu0
    %2546 = vmatpush.msra.mxu0 0.0
    %2547 = vmatpush.msra.mxu0 0.0
    %2548 = vmatpush.msra.mxu0 0.0
    %2549 = vmatpush.msra.mxu0 0.0
    %2550 = vmatpush.msra.mxu0 0.0
    %2551 = vmatpush.msra.mxu0 0.0
    %2552 = vmatpush.msra.mxu0 0.0
    %2553 = vmatpush.msra.mxu0 0.0
    %2554 = vmatpush.msra.mxu0 0.0
    %2555 = vmatpush.msra.mxu0 0.0
    %2556 = vmatpush.msra.mxu0 0.0
    %2557 = vmatpush.msra.mxu0 0.0
    %2558 = vmatpush.msra.mxu0 %v2514
    %2559 = vmatpush.msra.mxu0 %v2513
    %2560 = vmatpush.msra.mxu0 %v2512
    %2561 = vmatpush.msra.mxu0 %v2511
    %2562 = vmatmul.f32.gmra.mxu0 %v1085
    %v2563 = vpop.f32.mrf.mxu0
    %v2564 = vadd.f32 %v2516, %v2563
    %2565 = vmatmul.f32.gmra.mxu0 %v1088
    %v2566 = vpop.f32.mrf.mxu0
    %v2567 = vadd.f32 %v2516, %v2566
    %2568 = vdwg.mxu0
    %2571 = vrot.lane.b32.xlu0 %v2564, 96
    %v2572 = vpop.permute.xlu0 %2571
    %2573 = vrot.lane.b32.xlu0 %v2567, 96
    %v2574 = vpop.permute.xlu0 %2573
    %v2576 = vsel %vm189, %v2541, 0
    %v2579 = vsel %vm189, %v2544, 0
    %v2581 = vsel %vm189, %v2572, 0
    %v2583 = vsel %vm189, %v2574, 0
    %2585 = vmatpush.xpose.msra.mxu0 0.0
    %2586 = vmatpush.xpose.msra.mxu0 0.0
    %2587 = vmatpush.xpose.msra.mxu0 0.0
    %2588 = vmatpush.xpose.msra.mxu0 0.0
    %2589 = vmatpush.xpose.msra.mxu0 0.0
    %2590 = vmatpush.xpose.msra.mxu0 0.0
    %2591 = vmatpush.xpose.msra.mxu0 0.0
    %2592 = vmatpush.xpose.msra.mxu0 0.0
    %2593 = vmatpush.xpose.msra.mxu0 0.0
    %2594 = vmatpush.xpose.msra.mxu0 0.0
    %2595 = vmatpush.xpose.msra.mxu0 0.0
    %2596 = vmatpush.xpose.msra.mxu0 0.0
    %2597 = vmatpush.xpose.msra.mxu0 0.0
    %2598 = vmatpush.xpose.msra.mxu0 0.0
    %2599 = vmatpush.xpose.msra.mxu0 %v2583
    %2600 = vmatpush.xpose.msra.mxu0 %v2581
    %2601 = vmatmul.f32.gmra.mxu0 %v2576
    %v2602 = vpop.f32.mrf.mxu0
    %v2603 = vadd.f32 0.0, %v2602
    %2604 = vmatmul.f32.gmra.mxu0 %v2579
    %v2605 = vpop.f32.mrf.mxu0
    %v2606 = vadd.f32 0.0, %v2605
    %2607 = vdwg.mxu0
    %v2608 = vmul.f32 %v2603, 0.35355338
    %v2609 = vmul.f32 %v2606, 0.35355338
    %v2610 = vadd.f32 %v2608, %v49
    %v2611 = vadd.f32 %v2609, %v50
    %v2612 = vsel %vm225, %v2610, -inf
    %2613 = vmax.xlane.f32.xlu0 %v2612
    %v2614 = vpop.xlane.xlu0 %2613
    %v2615 = vsel %vm225, %v2611, -inf
    %2616 = vmax.xlane.f32.xlu0 %v2615
    %v2617 = vpop.xlane.xlu0 %2616
    %v2618 = vsub.f32 %v2610, %v2614
    %v2619 = vsub.f32 %v2611, %v2617
    %v2620 = vmul.f32 %v2618, 1.442695
    %v2621 = vpow.pop %v2620
    %v2622 = vmul.f32 %v2619, 1.442695
    %v2623 = vpow.pop %v2622
    %v2624 = vsel %vm225, %v2621, 0.0
    %2625 = vadd.xlane.f32.xlu0 %v2624
    %v2626 = vpop.xlane.xlu0 %2625
    %v2627 = vsel %vm225, %v2623, 0.0
    %2628 = vadd.xlane.f32.xlu0 %v2627
    %v2629 = vpop.xlane.xlu0 %2628
    %v2630 = vrcp.pop %v2626
    %v2631 = vmul.f32 %v2626, %v2630
    %v2632 = vsub.f32 1.0, %v2631
    %v2633 = vmul.f32 %v2630, %v2632
    %v2634 = vadd.f32 %v2630, %v2633
    %vm2635 = vweird.f32 %v2626
    %vm2636 = vweird.f32 %v2630
    %vm2637 = vmor %vm2635, %vm2636
    %v2638 = vsel %vm2637, %v2630, %v2634
    %v2639 = vand.u32 2147483647, %v2626
    %vm2640 = vcmp.eq.f32.partialorder %v2639, 8.507059e+37
    %v2641 = vand.u32 %v2626, 2147483648
    %v2642 = vor.u32 1.1754944e-38, %v2641
    %v2643 = vsel %vm2640, %v2642, %v2638
    %v2644 = vmul.f32 %v2621, %v2643
    %v2645 = vrcp.pop %v2629
    %v2646 = vmul.f32 %v2629, %v2645
    %v2647 = vsub.f32 1.0, %v2646
    %v2648 = vmul.f32 %v2645, %v2647
    %v2649 = vadd.f32 %v2645, %v2648
    %vm2650 = vweird.f32 %v2629
    %vm2651 = vweird.f32 %v2645
    %vm2652 = vmor %vm2650, %vm2651
    %v2653 = vsel %vm2652, %v2645, %v2649
    %v2654 = vand.u32 2147483647, %v2629
    %vm2655 = vcmp.eq.f32.partialorder %v2654, 8.507059e+37
    %v2656 = vand.u32 %v2629, 2147483648
    %v2657 = vor.u32 1.1754944e-38, %v2656
    %v2658 = vsel %vm2655, %v2657, %v2653
    %v2659 = vmul.f32 %v2623, %v2658
    %2660 = vrot.lane.b32.xlu0 %v2564, 64
    %v2661 = vpop.permute.xlu0 %2660
    %2662 = vrot.lane.b32.xlu0 %v2567, 64
    %v2663 = vpop.permute.xlu0 %2662
    %v2667 = vsel %vm225, %v2644, 0
    %v2670 = vsel %vm225, %v2659, 0
    %2672 = vmatpush.msra.mxu0 0.0
    %2673 = vmatpush.msra.mxu0 0.0
    %2674 = vmatpush.msra.mxu0 0.0
    %2675 = vmatpush.msra.mxu0 0.0
    %2676 = vmatpush.msra.mxu0 0.0
    %2677 = vmatpush.msra.mxu0 0.0
    %2678 = vmatpush.msra.mxu0 0.0
    %2679 = vmatpush.msra.mxu0 0.0
    %2680 = vmatpush.msra.mxu0 0.0
    %2681 = vmatpush.msra.mxu0 0.0
    %2682 = vmatpush.msra.mxu0 0.0
    %2683 = vmatpush.msra.mxu0 0.0
    %2684 = vmatpush.msra.mxu0 0.0
    %2685 = vmatpush.msra.mxu0 0.0
    %2686 = vmatpush.msra.mxu0 %v2663
    %2687 = vmatpush.msra.mxu0 %v2661
    %2688 = vmatmul.f32.gmra.mxu0 %v2667
    %v2689 = vpop.f32.mrf.mxu0
    %v2690 = vadd.f32 0.0, %v2689
    %2691 = vmatmul.f32.gmra.mxu0 %v2670
    %v2692 = vpop.f32.mrf.mxu0
    %v2693 = vadd.f32 0.0, %v2692
    %2694 = vdwg.mxu0
    %2695 = vst.msk [vmem:[#allocation2] sm:$0xff] %vm189, %v2690
    %2696 = vst.msk [vmem:[#allocation2 + $0x8] sm:$0xff] %vm189, %v2693
    %2697 = vrot.lane.b32.xlu0 %v2541, 120
    %v2698 = vpop.permute.xlu0 %2697
    %2699 = vrot.lane.b32.xlu0 %v2544, 120
    %v2700 = vpop.permute.xlu0 %2699
    %2701 = vrot.lane.b32.xlu0 %v2564, 88
    %v2702 = vpop.permute.xlu0 %2701
    %2703 = vrot.lane.b32.xlu0 %v2567, 88
    %v2704 = vpop.permute.xlu0 %2703
    %v2705 = vsel %vm189, %v2698, 0
    %v2707 = vsel %vm189, %v2700, 0
    %v2709 = vsel %vm189, %v2702, 0
    %v2711 = vsel %vm189, %v2704, 0
    %2713 = vmatpush.xpose.msra.mxu0 0.0
    %2714 = vmatpush.xpose.msra.mxu0 0.0
    %2715 = vmatpush.xpose.msra.mxu0 0.0
    %2716 = vmatpush.xpose.msra.mxu0 0.0
    %2717 = vmatpush.xpose.msra.mxu0 0.0
    %2718 = vmatpush.xpose.msra.mxu0 0.0
    %2719 = vmatpush.xpose.msra.mxu0 0.0
    %2720 = vmatpush.xpose.msra.mxu0 0.0
    %2721 = vmatpush.xpose.msra.mxu0 0.0
    %2722 = vmatpush.xpose.msra.mxu0 0.0
    %2723 = vmatpush.xpose.msra.mxu0 0.0
    %2724 = vmatpush.xpose.msra.mxu0 0.0
    %2725 = vmatpush.xpose.msra.mxu0 0.0
    %2726 = vmatpush.xpose.msra.mxu0 0.0
    %2727 = vmatpush.xpose.msra.mxu0 %v2711
    %2728 = vmatpush.xpose.msra.mxu0 %v2709
    %2729 = vmatmul.f32.gmra.mxu0 %v2705
    %v2730 = vpop.f32.mrf.mxu0
    %v2731 = vadd.f32 0.0, %v2730
    %2732 = vmatmul.f32.gmra.mxu0 %v2707
    %v2733 = vpop.f32.mrf.mxu0
    %v2734 = vadd.f32 0.0, %v2733
    %2735 = vdwg.mxu0
    %v2736 = vmul.f32 %v2731, 0.35355338
    %v2737 = vmul.f32 %v2734, 0.35355338
    %v2738 = vadd.f32 %v2736, %v49
    %v2739 = vadd.f32 %v2737, %v50
    %v2740 = vsel %vm225, %v2738, -inf
    %2741 = vmax.xlane.f32.xlu0 %v2740
    %v2742 = vpop.xlane.xlu0 %2741
    %v2743 = vsel %vm225, %v2739, -inf
    %2744 = vmax.xlane.f32.xlu0 %v2743
    %v2745 = vpop.xlane.xlu0 %2744
    %v2746 = vsub.f32 %v2738, %v2742
    %v2747 = vsub.f32 %v2739, %v2745
    %v2748 = vmul.f32 %v2746, 1.442695
    %v2749 = vpow.pop %v2748
    %v2750 = vmul.f32 %v2747, 1.442695
    %v2751 = vpow.pop %v2750
    %v2752 = vsel %vm225, %v2749, 0.0
    %2753 = vadd.xlane.f32.xlu0 %v2752
    %v2754 = vpop.xlane.xlu0 %2753
    %v2755 = vsel %vm225, %v2751, 0.0
    %2756 = vadd.xlane.f32.xlu0 %v2755
    %v2757 = vpop.xlane.xlu0 %2756
    %v2758 = vrcp.pop %v2754
    %v2759 = vmul.f32 %v2754, %v2758
    %v2760 = vsub.f32 1.0, %v2759
    %v2761 = vmul.f32 %v2758, %v2760
    %v2762 = vadd.f32 %v2758, %v2761
    %vm2763 = vweird.f32 %v2754
    %vm2764 = vweird.f32 %v2758
    %vm2765 = vmor %vm2763, %vm2764
    %v2766 = vsel %vm2765, %v2758, %v2762
    %v2767 = vand.u32 2147483647, %v2754
    %vm2768 = vcmp.eq.f32.partialorder %v2767, 8.507059e+37
    %v2769 = vand.u32 %v2754, 2147483648
    %v2770 = vor.u32 1.1754944e-38, %v2769
    %v2771 = vsel %vm2768, %v2770, %v2766
    %v2772 = vmul.f32 %v2749, %v2771
    %v2773 = vrcp.pop %v2757
    %v2774 = vmul.f32 %v2757, %v2773
    %v2775 = vsub.f32 1.0, %v2774
    %v2776 = vmul.f32 %v2773, %v2775
    %v2777 = vadd.f32 %v2773, %v2776
    %vm2778 = vweird.f32 %v2757
    %vm2779 = vweird.f32 %v2773
    %vm2780 = vmor %vm2778, %vm2779
    %v2781 = vsel %vm2780, %v2773, %v2777
    %v2782 = vand.u32 2147483647, %v2757
    %vm2783 = vcmp.eq.f32.partialorder %v2782, 8.507059e+37
    %v2784 = vand.u32 %v2757, 2147483648
    %v2785 = vor.u32 1.1754944e-38, %v2784
    %v2786 = vsel %vm2783, %v2785, %v2781
    %v2787 = vmul.f32 %v2751, %v2786
    %2788 = vrot.lane.b32.xlu0 %v2564, 56
    %v2789 = vpop.permute.xlu0 %2788
    %2790 = vrot.lane.b32.xlu0 %v2567, 56
    %v2791 = vpop.permute.xlu0 %2790
    %v2795 = vsel %vm225, %v2772, 0
    %v2798 = vsel %vm225, %v2787, 0
    %2800 = vmatpush.msra.mxu0 0.0
    %2801 = vmatpush.msra.mxu0 0.0
    %2802 = vmatpush.msra.mxu0 0.0
    %2803 = vmatpush.msra.mxu0 0.0
    %2804 = vmatpush.msra.mxu0 0.0
    %2805 = vmatpush.msra.mxu0 0.0
    %2806 = vmatpush.msra.mxu0 0.0
    %2807 = vmatpush.msra.mxu0 0.0
    %2808 = vmatpush.msra.mxu0 0.0
    %2809 = vmatpush.msra.mxu0 0.0
    %2810 = vmatpush.msra.mxu0 0.0
    %2811 = vmatpush.msra.mxu0 0.0
    %2812 = vmatpush.msra.mxu0 0.0
    %2813 = vmatpush.msra.mxu0 0.0
    %2814 = vmatpush.msra.mxu0 %v2791
    %2815 = vmatpush.msra.mxu0 %v2789
    %2816 = vmatmul.f32.gmra.mxu0 %v2795
    %v2817 = vpop.f32.mrf.mxu0
    %v2818 = vadd.f32 0.0, %v2817
    %2819 = vmatmul.f32.gmra.mxu0 %v2798
    %v2820 = vpop.f32.mrf.mxu0
    %v2821 = vadd.f32 0.0, %v2820
    %2822 = vdwg.mxu0
    %2825 = vrot.lane.b32.xlu0 %v2818, 8
    %v2826 = vpop.permute.xlu0 %2825
    %2827 = vrot.lane.b32.xlu0 %v2821, 8
    %v2828 = vpop.permute.xlu0 %2827
    %2831 = vst.msk [vmem:[#allocation2] sm:$0xff] %vm445, %v2826
    %2832 = vst.msk [vmem:[#allocation2 + $0x8] sm:$0xff] %vm445, %v2828
    %2833 = vrot.lane.b32.xlu0 %v2541, 112
    %v2834 = vpop.permute.xlu0 %2833
    %2835 = vrot.lane.b32.xlu0 %v2544, 112
    %v2836 = vpop.permute.xlu0 %2835
    %2837 = vrot.lane.b32.xlu0 %v2564, 80
    %v2838 = vpop.permute.xlu0 %2837
    %2839 = vrot.lane.b32.xlu0 %v2567, 80
    %v2840 = vpop.permute.xlu0 %2839
    %v2841 = vsel %vm189, %v2834, 0
    %v2843 = vsel %vm189, %v2836, 0
    %v2845 = vsel %vm189, %v2838, 0
    %v2847 = vsel %vm189, %v2840, 0
    %2849 = vmatpush.xpose.msra.mxu0 0.0
    %2850 = vmatpush.xpose.msra.mxu0 0.0
    %2851 = vmatpush.xpose.msra.mxu0 0.0
    %2852 = vmatpush.xpose.msra.mxu0 0.0
    %2853 = vmatpush.xpose.msra.mxu0 0.0
    %2854 = vmatpush.xpose.msra.mxu0 0.0
    %2855 = vmatpush.xpose.msra.mxu0 0.0
    %2856 = vmatpush.xpose.msra.mxu0 0.0
    %2857 = vmatpush.xpose.msra.mxu0 0.0
    %2858 = vmatpush.xpose.msra.mxu0 0.0
    %2859 = vmatpush.xpose.msra.mxu0 0.0
    %2860 = vmatpush.xpose.msra.mxu0 0.0
    %2861 = vmatpush.xpose.msra.mxu0 0.0
    %2862 = vmatpush.xpose.msra.mxu0 0.0
    %2863 = vmatpush.xpose.msra.mxu0 %v2847
    %2864 = vmatpush.xpose.msra.mxu0 %v2845
    %2865 = vmatmul.f32.gmra.mxu0 %v2841
    %v2866 = vpop.f32.mrf.mxu0
    %v2867 = vadd.f32 0.0, %v2866
    %2868 = vmatmul.f32.gmra.mxu0 %v2843
    %v2869 = vpop.f32.mrf.mxu0
    %v2870 = vadd.f32 0.0, %v2869
    %2871 = vdwg.mxu0
    %v2872 = vmul.f32 %v2867, 0.35355338
    %v2873 = vmul.f32 %v2870, 0.35355338
    %v2874 = vadd.f32 %v2872, %v49
    %v2875 = vadd.f32 %v2873, %v50
    %v2876 = vsel %vm225, %v2874, -inf
    %2877 = vmax.xlane.f32.xlu0 %v2876
    %v2878 = vpop.xlane.xlu0 %2877
    %v2879 = vsel %vm225, %v2875, -inf
    %2880 = vmax.xlane.f32.xlu0 %v2879
    %v2881 = vpop.xlane.xlu0 %2880
    %v2882 = vsub.f32 %v2874, %v2878
    %v2883 = vsub.f32 %v2875, %v2881
    %v2884 = vmul.f32 %v2882, 1.442695
    %v2885 = vpow.pop %v2884
    %v2886 = vmul.f32 %v2883, 1.442695
    %v2887 = vpow.pop %v2886
    %v2888 = vsel %vm225, %v2885, 0.0
    %2889 = vadd.xlane.f32.xlu0 %v2888
    %v2890 = vpop.xlane.xlu0 %2889
    %v2891 = vsel %vm225, %v2887, 0.0
    %2892 = vadd.xlane.f32.xlu0 %v2891
    %v2893 = vpop.xlane.xlu0 %2892
    %v2894 = vrcp.pop %v2890
    %v2895 = vmul.f32 %v2890, %v2894
    %v2896 = vsub.f32 1.0, %v2895
    %v2897 = vmul.f32 %v2894, %v2896
    %v2898 = vadd.f32 %v2894, %v2897
    %vm2899 = vweird.f32 %v2890
    %vm2900 = vweird.f32 %v2894
    %vm2901 = vmor %vm2899, %vm2900
    %v2902 = vsel %vm2901, %v2894, %v2898
    %v2903 = vand.u32 2147483647, %v2890
    %vm2904 = vcmp.eq.f32.partialorder %v2903, 8.507059e+37
    %v2905 = vand.u32 %v2890, 2147483648
    %v2906 = vor.u32 1.1754944e-38, %v2905
    %v2907 = vsel %vm2904, %v2906, %v2902
    %v2908 = vmul.f32 %v2885, %v2907
    %v2909 = vrcp.pop %v2893
    %v2910 = vmul.f32 %v2893, %v2909
    %v2911 = vsub.f32 1.0, %v2910
    %v2912 = vmul.f32 %v2909, %v2911
    %v2913 = vadd.f32 %v2909, %v2912
    %vm2914 = vweird.f32 %v2893
    %vm2915 = vweird.f32 %v2909
    %vm2916 = vmor %vm2914, %vm2915
    %v2917 = vsel %vm2916, %v2909, %v2913
    %v2918 = vand.u32 2147483647, %v2893
    %vm2919 = vcmp.eq.f32.partialorder %v2918, 8.507059e+37
    %v2920 = vand.u32 %v2893, 2147483648
    %v2921 = vor.u32 1.1754944e-38, %v2920
    %v2922 = vsel %vm2919, %v2921, %v2917
    %v2923 = vmul.f32 %v2887, %v2922
    %2924 = vrot.lane.b32.xlu0 %v2564, 48
    %v2925 = vpop.permute.xlu0 %2924
    %2926 = vrot.lane.b32.xlu0 %v2567, 48
    %v2927 = vpop.permute.xlu0 %2926
    %v2931 = vsel %vm225, %v2908, 0
    %v2934 = vsel %vm225, %v2923, 0
    %2936 = vmatpush.msra.mxu0 0.0
    %2937 = vmatpush.msra.mxu0 0.0
    %2938 = vmatpush.msra.mxu0 0.0
    %2939 = vmatpush.msra.mxu0 0.0
    %2940 = vmatpush.msra.mxu0 0.0
    %2941 = vmatpush.msra.mxu0 0.0
    %2942 = vmatpush.msra.mxu0 0.0
    %2943 = vmatpush.msra.mxu0 0.0
    %2944 = vmatpush.msra.mxu0 0.0
    %2945 = vmatpush.msra.mxu0 0.0
    %2946 = vmatpush.msra.mxu0 0.0
    %2947 = vmatpush.msra.mxu0 0.0
    %2948 = vmatpush.msra.mxu0 0.0
    %2949 = vmatpush.msra.mxu0 0.0
    %2950 = vmatpush.msra.mxu0 %v2927
    %2951 = vmatpush.msra.mxu0 %v2925
    %2952 = vmatmul.f32.gmra.mxu0 %v2931
    %v2953 = vpop.f32.mrf.mxu0
    %v2954 = vadd.f32 0.0, %v2953
    %2955 = vmatmul.f32.gmra.mxu0 %v2934
    %v2956 = vpop.f32.mrf.mxu0
    %v2957 = vadd.f32 0.0, %v2956
    %2958 = vdwg.mxu0
    %2961 = vrot.lane.b32.xlu0 %v2954, 16
    %v2962 = vpop.permute.xlu0 %2961
    %2963 = vrot.lane.b32.xlu0 %v2957, 16
    %v2964 = vpop.permute.xlu0 %2963
    %2967 = vst.msk [vmem:[#allocation2] sm:$0xff] %vm582, %v2962
    %2968 = vst.msk [vmem:[#allocation2 + $0x8] sm:$0xff] %vm582, %v2964
    %2969 = vrot.lane.b32.xlu0 %v2541, 104
    %v2970 = vpop.permute.xlu0 %2969
    %2971 = vrot.lane.b32.xlu0 %v2544, 104
    %v2972 = vpop.permute.xlu0 %2971
    %2973 = vrot.lane.b32.xlu0 %v2564, 72
    %v2974 = vpop.permute.xlu0 %2973
    %2975 = vrot.lane.b32.xlu0 %v2567, 72
    %v2976 = vpop.permute.xlu0 %2975
    %v2977 = vsel %vm189, %v2970, 0
    %v2979 = vsel %vm189, %v2972, 0
    %v2981 = vsel %vm189, %v2974, 0
    %v2983 = vsel %vm189, %v2976, 0
    %2985 = vmatpush.xpose.msra.mxu0 0.0
    %2986 = vmatpush.xpose.msra.mxu0 0.0
    %2987 = vmatpush.xpose.msra.mxu0 0.0
    %2988 = vmatpush.xpose.msra.mxu0 0.0
    %2989 = vmatpush.xpose.msra.mxu0 0.0
    %2990 = vmatpush.xpose.msra.mxu0 0.0
    %2991 = vmatpush.xpose.msra.mxu0 0.0
    %2992 = vmatpush.xpose.msra.mxu0 0.0
    %2993 = vmatpush.xpose.msra.mxu0 0.0
    %2994 = vmatpush.xpose.msra.mxu0 0.0
    %2995 = vmatpush.xpose.msra.mxu0 0.0
    %2996 = vmatpush.xpose.msra.mxu0 0.0
    %2997 = vmatpush.xpose.msra.mxu0 0.0
    %2998 = vmatpush.xpose.msra.mxu0 0.0
    %2999 = vmatpush.xpose.msra.mxu0 %v2983
    %3000 = vmatpush.xpose.msra.mxu0 %v2981
    %3001 = vmatmul.f32.gmra.mxu0 %v2977
    %v3002 = vpop.f32.mrf.mxu0
    %v3003 = vadd.f32 0.0, %v3002
    %3004 = vmatmul.f32.gmra.mxu0 %v2979
    %v3005 = vpop.f32.mrf.mxu0
    %v3006 = vadd.f32 0.0, %v3005
    %3007 = vdwg.mxu0
    %v3008 = vmul.f32 %v3003, 0.35355338
    %v3009 = vmul.f32 %v3006, 0.35355338
    %v3010 = vadd.f32 %v3008, %v49
    %v3011 = vadd.f32 %v3009, %v50
    %v3012 = vsel %vm225, %v3010, -inf
    %3013 = vmax.xlane.f32.xlu0 %v3012
    %v3014 = vpop.xlane.xlu0 %3013
    %v3015 = vsel %vm225, %v3011, -inf
    %3016 = vmax.xlane.f32.xlu0 %v3015
    %v3017 = vpop.xlane.xlu0 %3016
    %v3018 = vsub.f32 %v3010, %v3014
    %v3019 = vsub.f32 %v3011, %v3017
    %v3020 = vmul.f32 %v3018, 1.442695
    %v3021 = vpow.pop %v3020
    %v3022 = vmul.f32 %v3019, 1.442695
    %v3023 = vpow.pop %v3022
    %v3024 = vsel %vm225, %v3021, 0.0
    %3025 = vadd.xlane.f32.xlu0 %v3024
    %v3026 = vpop.xlane.xlu0 %3025
    %v3027 = vsel %vm225, %v3023, 0.0
    %3028 = vadd.xlane.f32.xlu0 %v3027
    %v3029 = vpop.xlane.xlu0 %3028
    %v3030 = vrcp.pop %v3026
    %v3031 = vmul.f32 %v3026, %v3030
    %v3032 = vsub.f32 1.0, %v3031
    %v3033 = vmul.f32 %v3030, %v3032
    %v3034 = vadd.f32 %v3030, %v3033
    %vm3035 = vweird.f32 %v3026
    %vm3036 = vweird.f32 %v3030
    %vm3037 = vmor %vm3035, %vm3036
    %v3038 = vsel %vm3037, %v3030, %v3034
    %v3039 = vand.u32 2147483647, %v3026
    %vm3040 = vcmp.eq.f32.partialorder %v3039, 8.507059e+37
    %v3041 = vand.u32 %v3026, 2147483648
    %v3042 = vor.u32 1.1754944e-38, %v3041
    %v3043 = vsel %vm3040, %v3042, %v3038
    %v3044 = vmul.f32 %v3021, %v3043
    %v3045 = vrcp.pop %v3029
    %v3046 = vmul.f32 %v3029, %v3045
    %v3047 = vsub.f32 1.0, %v3046
    %v3048 = vmul.f32 %v3045, %v3047
    %v3049 = vadd.f32 %v3045, %v3048
    %vm3050 = vweird.f32 %v3029
    %vm3051 = vweird.f32 %v3045
    %vm3052 = vmor %vm3050, %vm3051
    %v3053 = vsel %vm3052, %v3045, %v3049
    %v3054 = vand.u32 2147483647, %v3029
    %vm3055 = vcmp.eq.f32.partialorder %v3054, 8.507059e+37
    %v3056 = vand.u32 %v3029, 2147483648
    %v3057 = vor.u32 1.1754944e-38, %v3056
    %v3058 = vsel %vm3055, %v3057, %v3053
    %v3059 = vmul.f32 %v3023, %v3058
    %3060 = vrot.lane.b32.xlu0 %v2564, 40
    %v3061 = vpop.permute.xlu0 %3060
    %3062 = vrot.lane.b32.xlu0 %v2567, 40
    %v3063 = vpop.permute.xlu0 %3062
    %v3067 = vsel %vm225, %v3044, 0
    %v3070 = vsel %vm225, %v3059, 0
    %3072 = vmatpush.msra.mxu0 0.0
    %3073 = vmatpush.msra.mxu0 0.0
    %3074 = vmatpush.msra.mxu0 0.0
    %3075 = vmatpush.msra.mxu0 0.0
    %3076 = vmatpush.msra.mxu0 0.0
    %3077 = vmatpush.msra.mxu0 0.0
    %3078 = vmatpush.msra.mxu0 0.0
    %3079 = vmatpush.msra.mxu0 0.0
    %3080 = vmatpush.msra.mxu0 0.0
    %3081 = vmatpush.msra.mxu0 0.0
    %3082 = vmatpush.msra.mxu0 0.0
    %3083 = vmatpush.msra.mxu0 0.0
    %3084 = vmatpush.msra.mxu0 0.0
    %3085 = vmatpush.msra.mxu0 0.0
    %3086 = vmatpush.msra.mxu0 %v3063
    %3087 = vmatpush.msra.mxu0 %v3061
    %3088 = vmatmul.f32.gmra.mxu0 %v3067
    %v3089 = vpop.f32.mrf.mxu0
    %v3090 = vadd.f32 0.0, %v3089
    %3091 = vmatmul.f32.gmra.mxu0 %v3070
    %v3092 = vpop.f32.mrf.mxu0
    %v3093 = vadd.f32 0.0, %v3092
    %3094 = vdwg.mxu0
    %3097 = vrot.lane.b32.xlu0 %v3090, 24
    %v3098 = vpop.permute.xlu0 %3097
    %3099 = vrot.lane.b32.xlu0 %v3093, 24
    %v3100 = vpop.permute.xlu0 %3099
    %3103 = vst.msk [vmem:[#allocation2] sm:$0xff] %vm719, %v3098
    %3104 = vst.msk [vmem:[#allocation2 + $0x8] sm:$0xff] %vm719, %v3100
    %v3105 = vld [vmem:[#allocation2] sm:$0xff]
    %v3106 = vld [vmem:[#allocation2 + $0x8] sm:$0xff]
    %v3107 = vld [vmem:[#allocation3 + $0x180] sm:$0xff]
    %v3108 = vld [vmem:[#allocation3 + $0x188] sm:$0xff]
    %v3109 = vld [vmem:[#allocation3 + $0x190] sm:$0xff]
    %v3110 = vld [vmem:[#allocation3 + $0x198] sm:$0xff]
    %v3111 = vld [vmem:[#allocation3 + $0x1a0] sm:$0x1]
    %v3112 = vperm.slane %v3111, 0
    %v3114 = vsel %vm90, %v3105, 0
    %v3117 = vsel %vm90, %v3106, 0
    %3119 = vmatpush.msra.mxu0 0.0
    %3120 = vmatpush.msra.mxu0 0.0
    %3121 = vmatpush.msra.mxu0 0.0
    %3122 = vmatpush.msra.mxu0 0.0
    %3123 = vmatpush.msra.mxu0 0.0
    %3124 = vmatpush.msra.mxu0 0.0
    %3125 = vmatpush.msra.mxu0 0.0
    %3126 = vmatpush.msra.mxu0 0.0
    %3127 = vmatpush.msra.mxu0 0.0
    %3128 = vmatpush.msra.mxu0 0.0
    %3129 = vmatpush.msra.mxu0 0.0
    %3130 = vmatpush.msra.mxu0 0.0
    %3131 = vmatpush.msra.mxu0 %v3110
    %3132 = vmatpush.msra.mxu0 %v3109
    %3133 = vmatpush.msra.mxu0 %v3108
    %3134 = vmatpush.msra.mxu0 %v3107
    %3135 = vmatmul.f32.gmra.mxu0 %v3114
    %v3136 = vpop.f32.mrf.mxu0
    %v3137 = vadd.f32 %v3112, %v3136
    %3138 = vmatmul.f32.gmra.mxu0 %v3117
    %v3139 = vpop.f32.mrf.mxu0
    %v3140 = vadd.f32 %v3112, %v3139
    %3141 = vdwg.mxu0
    %v3142 = vadd.f32 %v2458, %v3137
    %v3143 = vadd.f32 %v2459, %v3140
    %v3144 = vld [vmem:[#allocation3 + $0x200] sm:$0x3]
    %v3145 = vsel %vm90, %v3142, 0.0
    %3146 = vadd.xlane.f32.xlu0 %v3145
    %v3147 = vpop.xlane.xlu0 %3146
    %v3148 = vsel %vm90, %v3143, 0.0
    %3149 = vadd.xlane.f32.xlu0 %v3148
    %v3150 = vpop.xlane.xlu0 %3149
    %v3151 = vmul.f32 %v3147, %v103
    %v3152 = vmul.f32 %v3150, %v103
    %v3153 = vsub.f32 %v3142, %v3151
    %v3154 = vsub.f32 %v3143, %v3152
    %v3155 = vmul.f32 %v3153, %v3153
    %v3156 = vmul.f32 %v3154, %v3154
    %v3157 = vsel %vm90, %v3155, 0.0
    %3158 = vadd.xlane.f32.xlu0 %v3157
    %v3159 = vpop.xlane.xlu0 %3158
    %v3160 = vsel %vm90, %v3156, 0.0
    %3161 = vadd.xlane.f32.xlu0 %v3160
    %v3162 = vpop.xlane.xlu0 %3161
    %v3163 = vmul.f32 %v3159, %v103
    %v3164 = vmul.f32 %v3162, %v103
    %v3165 = vadd.f32 %v3163, 1e-12
    %v3166 = vadd.f32 %v3164, 1e-12
    %v3167 = vrsqrt.pop %v3165
    %v3168 = vmul.f32 %v3167, %v3165
    %v3169 = vmul.f32 %v3168, %v3167
    %v3170 = vmul.f32 0.5, %v3169
    %v3171 = vsub.f32 1.5, %v3170
    %v3172 = vmul.f32 %v3167, %v3171
    %vm3173 = vweird.f32 %v3165
    %vm3174 = vweird.f32 %v3167
    %vm3175 = vmor %vm3173, %vm3174
    %v3176 = vsel %vm3175, %v3167, %v3172
    %v3177 = vrsqrt.pop %v3166
    %v3178 = vmul.f32 %v3177, %v3166
    %v3179 = vmul.f32 %v3178, %v3177
    %v3180 = vmul.f32 0.5, %v3179
    %v3181 = vsub.f32 1.5, %v3180
    %v3182 = vmul.f32 %v3177, %v3181
    %vm3183 = vweird.f32 %v3166
    %vm3184 = vweird.f32 %v3177
    %vm3185 = vmor %vm3183, %vm3184
    %v3186 = vsel %vm3185, %v3177, %v3182
    %v3187 = vmul.f32 %v3153, %v3176
    %v3188 = vmul.f32 %v3154, %v3186
    %v3189 = vperm.slane %v3144, 0
    %v3190 = vmul.f32 %v3187, %v3189
    %v3191 = vmul.f32 %v3188, %v3189
    %v3192 = vperm.slane %v3144, 1
    %v3193 = vadd.f32 %v3190, %v3192
    %v3194 = vadd.f32 %v3191, %v3192
    %v3195 = vld [vmem:[%s2 + $0x28] sm:$0xff]
    %v3196 = vld [vmem:[%s2 + $0x30] sm:$0xff]
    %v3197 = vld [vmem:[%s2 + $0x38] sm:$0xff]
    %v3198 = vld [vmem:[%s2 + $0x40] sm:$0xff]
    %v3199 = vld [vmem:[%s2 + $0x48] sm:$0x1]
    %v3200 = vperm.slane %v3199, 0
    %v3202 = vsel %vm90, %v3193, 0
    %v3205 = vsel %vm90, %v3194, 0
    %3207 = vmatpush.msra.mxu0 0.0
    %3208 = vmatpush.msra.mxu0 0.0
    %3209 = vmatpush.msra.mxu0 0.0
    %3210 = vmatpush.msra.mxu0 0.0
    %3211 = vmatpush.msra.mxu0 0.0
    %3212 = vmatpush.msra.mxu0 0.0
    %3213 = vmatpush.msra.mxu0 0.0
    %3214 = vmatpush.msra.mxu0 0.0
    %3215 = vmatpush.msra.mxu0 0.0
    %3216 = vmatpush.msra.mxu0 0.0
    %3217 = vmatpush.msra.mxu0 0.0
    %3218 = vmatpush.msra.mxu0 0.0
    %3219 = vmatpush.msra.mxu0 %v3198
    %3220 = vmatpush.msra.mxu0 %v3197
    %3221 = vmatpush.msra.mxu0 %v3196
    %3222 = vmatpush.msra.mxu0 %v3195
    %3223 = vmatmul.f32.gmra.mxu0 %v3202
    %v3224 = vpop.f32.mrf.mxu0
    %v3225 = vadd.f32 %v3200, %v3224
    %3226 = vmatmul.f32.gmra.mxu0 %v3205
    %v3227 = vpop.f32.mrf.mxu0
    %v3228 = vadd.f32 %v3200, %v3227
    %3229 = vdwg.mxu0
    %v3230 = vmul.f32 %v3225, %v3225
    %v3231 = vmul.f32 %v3228, %v3228
    %v3232 = vmul.f32 %v3225, %v3230
    %v3233 = vmul.f32 %v3228, %v3231
    %v3234 = vmul.f32 %v3232, 0.044715
    %v3235 = vmul.f32 %v3233, 0.044715
    %v3236 = vadd.f32 %v3225, %v3234
    %v3237 = vadd.f32 %v3228, %v3235
    %v3238 = vmul.f32 %v3236, 0.7978846
    %v3239 = vmul.f32 %v3237, 0.7978846
    %v3240 = vtanh.pop %v3238
    %v3241 = vtanh.pop %v3239
    %v3242 = vadd.f32 %v3240, 1.0
    %v3243 = vadd.f32 %v3241, 1.0
    %v3244 = vmul.f32 %v3242, 0.5
    %v3245 = vmul.f32 %v3243, 0.5
    %v3246 = vmul.f32 %v3225, %v3244
    %v3247 = vmul.f32 %v3228, %v3245
    %v3248 = vld [vmem:[#allocation3 + $0x1a8] sm:$0xff]
    %v3249 = vld [vmem:[#allocation3 + $0x1b0] sm:$0xff]
    %v3250 = vld [vmem:[#allocation3 + $0x1b8] sm:$0xff]
    %v3251 = vld [vmem:[#allocation3 + $0x1c0] sm:$0xff]
    %v3252 = vld [vmem:[#allocation3 + $0x1c8] sm:$0xff]
    %v3253 = vld [vmem:[#allocation3 + $0x1d0] sm:$0xff]
    %v3254 = vld [vmem:[#allocation3 + $0x1d8] sm:$0xff]
    %v3255 = vld [vmem:[#allocation3 + $0x1e0] sm:$0xff]
    %v3256 = vld [vmem:[#allocation3 + $0x1e8] sm:$0x1]
    %v3257 = vperm.slane %v3256, 0
    %v3259 = vsel %vm59, %v3246, 0
    %v3262 = vsel %vm59, %v3247, 0
    %3264 = vmatpush.msra.mxu0 0.0
    %3265 = vmatpush.msra.mxu0 0.0
    %3266 = vmatpush.msra.mxu0 0.0
    %3267 = vmatpush.msra.mxu0 0.0
    %3268 = vmatpush.msra.mxu0 0.0
    %3269 = vmatpush.msra.mxu0 0.0
    %3270 = vmatpush.msra.mxu0 0.0
    %3271 = vmatpush.msra.mxu0 0.0
    %3272 = vmatpush.msra.mxu0 %v3255
    %3273 = vmatpush.msra.mxu0 %v3254
    %3274 = vmatpush.msra.mxu0 %v3253
    %3275 = vmatpush.msra.mxu0 %v3252
    %3276 = vmatpush.msra.mxu0 %v3251
    %3277 = vmatpush.msra.mxu0 %v3250
    %3278 = vmatpush.msra.mxu0 %v3249
    %3279 = vmatpush.msra.mxu0 %v3248
    %3280 = vmatmul.f32.gmra.mxu0 %v3259
    %v3281 = vpop.f32.mrf.mxu0
    %v3282 = vadd.f32 %v3257, %v3281
    %3283 = vmatmul.f32.gmra.mxu0 %v3262
    %v3284 = vpop.f32.mrf.mxu0
    %v3285 = vadd.f32 %v3257, %v3284
    %3286 = vdwg.mxu0
    %v3287 = vadd.f32 %v3142, %v3282
    %v3288 = vadd.f32 %v3143, %v3285
    %v3289 = vld [vmem:[#allocation3 + $0x208] sm:$0x3]
    %v3290 = vsel %vm90, %v3287, 0.0
    %3291 = vadd.xlane.f32.xlu0 %v3290
    %v3292 = vpop.xlane.xlu0 %3291
    %v3293 = vsel %vm90, %v3288, 0.0
    %3294 = vadd.xlane.f32.xlu0 %v3293
    %v3295 = vpop.xlane.xlu0 %3294
    %v3296 = vmul.f32 %v3292, %v103
    %v3297 = vmul.f32 %v3295, %v103
    %v3298 = vsub.f32 %v3287, %v3296
    %v3299 = vsub.f32 %v3288, %v3297
    %v3300 = vmul.f32 %v3298, %v3298
    %v3301 = vmul.f32 %v3299, %v3299
    %v3302 = vsel %vm90, %v3300, 0.0
    %3303 = vadd.xlane.f32.xlu0 %v3302
    %v3304 = vpop.xlane.xlu0 %3303
    %v3305 = vsel %vm90, %v3301, 0.0
    %3306 = vadd.xlane.f32.xlu0 %v3305
    %v3307 = vpop.xlane.xlu0 %3306
    %v3308 = vmul.f32 %v3304, %v103
    %v3309 = vmul.f32 %v3307, %v103
    %v3310 = vadd.f32 %v3308, 1e-12
    %v3311 = vadd.f32 %v3309, 1e-12
    %v3312 = vrsqrt.pop %v3310
    %v3313 = vmul.f32 %v3312, %v3310
    %v3314 = vmul.f32 %v3313, %v3312
    %v3315 = vmul.f32 0.5, %v3314
    %v3316 = vsub.f32 1.5, %v3315
    %v3317 = vmul.f32 %v3312, %v3316
    %vm3318 = vweird.f32 %v3310
    %vm3319 = vweird.f32 %v3312
    %vm3320 = vmor %vm3318, %vm3319
    %v3321 = vsel %vm3320, %v3312, %v3317
    %v3322 = vrsqrt.pop %v3311
    %v3323 = vmul.f32 %v3322, %v3311
    %v3324 = vmul.f32 %v3323, %v3322
    %v3325 = vmul.f32 0.5, %v3324
    %v3326 = vsub.f32 1.5, %v3325
    %v3327 = vmul.f32 %v3322, %v3326
    %vm3328 = vweird.f32 %v3311
    %vm3329 = vweird.f32 %v3322
    %vm3330 = vmor %vm3328, %vm3329
    %v3331 = vsel %vm3330, %v3322, %v3327
    %v3332 = vmul.f32 %v3298, %v3321
    %v3333 = vmul.f32 %v3299, %v3331
    %v3334 = vperm.slane %v3289, 0
    %v3335 = vmul.f32 %v3332, %v3334
    %v3336 = vmul.f32 %v3333, %v3334
    %v3337 = vperm.slane %v3289, 1
    %v3338 = vadd.f32 %v3335, %v3337
    %v3339 = vadd.f32 %v3336, %v3337
    %3340 = vst.msk [vmem:[#allocation6] sm:$0xff] %vm90, %v3338
    %3341 = vst.msk [vmem:[#allocation6 + $0x8] sm:$0xff] %vm90, %v3339
    %3342 = vst.msk [vmem:[#allocation7] sm:$0xff] %vm90, %v1715
    %3343 = vst.msk [vmem:[#allocation7 + $0x8] sm:$0xff] %vm90, %v1716
    // Predicated region
    $region22: #{forward.1} parent=1 // pred_check
      _
    $region23: #{forward.1} parent=1 // pred_check_branch
      %3345 = sbr.rel (0) target = $region25
    $region24: #{forward.1} parent=1 // pred_region
      %3347 = vsyncadd [#allocation5], 0
      %s3348 = sshll.u32 [#allocation6], 4
      %s3349 = int_to_ptr.vmem [resolvable:$true] %s3348
      %s3350 = sshll.u32 %s4, 4
      %s3351 = int_to_ptr.hbm [resolvable:$true] %s3350
      %3356 = dma.vmem_to_hbm [thread:$0]  %s3349, 256, %s3351, [#allocation5], 128, 128, 8
    $region25: #{forward.1} parent=1 // pred_fallthru
      _
    // Predicated region
    $region26: #{forward.1} parent=1 // pred_check
      _
    $region27: #{forward.1} parent=1 // pred_check_branch
      %3358 = sbr.rel (0) target = $region29
    $region28: #{forward.1} parent=1 // pred_region
      %3360 = vsyncadd [#allocation8], 0
      %s3361 = sshll.u32 [#allocation7], 4
      %s3362 = int_to_ptr.vmem [resolvable:$true] %s3361
      %s3363 = sshll.u32 %s5, 4
      %s3364 = int_to_ptr.hbm [resolvable:$true] %s3363
      %3369 = dma.vmem_to_hbm [thread:$0]  %s3362, 256, %s3364, [#allocation8], 128, 128, 8
    $region29: #{forward.1} parent=1 // pred_fallthru
      _
    // Predicated region
    $region30: #{forward.1} parent=1 // pred_check
      _
    $region31: #{forward.1} parent=1 // pred_check_branch
      %3371 = sbr.rel (0) target = $region33
    $region32: #{forward.1} parent=1 // pred_region
      %3373 = dma.done [#allocation5], 256
    $region33: #{forward.1} parent=1 // pred_fallthru
      _
    // Predicated region
    $region34: #{forward.1} parent=1 // pred_check
      _
    $region35: #{forward.1} parent=1 // pred_check_branch
      %3375 = sbr.rel (0) target = $region37
    $region36: #{forward.1} parent=1 // pred_region
      %3377 = dma.done [#allocation8], 256
    $region37: #{forward.1} parent=1 // pred_fallthru
      _
    %3378 = vsyncpa [#allocation4], 1
    %3379 = vsyncpa [#allocation5], 1
    %3380 = vsyncpa [#allocation8], 1

</llo_original>
